<compile_context>
chip_gen: v6e
topology: v6e:2x2x1
jax: 0.10.0
libtpu: 0.0.40
codegen_flags: <defaults>
</compile_context>

<pallas_src>
import math
import functools

import numpy as np
import jax
import jax.numpy as jnp
from jax.experimental import pallas as pl
from jax.experimental.pallas import tpu as pltpu

HIGHEST = jax.lax.Precision.HIGHEST  # used only in the pure-JAX reference


def attn_lay_kernel(x_ref, g1_ref, b1_ref, wq_ref, wk_ref, wv_ref, wo_ref,
                    bo_ref, g2_ref, b2_ref, wconv_ref, bconv_ref, w2_ref,
                    bl2_ref, o_ref, ypad_ref, *, heads, dim_head, kernel_size,
                    eps):
    _, N, D = x_ref.shape
    bf16 = jnp.bfloat16

    x = x_ref[0]                                               # (N, D) f32

    # ---- LayerNorm 1 ----
    mu = jnp.mean(x, axis=-1, keepdims=True)
    var = jnp.mean(jnp.square(x - mu), axis=-1, keepdims=True)
    xn = (x - mu) * jax.lax.rsqrt(var + eps) * g1_ref[...] + b1_ref[...]
    xnb = xn.astype(bf16)

    # ---- Q/K/V projections: lane-dense 2D matmuls, one weight push each ----
    # wq is pre-scaled by dim_head**-0.5 (exact power of two) host-side.
    q2 = jnp.dot(xnb, wq_ref[...], preferred_element_type=jnp.float32)  # (N, H*Dh)
    k2 = jnp.dot(xnb, wk_ref[...], preferred_element_type=jnp.float32)  # (N, H*Dh)
    v2 = jnp.dot(xnb, wv_ref[...], preferred_element_type=jnp.float32)  # (N, H*Dh)

    # View as (H, N, Dh) for the batched score / context matmuls
    # (static lane slices + stack along a new leading dim; no minor-dim reshape).
    def split_heads(t):
        t = t.astype(bf16)
        return jnp.stack(
            [t[:, hh * dim_head:(hh + 1) * dim_head] for hh in range(heads)],
            axis=0)                                            # (H, N, Dh)

    q = split_heads(q2)
    k = split_heads(k2)
    v = split_heads(v2)

    s = jax.lax.dot_general(q, k, (((2,), (2,)), ((0,), (0,))),
                            preferred_element_type=jnp.float32)     # (H, N, N)
    s = s - jnp.max(s, axis=-1, keepdims=True)                      # cheap insurance
    p = jnp.exp(s)
    p = p * pl.reciprocal(jnp.sum(p, axis=-1, keepdims=True), approx=True)

    ctx = jax.lax.dot_general(p.astype(bf16), v, (((2,), (1,)), ((0,), (0,))),
                              preferred_element_type=jnp.float32)   # (H, N, Dh)

    # Concatenate heads along lanes -> (N, H*Dh), then ONE output projection.
    ctx2 = jnp.concatenate([ctx[hh] for hh in range(heads)], axis=-1)
    attn_out = jnp.dot(ctx2.astype(bf16), wo_ref[...],
                       preferred_element_type=jnp.float32) + bo_ref[...]
    y = attn_out + x                                           # residual 1, (N, D)

    # ---- LayerNorm 2 ----
    mu2 = jnp.mean(y, axis=-1, keepdims=True)
    var2 = jnp.mean(jnp.square(y - mu2), axis=-1, keepdims=True)
    yn = (y - mu2) * jax.lax.rsqrt(var2 + eps) * g2_ref[...] + b2_ref[...]

    # ---- FFN: Conv1d(D -> hidden, K, pad=K//2) as ONE im2col matmul ----
    # Zero-filled (N+K-1, D) VMEM scratch holds the padded activations; scratch
    # is re-zeroed every grid step (cheap) so it is valid on every TensorCore.
    pad = kernel_size // 2
    ypad_ref[...] = jnp.zeros_like(ypad_ref)
    ypad_ref[pl.ds(pad, N), :] = yn
    cols = jnp.concatenate(
        [ypad_ref[pl.ds(kk, N), :] for kk in range(kernel_size)],
        axis=-1).astype(bf16)                                  # (N, K*D)

    h = jnp.dot(cols, wconv_ref[...],
                preferred_element_type=jnp.float32) + bconv_ref[...]
    # TODO(synk): PyTorch nn.GELU() is exact erf; tanh approximation used here
    # (EUP-friendly, within test tolerance).
    h = jax.nn.gelu(h, approximate=True)
    out = jnp.dot(h.astype(bf16), w2_ref[...],
                  preferred_element_type=jnp.float32) + bl2_ref[...]
    o_ref[0] = (out + y).astype(o_ref.dtype)                   # residual 2


def attn_lay_forward(x, params, *, heads, dim_head, kernel_size, eps=1e-5):
    B, N, D = x.shape
    inner = heads * dim_head
    K = kernel_size
    hidden = params["w_conv"].shape[2]
    scale = dim_head ** -0.5                                    # power of two here

    # ---- host-side weight prep (layout + dtype only) ----
    wqkv = params["w_qkv"]                                      # (D, 3*inner)
    wq = (wqkv[:, :inner] * scale).astype(jnp.bfloat16)         # (D, inner), scaled
    wk = wqkv[:, inner:2 * inner].astype(jnp.bfloat16)          # (D, inner)
    wv = wqkv[:, 2 * inner:].astype(jnp.bfloat16)               # (D, inner)
    wo = params["w_out"].astype(jnp.bfloat16)                   # (inner, D)
    wconv = params["w_conv"].reshape(K * D, hidden).astype(jnp.bfloat16)
    w2 = params["w_ffn2"].astype(jnp.bfloat16)                  # (hidden, D)

    kern = functools.partial(attn_lay_kernel, heads=heads, dim_head=dim_head,
                             kernel_size=K, eps=eps)

    def full(shape):
        zeros = (0,) * len(shape)
        return pl.BlockSpec(shape, lambda b, _z=zeros: _z)

    in_specs = [
        pl.BlockSpec((1, N, D), lambda b: (b, 0, 0)),     # x
        full((1, D)), full((1, D)),                       # ln1 gamma/beta
        full((D, inner)),                                 # Wq (pre-scaled, bf16)
        full((D, inner)),                                 # Wk (bf16)
        full((D, inner)),                                 # Wv (bf16)
        full((inner, D)),                                 # Wout (bf16)
        full((1, D)),                                     # to_out bias
        full((1, D)), full((1, D)),                       # ln2 gamma/beta
        full((K * D, hidden)), full((1, hidden)),         # conv W (bf16), bias
        full((hidden, D)), full((1, D)),                  # ffn_2 W (bf16), bias
    ]

    flops = 2 * B * (3 * N * D * inner                     # Q/K/V projections
                     + 2 * heads * N * N * dim_head        # scores + probs@V
                     + N * inner * D                       # output projection
                     + N * (K * D) * hidden                # im2col conv
                     + N * hidden * D)                     # ffn_2
    transcendentals = B * (heads * N * N + N * hidden)
    bytes_accessed = (4 * 2 * B * N * D                            # x in, out
                      + 2 * (3 * D * inner + inner * D
                             + K * D * hidden + hidden * D)        # bf16 weights
                      + 4 * (6 * D + 2 * hidden))                  # f32 vectors

    return pl.pallas_call(
        kern,
        out_shape=jax.ShapeDtypeStruct((B, N, D), x.dtype),
        grid_spec=pltpu.PrefetchScalarGridSpec(
            num_scalar_prefetch=0,
            grid=(B,),
            in_specs=in_specs,
            out_specs=pl.BlockSpec((1, N, D), lambda b: (b, 0, 0)),
            scratch_shapes=[pltpu.VMEM((N + K - 1, D), jnp.float32)],
        ),
        compiler_params=pltpu.CompilerParams(dimension_semantics=("parallel",)),
        cost_estimate=pl.CostEstimate(flops=flops,
                                      transcendentals=transcendentals,
                                      bytes_accessed=bytes_accessed),
    )(x, params["g1"], params["b1"], wq, wk, wv, wo, params["b_out"],
      params["g2"], params["b2"], wconv, params["b_conv"],
      w2, params["b_ffn2"])


def reference(x, p, *, heads, dim_head, kernel_size, eps=1e-5):
    """Plain-JAX mirror of the PyTorch forward (f32, HIGHEST precision, exact GELU)."""
    B, N, D = x.shape
    inner = heads * dim_head

    def ln(v, g, b):
        mu = jnp.mean(v, -1, keepdims=True)
        var = jnp.mean(jnp.square(v - mu), -1, keepdims=True)
        return (v - mu) * jax.lax.rsqrt(var + eps) * g + b

    gelu = lambda t: 0.5 * t * (1.0 + jax.lax.erf(t * (1.0 / math.sqrt(2.0))))

    xn = ln(x, p["g1"], p["b1"])
    qkv = jnp.einsum("bnd,de->bne", xn, p["w_qkv"], precision=HIGHEST)
    q, k, v = jnp.split(qkv, 3, axis=-1)
    to_h = lambda t: t.reshape(B, N, heads, dim_head).transpose(0, 2, 1, 3)
    q, k, v = map(to_h, (q, k, v))
    s = jnp.einsum("bhqd,bhkd->bhqk", q, k, precision=HIGHEST) * dim_head ** -0.5
    a = jax.nn.softmax(s, axis=-1)
    o = jnp.einsum("bhqk,bhkd->bhqd", a, v, precision=HIGHEST)
    o = o.transpose(0, 2, 1, 3).reshape(B, N, inner)
    attn = jnp.einsum("bni,id->bnd", o, p["w_out"], precision=HIGHEST) + p["b_out"]
    y = attn + x

    yn = ln(y, p["g2"], p["b2"])
    pad = kernel_size // 2
    yp = jnp.pad(yn, ((0, 0), (pad, pad), (0, 0)))
    hidden = p["w_conv"].shape[2]
    h = jnp.zeros((B, N, hidden), jnp.float32) + p["b_conv"]
    for kk in range(kernel_size):
        h = h + jnp.einsum("bnd,dh->bnh", yp[:, kk:kk + N, :], p["w_conv"][kk],
                           precision=HIGHEST)
    h = gelu(h)
    out = jnp.einsum("bnh,hd->bnd", h, p["w_ffn2"], precision=HIGHEST) + p["b_ffn2"]
    return out + y


if __name__ == "__main__":
    # Module-default head geometry (heads=4, dim_head=64), dim=128 so the
    # feature axis is exactly one 128-lane vreg row (lane-dense stores).
    B, N, D = 2, 16, 128
    heads, dim_head = 4, 64
    hidden = 4 * D                    # hideen_dim = dim * 4 = 512
    K = 9                             # kernel_size
    inner = heads * dim_head

    key = jax.random.PRNGKey(0)
    ks = jax.random.split(key, 12)
    x = jax.random.normal(ks[0], (B, N, D), jnp.float32)

    # Deterministic synthetic parameters (PyTorch shapes noted; conv weight is
    # stored pre-permuted as (K, dim, hidden) == Conv1d.weight.permute(2, 1, 0)).
    params = {
        "g1": 1.0 + 0.1 * jax.random.normal(ks[8], (1, D), jnp.float32),
        "b1": 0.02 * jax.random.normal(ks[9], (1, D), jnp.float32),
        "w_qkv": 0.06 * jax.random.normal(ks[1], (D, 3 * inner), jnp.float32),
        "w_out": 0.03 * jax.random.normal(ks[2], (inner, D), jnp.float32),
        "b_out": 0.02 * jax.random.normal(ks[3], (1, D), jnp.float32),
        "g2": 1.0 + 0.1 * jax.random.normal(ks[10], (1, D), jnp.float32),
        "b2": 0.02 * jax.random.normal(ks[11], (1, D), jnp.float32),
        "w_conv": 0.02 * jax.random.normal(ks[4], (K, D, hidden), jnp.float32),
        "b_conv": 0.02 * jax.random.normal(ks[5], (1, hidden), jnp.float32),
        "w_ffn2": 0.02 * jax.random.normal(ks[6], (hidden, D), jnp.float32),
        "b_ffn2": 0.02 * jax.random.normal(ks[7], (1, D), jnp.float32),
    }

    out = attn_lay_forward(x, params, heads=heads, dim_head=dim_head,
                           kernel_size=K)
    out = jax.block_until_ready(out)

    ref = reference(x, params, heads=heads, dim_head=dim_head, kernel_size=K)
    # Kernel matmuls run bf16 operands with f32 accumulation (MXU default) and
    # tanh-approx GELU; reference is HIGHEST-precision f32 with exact erf GELU,
    # so tolerance is set at bf16-matmul level.
    np.testing.assert_allclose(np.asarray(out), np.asarray(ref),
                               rtol=2e-2, atol=2e-2)
    print("KERNEL_OK")
</pallas_src>

<mosaic_0001>
module attributes {stable_mosaic.version = 11 : i64} {
  func.func @attn_lay_kernel(%arg0: i32, %arg1: memref<1x16x128xf32, #tpu.memory_space<vmem>>, %arg2: memref<1x128xf32, #tpu.memory_space<vmem>>, %arg3: memref<1x128xf32, #tpu.memory_space<vmem>>, %arg4: memref<128x256xbf16, #tpu.memory_space<vmem>>, %arg5: memref<128x256xbf16, #tpu.memory_space<vmem>>, %arg6: memref<128x256xbf16, #tpu.memory_space<vmem>>, %arg7: memref<256x128xbf16, #tpu.memory_space<vmem>>, %arg8: memref<1x128xf32, #tpu.memory_space<vmem>>, %arg9: memref<1x128xf32, #tpu.memory_space<vmem>>, %arg10: memref<1x128xf32, #tpu.memory_space<vmem>>, %arg11: memref<1152x512xbf16, #tpu.memory_space<vmem>>, %arg12: memref<1x512xf32, #tpu.memory_space<vmem>>, %arg13: memref<512x128xbf16, #tpu.memory_space<vmem>>, %arg14: memref<1x128xf32, #tpu.memory_space<vmem>>, %arg15: memref<1x16x128xf32, #tpu.memory_space<vmem>>, %arg16: memref<24x128xf32, #tpu.memory_space<vmem>>) attributes {dimension_semantics = [#tpu.dimension_semantics<parallel>], iteration_bounds = array<i64: 2>, scalar_prefetch = 0 : i64, scratch_operands = 1 : i64, tpu.core_type = #tpu.core_type<tc>, window_params = [{transform_indices = @transform_0, window_bounds = array<i64: 1, 16, 128>}, {pipeline_mode = #tpu.pipeline_mode<synchronous>, transform_indices = @transform_1, window_bounds = array<i64: 1, 128>}, {pipeline_mode = #tpu.pipeline_mode<synchronous>, transform_indices = @transform_2, window_bounds = array<i64: 1, 128>}, {pipeline_mode = #tpu.pipeline_mode<synchronous>, transform_indices = @transform_3, window_bounds = array<i64: 128, 256>}, {pipeline_mode = #tpu.pipeline_mode<synchronous>, transform_indices = @transform_4, window_bounds = array<i64: 128, 256>}, {pipeline_mode = #tpu.pipeline_mode<synchronous>, transform_indices = @transform_5, window_bounds = array<i64: 128, 256>}, {pipeline_mode = #tpu.pipeline_mode<synchronous>, transform_indices = @transform_6, window_bounds = array<i64: 256, 128>}, {pipeline_mode = #tpu.pipeline_mode<synchronous>, transform_indices = @transform_7, window_bounds = array<i64: 1, 128>}, {pipeline_mode = #tpu.pipeline_mode<synchronous>, transform_indices = @transform_8, window_bounds = array<i64: 1, 128>}, {pipeline_mode = #tpu.pipeline_mode<synchronous>, transform_indices = @transform_9, window_bounds = array<i64: 1, 128>}, {pipeline_mode = #tpu.pipeline_mode<synchronous>, transform_indices = @transform_10, window_bounds = array<i64: 1152, 512>}, {pipeline_mode = #tpu.pipeline_mode<synchronous>, transform_indices = @transform_11, window_bounds = array<i64: 1, 512>}, {pipeline_mode = #tpu.pipeline_mode<synchronous>, transform_indices = @transform_12, window_bounds = array<i64: 512, 128>}, {pipeline_mode = #tpu.pipeline_mode<synchronous>, transform_indices = @transform_13, window_bounds = array<i64: 1, 128>}, {transform_indices = @transform_14, window_bounds = array<i64: 1, 16, 128>}]} {
    %c0 = arith.constant 0 : index
    %c0_0 = arith.constant 0 : index
    %c0_1 = arith.constant 0 : index
    %0 = vector.load %arg1[%c0, %c0_0, %c0_1] : memref<1x16x128xf32, #tpu.memory_space<vmem>>, vector<1x16x128xf32>
    %1 = vector.shape_cast %0 : vector<1x16x128xf32> to vector<16x128xf32>
    %cst = arith.constant dense<0.000000e+00> : vector<16xf32>
    %2 = vector.multi_reduction <add>, %1, %cst [1] : vector<16x128xf32> to vector<16xf32>
    %3 = vector.shape_cast %2 : vector<16xf32> to vector<16x1xf32>
    %cst_2 = arith.constant 1.280000e+02 : f32
    %4 = vector.broadcast %cst_2 : f32 to vector<16x1xf32>
    %5 = arith.divf %3, %4 : vector<16x1xf32>
    %6 = vector.broadcast %5 : vector<16x1xf32> to vector<16x128xf32>
    %7 = arith.subf %1, %6 : vector<16x128xf32>
    %8 = arith.mulf %7, %7 : vector<16x128xf32>
    %cst_3 = arith.constant dense<0.000000e+00> : vector<16xf32>
    %9 = vector.multi_reduction <add>, %8, %cst_3 [1] : vector<16x128xf32> to vector<16xf32>
    %10 = vector.shape_cast %9 : vector<16xf32> to vector<16x1xf32>
    %cst_4 = arith.constant 1.280000e+02 : f32
    %11 = vector.broadcast %cst_4 : f32 to vector<16x1xf32>
    %12 = arith.divf %10, %11 : vector<16x1xf32>
    %13 = vector.broadcast %5 : vector<16x1xf32> to vector<16x128xf32>
    %14 = arith.subf %1, %13 : vector<16x128xf32>
    %cst_5 = arith.constant 9.99999974E-6 : f32
    %15 = vector.broadcast %cst_5 : f32 to vector<16x1xf32>
    %16 = arith.addf %12, %15 : vector<16x1xf32>
    %17 = math.rsqrt %16 : vector<16x1xf32>
    %18 = vector.broadcast %17 : vector<16x1xf32> to vector<16x128xf32>
    %19 = arith.mulf %14, %18 : vector<16x128xf32>
    %c0_6 = arith.constant 0 : index
    %c0_7 = arith.constant 0 : index
    %20 = vector.load %arg2[%c0_6, %c0_7] : memref<1x128xf32, #tpu.memory_space<vmem>>, vector<1x128xf32>
    %21 = vector.broadcast %20 : vector<1x128xf32> to vector<16x128xf32>
    %22 = arith.mulf %19, %21 : vector<16x128xf32>
    %c0_8 = arith.constant 0 : index
    %c0_9 = arith.constant 0 : index
    %23 = vector.load %arg3[%c0_8, %c0_9] : memref<1x128xf32, #tpu.memory_space<vmem>>, vector<1x128xf32>
    %24 = vector.broadcast %23 : vector<1x128xf32> to vector<16x128xf32>
    %25 = arith.addf %22, %24 : vector<16x128xf32>
    %26 = arith.truncf %25 : vector<16x128xf32> to vector<16x128xbf16>
    %c0_10 = arith.constant 0 : index
    %c0_11 = arith.constant 0 : index
    %27 = vector.load %arg4[%c0_10, %c0_11] : memref<128x256xbf16, #tpu.memory_space<vmem>>, vector<128x256xbf16>
    %cst_12 = arith.constant dense<0.000000e+00> : vector<16x256xf32>
    %28 = tpu.matmul %26, %27, %cst_12 {dimension_numbers = #tpu.dot_dimension_numbers<[1], [0], [0], [1], [0, 0, 1, 1], [], []>} : vector<16x128xbf16>, vector<128x256xbf16>, vector<16x256xf32> -> vector<16x256xf32>
    %c0_13 = arith.constant 0 : index
    %c0_14 = arith.constant 0 : index
    %29 = vector.load %arg5[%c0_13, %c0_14] : memref<128x256xbf16, #tpu.memory_space<vmem>>, vector<128x256xbf16>
    %cst_15 = arith.constant dense<0.000000e+00> : vector<16x256xf32>
    %30 = tpu.matmul %26, %29, %cst_15 {dimension_numbers = #tpu.dot_dimension_numbers<[1], [0], [0], [1], [0, 0, 1, 1], [], []>} : vector<16x128xbf16>, vector<128x256xbf16>, vector<16x256xf32> -> vector<16x256xf32>
    %c0_16 = arith.constant 0 : index
    %c0_17 = arith.constant 0 : index
    %31 = vector.load %arg6[%c0_16, %c0_17] : memref<128x256xbf16, #tpu.memory_space<vmem>>, vector<128x256xbf16>
    %cst_18 = arith.constant dense<0.000000e+00> : vector<16x256xf32>
    %32 = tpu.matmul %26, %31, %cst_18 {dimension_numbers = #tpu.dot_dimension_numbers<[1], [0], [0], [1], [0, 0, 1, 1], [], []>} : vector<16x128xbf16>, vector<128x256xbf16>, vector<16x256xf32> -> vector<16x256xf32>
    %33 = arith.truncf %28 : vector<16x256xf32> to vector<16x256xbf16>
    %34 = vector.extract_strided_slice %33 {offsets = [0, 0], sizes = [16, 64], strides = [1, 1]} : vector<16x256xbf16> to vector<16x64xbf16>
    %35 = vector.extract_strided_slice %33 {offsets = [0, 64], sizes = [16, 64], strides = [1, 1]} : vector<16x256xbf16> to vector<16x64xbf16>
    %36 = vector.extract_strided_slice %33 {offsets = [0, 128], sizes = [16, 64], strides = [1, 1]} : vector<16x256xbf16> to vector<16x64xbf16>
    %37 = vector.extract_strided_slice %33 {offsets = [0, 192], sizes = [16, 64], strides = [1, 1]} : vector<16x256xbf16> to vector<16x64xbf16>
    %38 = vector.shape_cast %34 : vector<16x64xbf16> to vector<1x16x64xbf16>
    %39 = vector.shape_cast %35 : vector<16x64xbf16> to vector<1x16x64xbf16>
    %40 = vector.shape_cast %36 : vector<16x64xbf16> to vector<1x16x64xbf16>
    %41 = vector.shape_cast %37 : vector<16x64xbf16> to vector<1x16x64xbf16>
    %42 = tpu.concatenate %38, %39, %40, %41 in 0 : vector<1x16x64xbf16>, vector<1x16x64xbf16>, vector<1x16x64xbf16>, vector<1x16x64xbf16> -> vector<4x16x64xbf16>
    %43 = arith.truncf %30 : vector<16x256xf32> to vector<16x256xbf16>
    %44 = vector.extract_strided_slice %43 {offsets = [0, 0], sizes = [16, 64], strides = [1, 1]} : vector<16x256xbf16> to vector<16x64xbf16>
    %45 = vector.extract_strided_slice %43 {offsets = [0, 64], sizes = [16, 64], strides = [1, 1]} : vector<16x256xbf16> to vector<16x64xbf16>
    %46 = vector.extract_strided_slice %43 {offsets = [0, 128], sizes = [16, 64], strides = [1, 1]} : vector<16x256xbf16> to vector<16x64xbf16>
    %47 = vector.extract_strided_slice %43 {offsets = [0, 192], sizes = [16, 64], strides = [1, 1]} : vector<16x256xbf16> to vector<16x64xbf16>
    %48 = vector.shape_cast %44 : vector<16x64xbf16> to vector<1x16x64xbf16>
    %49 = vector.shape_cast %45 : vector<16x64xbf16> to vector<1x16x64xbf16>
    %50 = vector.shape_cast %46 : vector<16x64xbf16> to vector<1x16x64xbf16>
    %51 = vector.shape_cast %47 : vector<16x64xbf16> to vector<1x16x64xbf16>
    %52 = tpu.concatenate %48, %49, %50, %51 in 0 : vector<1x16x64xbf16>, vector<1x16x64xbf16>, vector<1x16x64xbf16>, vector<1x16x64xbf16> -> vector<4x16x64xbf16>
    %53 = arith.truncf %32 : vector<16x256xf32> to vector<16x256xbf16>
    %54 = vector.extract_strided_slice %53 {offsets = [0, 0], sizes = [16, 64], strides = [1, 1]} : vector<16x256xbf16> to vector<16x64xbf16>
    %55 = vector.extract_strided_slice %53 {offsets = [0, 64], sizes = [16, 64], strides = [1, 1]} : vector<16x256xbf16> to vector<16x64xbf16>
    %56 = vector.extract_strided_slice %53 {offsets = [0, 128], sizes = [16, 64], strides = [1, 1]} : vector<16x256xbf16> to vector<16x64xbf16>
    %57 = vector.extract_strided_slice %53 {offsets = [0, 192], sizes = [16, 64], strides = [1, 1]} : vector<16x256xbf16> to vector<16x64xbf16>
    %58 = vector.shape_cast %54 : vector<16x64xbf16> to vector<1x16x64xbf16>
    %59 = vector.shape_cast %55 : vector<16x64xbf16> to vector<1x16x64xbf16>
    %60 = vector.shape_cast %56 : vector<16x64xbf16> to vector<1x16x64xbf16>
    %61 = vector.shape_cast %57 : vector<16x64xbf16> to vector<1x16x64xbf16>
    %62 = tpu.concatenate %58, %59, %60, %61 in 0 : vector<1x16x64xbf16>, vector<1x16x64xbf16>, vector<1x16x64xbf16>, vector<1x16x64xbf16> -> vector<4x16x64xbf16>
    %cst_19 = arith.constant dense<0.000000e+00> : vector<4x16x16xf32>
    %63 = tpu.matmul %42, %52, %cst_19 {dimension_numbers = #tpu.dot_dimension_numbers<[2], [2], [1], [1], [0, 0, 0, 1, 1, 1], [0], [0]>} : vector<4x16x64xbf16>, vector<4x16x64xbf16>, vector<4x16x16xf32> -> vector<4x16x16xf32>
    %cst_20 = arith.constant dense<0xFF800000> : vector<4x16xf32>
    %64 = vector.multi_reduction <maximumf>, %63, %cst_20 [2] : vector<4x16x16xf32> to vector<4x16xf32>
    %65 = vector.shape_cast %64 : vector<4x16xf32> to vector<4x16x1xf32>
    %66 = vector.broadcast %65 : vector<4x16x1xf32> to vector<4x16x16xf32>
    %67 = arith.subf %63, %66 : vector<4x16x16xf32>
    %68 = math.exp %67 : vector<4x16x16xf32>
    %cst_21 = arith.constant dense<0.000000e+00> : vector<4x16xf32>
    %69 = vector.multi_reduction <add>, %68, %cst_21 [2] : vector<4x16x16xf32> to vector<4x16xf32>
    %70 = vector.shape_cast %69 : vector<4x16xf32> to vector<4x16x1xf32>
    %71 = tpu.reciprocal %70 {approx = true} : vector<4x16x1xf32> -> vector<4x16x1xf32>
    %72 = vector.broadcast %71 : vector<4x16x1xf32> to vector<4x16x16xf32>
    %73 = arith.mulf %68, %72 : vector<4x16x16xf32>
    %74 = arith.truncf %73 : vector<4x16x16xf32> to vector<4x16x16xbf16>
    %cst_22 = arith.constant dense<0.000000e+00> : vector<4x16x64xf32>
    %75 = tpu.matmul %74, %62, %cst_22 {dimension_numbers = #tpu.dot_dimension_numbers<[2], [1], [1], [2], [0, 0, 0, 1, 1, 2], [0], [0]>} : vector<4x16x16xbf16>, vector<4x16x64xbf16>, vector<4x16x64xf32> -> vector<4x16x64xf32>
    %76 = vector.extract_strided_slice %75 {offsets = [0, 0, 0], sizes = [1, 16, 64], strides = [1, 1, 1]} : vector<4x16x64xf32> to vector<1x16x64xf32>
    %77 = vector.shape_cast %76 : vector<1x16x64xf32> to vector<16x64xf32>
    %78 = vector.extract_strided_slice %75 {offsets = [1, 0, 0], sizes = [1, 16, 64], strides = [1, 1, 1]} : vector<4x16x64xf32> to vector<1x16x64xf32>
    %79 = vector.shape_cast %78 : vector<1x16x64xf32> to vector<16x64xf32>
    %80 = vector.extract_strided_slice %75 {offsets = [2, 0, 0], sizes = [1, 16, 64], strides = [1, 1, 1]} : vector<4x16x64xf32> to vector<1x16x64xf32>
    %81 = vector.shape_cast %80 : vector<1x16x64xf32> to vector<16x64xf32>
    %82 = vector.extract_strided_slice %75 {offsets = [3, 0, 0], sizes = [1, 16, 64], strides = [1, 1, 1]} : vector<4x16x64xf32> to vector<1x16x64xf32>
    %83 = vector.shape_cast %82 : vector<1x16x64xf32> to vector<16x64xf32>
    %84 = tpu.concatenate %77, %79, %81, %83 in 1 : vector<16x64xf32>, vector<16x64xf32>, vector<16x64xf32>, vector<16x64xf32> -> vector<16x256xf32>
    %85 = arith.truncf %84 : vector<16x256xf32> to vector<16x256xbf16>
    %c0_23 = arith.constant 0 : index
    %c0_24 = arith.constant 0 : index
    %86 = vector.load %arg7[%c0_23, %c0_24] : memref<256x128xbf16, #tpu.memory_space<vmem>>, vector<256x128xbf16>
    %cst_25 = arith.constant dense<0.000000e+00> : vector<16x128xf32>
    %87 = tpu.matmul %85, %86, %cst_25 {dimension_numbers = #tpu.dot_dimension_numbers<[1], [0], [0], [1], [0, 0, 1, 1], [], []>} : vector<16x256xbf16>, vector<256x128xbf16>, vector<16x128xf32> -> vector<16x128xf32>
    %c0_26 = arith.constant 0 : index
    %c0_27 = arith.constant 0 : index
    %88 = vector.load %arg8[%c0_26, %c0_27] : memref<1x128xf32, #tpu.memory_space<vmem>>, vector<1x128xf32>
    %89 = vector.broadcast %88 : vector<1x128xf32> to vector<16x128xf32>
    %90 = arith.addf %87, %89 : vector<16x128xf32>
    %91 = arith.addf %90, %1 : vector<16x128xf32>
    %cst_28 = arith.constant dense<0.000000e+00> : vector<16xf32>
    %92 = vector.multi_reduction <add>, %91, %cst_28 [1] : vector<16x128xf32> to vector<16xf32>
    %93 = vector.shape_cast %92 : vector<16xf32> to vector<16x1xf32>
    %cst_29 = arith.constant 1.280000e+02 : f32
    %94 = vector.broadcast %cst_29 : f32 to vector<16x1xf32>
    %95 = arith.divf %93, %94 : vector<16x1xf32>
    %96 = vector.broadcast %95 : vector<16x1xf32> to vector<16x128xf32>
    %97 = arith.subf %91, %96 : vector<16x128xf32>
    %98 = arith.mulf %97, %97 : vector<16x128xf32>
    %cst_30 = arith.constant dense<0.000000e+00> : vector<16xf32>
    %99 = vector.multi_reduction <add>, %98, %cst_30 [1] : vector<16x128xf32> to vector<16xf32>
    %100 = vector.shape_cast %99 : vector<16xf32> to vector<16x1xf32>
    %cst_31 = arith.constant 1.280000e+02 : f32
    %101 = vector.broadcast %cst_31 : f32 to vector<16x1xf32>
    %102 = arith.divf %100, %101 : vector<16x1xf32>
    %103 = vector.broadcast %95 : vector<16x1xf32> to vector<16x128xf32>
    %104 = arith.subf %91, %103 : vector<16x128xf32>
    %cst_32 = arith.constant 9.99999974E-6 : f32
    %105 = vector.broadcast %cst_32 : f32 to vector<16x1xf32>
    %106 = arith.addf %102, %105 : vector<16x1xf32>
    %107 = math.rsqrt %106 : vector<16x1xf32>
    %108 = vector.broadcast %107 : vector<16x1xf32> to vector<16x128xf32>
    %109 = arith.mulf %104, %108 : vector<16x128xf32>
    %c0_33 = arith.constant 0 : index
    %c0_34 = arith.constant 0 : index
    %110 = vector.load %arg9[%c0_33, %c0_34] : memref<1x128xf32, #tpu.memory_space<vmem>>, vector<1x128xf32>
    %111 = vector.broadcast %110 : vector<1x128xf32> to vector<16x128xf32>
    %112 = arith.mulf %109, %111 : vector<16x128xf32>
    %c0_35 = arith.constant 0 : index
    %c0_36 = arith.constant 0 : index
    %113 = vector.load %arg10[%c0_35, %c0_36] : memref<1x128xf32, #tpu.memory_space<vmem>>, vector<1x128xf32>
    %114 = vector.broadcast %113 : vector<1x128xf32> to vector<16x128xf32>
    %115 = arith.addf %112, %114 : vector<16x128xf32>
    %cst_37 = arith.constant 0.000000e+00 : f32
    %116 = vector.broadcast %cst_37 : f32 to vector<24x128xf32>
    %c0_38 = arith.constant 0 : index
    %c0_39 = arith.constant 0 : index
    %117 = vector.load %arg16[%c0_38, %c0_39] : memref<24x128xf32, #tpu.memory_space<vmem>>, vector<24x128xf32>
    tpu.vector_store %arg16[%c0_38, %c0_39], %116 {strides = array<i32>} : memref<24x128xf32, #tpu.memory_space<vmem>>, vector<24x128xf32>,
    %c4 = arith.constant 4 : index
    %c0_40 = arith.constant 0 : index
    %118 = vector.load %arg16[%c4, %c0_40] : memref<24x128xf32, #tpu.memory_space<vmem>>, vector<16x128xf32>
    tpu.vector_store %arg16[%c4, %c0_40], %115 {strides = array<i32>} : memref<24x128xf32, #tpu.memory_space<vmem>>, vector<16x128xf32>,
    %c0_41 = arith.constant 0 : index
    %c0_42 = arith.constant 0 : index
    %119 = vector.load %arg16[%c0_41, %c0_42] : memref<24x128xf32, #tpu.memory_space<vmem>>, vector<16x128xf32>
    %c1 = arith.constant 1 : index
    %c0_43 = arith.constant 0 : index
    %120 = vector.load %arg16[%c1, %c0_43] : memref<24x128xf32, #tpu.memory_space<vmem>>, vector<16x128xf32>
    %c2 = arith.constant 2 : index
    %c0_44 = arith.constant 0 : index
    %121 = vector.load %arg16[%c2, %c0_44] : memref<24x128xf32, #tpu.memory_space<vmem>>, vector<16x128xf32>
    %c3 = arith.constant 3 : index
    %c0_45 = arith.constant 0 : index
    %122 = vector.load %arg16[%c3, %c0_45] : memref<24x128xf32, #tpu.memory_space<vmem>>, vector<16x128xf32>
    %c4_46 = arith.constant 4 : index
    %c0_47 = arith.constant 0 : index
    %123 = vector.load %arg16[%c4_46, %c0_47] : memref<24x128xf32, #tpu.memory_space<vmem>>, vector<16x128xf32>
    %c5 = arith.constant 5 : index
    %c0_48 = arith.constant 0 : index
    %124 = vector.load %arg16[%c5, %c0_48] : memref<24x128xf32, #tpu.memory_space<vmem>>, vector<16x128xf32>
    %c6 = arith.constant 6 : index
    %c0_49 = arith.constant 0 : index
    %125 = vector.load %arg16[%c6, %c0_49] : memref<24x128xf32, #tpu.memory_space<vmem>>, vector<16x128xf32>
    %c7 = arith.constant 7 : index
    %c0_50 = arith.constant 0 : index
    %126 = vector.load %arg16[%c7, %c0_50] : memref<24x128xf32, #tpu.memory_space<vmem>>, vector<16x128xf32>
    %c8 = arith.constant 8 : index
    %c0_51 = arith.constant 0 : index
    %127 = vector.load %arg16[%c8, %c0_51] : memref<24x128xf32, #tpu.memory_space<vmem>>, vector<16x128xf32>
    %128 = tpu.concatenate %119, %120, %121, %122, %123, %124, %125, %126, %127 in 1 : vector<16x128xf32>, vector<16x128xf32>, vector<16x128xf32>, vector<16x128xf32>, vector<16x128xf32>, vector<16x128xf32>, vector<16x128xf32>, vector<16x128xf32>, vector<16x128xf32> -> vector<16x1152xf32>
    %129 = arith.truncf %128 : vector<16x1152xf32> to vector<16x1152xbf16>
    %c0_52 = arith.constant 0 : index
    %c0_53 = arith.constant 0 : index
    %130 = vector.load %arg11[%c0_52, %c0_53] : memref<1152x512xbf16, #tpu.memory_space<vmem>>, vector<1152x512xbf16>
    %cst_54 = arith.constant dense<0.000000e+00> : vector<16x512xf32>
    %131 = tpu.matmul %129, %130, %cst_54 {dimension_numbers = #tpu.dot_dimension_numbers<[1], [0], [0], [1], [0, 0, 1, 1], [], []>} : vector<16x1152xbf16>, vector<1152x512xbf16>, vector<16x512xf32> -> vector<16x512xf32>
    %c0_55 = arith.constant 0 : index
    %c0_56 = arith.constant 0 : index
    %132 = vector.load %arg12[%c0_55, %c0_56] : memref<1x512xf32, #tpu.memory_space<vmem>>, vector<1x512xf32>
    %133 = vector.broadcast %132 : vector<1x512xf32> to vector<16x512xf32>
    %134 = arith.addf %131, %133 : vector<16x512xf32>
    %135 = arith.mulf %134, %134 : vector<16x512xf32>
    %136 = arith.mulf %134, %135 : vector<16x512xf32>
    %cst_57 = arith.constant 4.471500e-02 : f32
    %137 = vector.broadcast %cst_57 : f32 to vector<16x512xf32>
    %138 = arith.mulf %137, %136 : vector<16x512xf32>
    %139 = arith.addf %134, %138 : vector<16x512xf32>
    %cst_58 = arith.constant 0.797884583 : f32
    %140 = vector.broadcast %cst_58 : f32 to vector<16x512xf32>
    %141 = arith.mulf %140, %139 : vector<16x512xf32>
    %142 = math.tanh %141 : vector<16x512xf32>
    %cst_59 = arith.constant 1.000000e+00 : f32
    %143 = vector.broadcast %cst_59 : f32 to vector<16x512xf32>
    %144 = arith.addf %143, %142 : vector<16x512xf32>
    %cst_60 = arith.constant 5.000000e-01 : f32
    %145 = vector.broadcast %cst_60 : f32 to vector<16x512xf32>
    %146 = arith.mulf %145, %144 : vector<16x512xf32>
    %147 = arith.mulf %134, %146 : vector<16x512xf32>
    %148 = arith.truncf %147 : vector<16x512xf32> to vector<16x512xbf16>
    %c0_61 = arith.constant 0 : index
    %c0_62 = arith.constant 0 : index
    %149 = vector.load %arg13[%c0_61, %c0_62] : memref<512x128xbf16, #tpu.memory_space<vmem>>, vector<512x128xbf16>
    %cst_63 = arith.constant dense<0.000000e+00> : vector<16x128xf32>
    %150 = tpu.matmul %148, %149, %cst_63 {dimension_numbers = #tpu.dot_dimension_numbers<[1], [0], [0], [1], [0, 0, 1, 1], [], []>} : vector<16x512xbf16>, vector<512x128xbf16>, vector<16x128xf32> -> vector<16x128xf32>
    %c0_64 = arith.constant 0 : index
    %c0_65 = arith.constant 0 : index
    %151 = vector.load %arg14[%c0_64, %c0_65] : memref<1x128xf32, #tpu.memory_space<vmem>>, vector<1x128xf32>
    %152 = vector.broadcast %151 : vector<1x128xf32> to vector<16x128xf32>
    %153 = arith.addf %150, %152 : vector<16x128xf32>
    %154 = arith.addf %153, %91 : vector<16x128xf32>
    %c0_66 = arith.constant 0 : index
    %c0_67 = arith.constant 0 : index
    %c0_68 = arith.constant 0 : index
    %155 = vector.load %arg15[%c0_66, %c0_67, %c0_68] : memref<1x16x128xf32, #tpu.memory_space<vmem>>, vector<1x16x128xf32>
    %156 = vector.shape_cast %155 : vector<1x16x128xf32> to vector<16x128xf32>
    %157 = vector.shape_cast %154 : vector<16x128xf32> to vector<1x16x128xf32>
    tpu.vector_store %arg15[%c0_66, %c0_67, %c0_68], %157 {strides = array<i32>} : memref<1x16x128xf32, #tpu.memory_space<vmem>>, vector<1x16x128xf32>,
    return
  }
  func.func @transform_0(%arg0: i32) -> (i32, i32, i32) {
    %c0_i32 = arith.constant 0 : i32
    %c0_i32_0 = arith.constant 0 : i32
    %c0_i32_1 = arith.constant 0 : i32
    return %arg0, %c0_i32, %c0_i32_0 : i32, i32, i32
  }
  func.func @transform_1(%arg0: i32) -> (i32, i32) {
    %c0_i32 = arith.constant 0 : i32
    %c0_i32_0 = arith.constant 0 : i32
    %c0_i32_1 = arith.constant 0 : i32
    return %c0_i32, %c0_i32_0 : i32, i32
  }
  func.func @transform_2(%arg0: i32) -> (i32, i32) {
    %c0_i32 = arith.constant 0 : i32
    %c0_i32_0 = arith.constant 0 : i32
    %c0_i32_1 = arith.constant 0 : i32
    return %c0_i32, %c0_i32_0 : i32, i32
  }
  func.func @transform_3(%arg0: i32) -> (i32, i32) {
    %c0_i32 = arith.constant 0 : i32
    %c0_i32_0 = arith.constant 0 : i32
    %c0_i32_1 = arith.constant 0 : i32
    return %c0_i32, %c0_i32_0 : i32, i32
  }
  func.func @transform_4(%arg0: i32) -> (i32, i32) {
    %c0_i32 = arith.constant 0 : i32
    %c0_i32_0 = arith.constant 0 : i32
    %c0_i32_1 = arith.constant 0 : i32
    return %c0_i32, %c0_i32_0 : i32, i32
  }
  func.func @transform_5(%arg0: i32) -> (i32, i32) {
    %c0_i32 = arith.constant 0 : i32
    %c0_i32_0 = arith.constant 0 : i32
    %c0_i32_1 = arith.constant 0 : i32
    return %c0_i32, %c0_i32_0 : i32, i32
  }
  func.func @transform_6(%arg0: i32) -> (i32, i32) {
    %c0_i32 = arith.constant 0 : i32
    %c0_i32_0 = arith.constant 0 : i32
    %c0_i32_1 = arith.constant 0 : i32
    return %c0_i32, %c0_i32_0 : i32, i32
  }
  func.func @transform_7(%arg0: i32) -> (i32, i32) {
    %c0_i32 = arith.constant 0 : i32
    %c0_i32_0 = arith.constant 0 : i32
    %c0_i32_1 = arith.constant 0 : i32
    return %c0_i32, %c0_i32_0 : i32, i32
  }
  func.func @transform_8(%arg0: i32) -> (i32, i32) {
    %c0_i32 = arith.constant 0 : i32
    %c0_i32_0 = arith.constant 0 : i32
    %c0_i32_1 = arith.constant 0 : i32
    return %c0_i32, %c0_i32_0 : i32, i32
  }
  func.func @transform_9(%arg0: i32) -> (i32, i32) {
    %c0_i32 = arith.constant 0 : i32
    %c0_i32_0 = arith.constant 0 : i32
    %c0_i32_1 = arith.constant 0 : i32
    return %c0_i32, %c0_i32_0 : i32, i32
  }
  func.func @transform_10(%arg0: i32) -> (i32, i32) {
    %c0_i32 = arith.constant 0 : i32
    %c0_i32_0 = arith.constant 0 : i32
    %c0_i32_1 = arith.constant 0 : i32
    return %c0_i32, %c0_i32_0 : i32, i32
  }
  func.func @transform_11(%arg0: i32) -> (i32, i32) {
    %c0_i32 = arith.constant 0 : i32
    %c0_i32_0 = arith.constant 0 : i32
    %c0_i32_1 = arith.constant 0 : i32
    return %c0_i32, %c0_i32_0 : i32, i32
  }
  func.func @transform_12(%arg0: i32) -> (i32, i32) {
    %c0_i32 = arith.constant 0 : i32
    %c0_i32_0 = arith.constant 0 : i32
    %c0_i32_1 = arith.constant 0 : i32
    return %c0_i32, %c0_i32_0 : i32, i32
  }
  func.func @transform_13(%arg0: i32) -> (i32, i32) {
    %c0_i32 = arith.constant 0 : i32
    %c0_i32_0 = arith.constant 0 : i32
    %c0_i32_1 = arith.constant 0 : i32
    return %c0_i32, %c0_i32_0 : i32, i32
  }
  func.func @transform_14(%arg0: i32) -> (i32, i32, i32) {
    %c0_i32 = arith.constant 0 : i32
    %c0_i32_0 = arith.constant 0 : i32
    %c0_i32_1 = arith.constant 0 : i32
    return %arg0, %c0_i32, %c0_i32_0 : i32, i32, i32
  }
}

</mosaic_0001>

<llo_original>
// kernel: tpu_custom_call.1
$region0: #{tpu_custom_call.1}
  #allocation0 [shape = 'u32[]', space=smem, size = 0x4, offset = 0x4, fixed_abs, tag = 'smem constant byte address 0x4 - core index']
  #allocation1 [shape = 'u32[144,128]{1,0:T(1,128)}', space=vmem, size = 0x12000, scoped, tag = 'internal scratch']
  #allocation2 [shape = 'f32[24,128]{1,0:T(8,128)}', space=vmem, size = 0x3000, scoped, tag = 'scratch operand']
  %s0 = inlined_call_operand.hbm [shape: f32[2,16,128], index: 0, kind: input, shape index: {}]
  %s1 = inlined_call_operand.hbm [shape: f32[1,128], index: 1, kind: input, shape index: {}]
  %s2 = inlined_call_operand.hbm [shape: f32[1,128], index: 2, kind: input, shape index: {}]
  %s3 = inlined_call_operand.hbm [shape: bf16[128,256], index: 3, kind: input, shape index: {}]
  %s4 = inlined_call_operand.hbm [shape: bf16[128,256], index: 4, kind: input, shape index: {}]
  %s5 = inlined_call_operand.hbm [shape: bf16[128,256], index: 5, kind: input, shape index: {}]
  %s6 = inlined_call_operand.hbm [shape: bf16[256,128], index: 6, kind: input, shape index: {}]
  %s7 = inlined_call_operand.hbm [shape: f32[1,128], index: 7, kind: input, shape index: {}]
  %s8 = inlined_call_operand.hbm [shape: f32[1,128], index: 8, kind: input, shape index: {}]
  %s9 = inlined_call_operand.hbm [shape: f32[1,128], index: 9, kind: input, shape index: {}]
  %s10 = inlined_call_operand.hbm [shape: bf16[1152,512], index: 10, kind: input, shape index: {}]
  %s11 = inlined_call_operand.hbm [shape: f32[1,512], index: 11, kind: input, shape index: {}]
  %s12 = inlined_call_operand.hbm [shape: bf16[512,128], index: 12, kind: input, shape index: {}]
  %s13 = inlined_call_operand.hbm [shape: f32[1,128], index: 13, kind: input, shape index: {}]
  %s14 = inlined_call_operand.hbm [shape: f32[2,16,128], index: 14, kind: output, shape index: {}]
  %s15 = sld [smem:[#allocation0]]
  $region145: #{tpu_custom_call.1} parent=0
    _
  %s17 = ssub.s32 1, %s15
  %s18 = scalar_select 0, %s17, %s15
  $region1: #{tpu_custom_call.1} parent=0
    #allocation3 [shape = 'u8[16384]{0}', space=vmem, size = 0x4000, scoped, tag = 'input window, operand 0']
    #allocation4 [shape = 's32[2]{0}', space=sflag, size = 0x8, scoped, tag = 'scoped memory for tpu_custom_call.1']
    #allocation5 [shape = 's32[2]{0}', space=sflag, size = 0x8, scoped, tag = 'scoped memory for tpu_custom_call.1']
    #allocation6 [shape = 'u8[512]{0}', space=vmem, size = 0x400, scoped, tag = 'input window, operand 1, single buffered']
    #allocation7 [shape = 's32[1]{0}', space=sflag, size = 0x4, scoped, tag = 'scoped memory for tpu_custom_call.1']
    #allocation8 [shape = 'u8[512]{0}', space=vmem, size = 0x400, scoped, tag = 'input window, operand 2, single buffered']
    #allocation9 [shape = 'u8[65536]{0}', space=vmem, size = 0x10000, scoped, tag = 'input window, operand 3, single buffered']
    #allocation10 [shape = 's32[1]{0}', space=sflag, size = 0x4, scoped, tag = 'scoped memory for tpu_custom_call.1']
    #allocation11 [shape = 'u8[65536]{0}', space=vmem, size = 0x10000, scoped, tag = 'input window, operand 4, single buffered']
    #allocation12 [shape = 'u8[65536]{0}', space=vmem, size = 0x10000, scoped, tag = 'input window, operand 5, single buffered']
    #allocation13 [shape = 's32[1]{0}', space=sflag, size = 0x4, scoped, tag = 'scoped memory for tpu_custom_call.1']
    #allocation14 [shape = 'u8[65536]{0}', space=vmem, size = 0x10000, scoped, tag = 'input window, operand 6, single buffered']
    #allocation15 [shape = 'u8[512]{0}', space=vmem, size = 0x400, scoped, tag = 'input window, operand 7, single buffered']
    #allocation16 [shape = 's32[1]{0}', space=sflag, size = 0x4, scoped, tag = 'scoped memory for tpu_custom_call.1']
    #allocation17 [shape = 'u8[512]{0}', space=vmem, size = 0x400, scoped, tag = 'input window, operand 8, single buffered']
    #allocation18 [shape = 'u8[512]{0}', space=vmem, size = 0x400, scoped, tag = 'input window, operand 9, single buffered']
    #allocation19 [shape = 's32[1]{0}', space=sflag, size = 0x4, scoped, tag = 'scoped memory for tpu_custom_call.1']
    #allocation20 [shape = 'u8[1179648]{0}', space=vmem, size = 0x120000, scoped, tag = 'input window, operand 10, single buffered']
    #allocation21 [shape = 'u8[2048]{0}', space=vmem, size = 0x800, scoped, tag = 'input window, operand 11, single buffered']
    #allocation22 [shape = 's32[1]{0}', space=sflag, size = 0x4, scoped, tag = 'scoped memory for tpu_custom_call.1']
    #allocation23 [shape = 'u8[131072]{0}', space=vmem, size = 0x20000, scoped, tag = 'input window, operand 12, single buffered']
    #allocation24 [shape = 'u8[512]{0}', space=vmem, size = 0x400, scoped, tag = 'input window, operand 13, single buffered']
    #allocation25 [shape = 's32[1]{0}', space=sflag, size = 0x4, scoped, tag = 'scoped memory for tpu_custom_call.1']
    #allocation26 [shape = 'u8[16384]{0}', space=vmem, size = 0x4000, scoped, tag = 'output window, operand 0']
    %19 = vsyncpa [#allocation4], 0
    %s20 = scalar_lea.sflag [#allocation4], 1
    %21 = vsyncpa %s20, 0
    %22 = vsyncpa [#allocation7], 0
    %23 = vsyncpa [#allocation10], 0
    %24 = vsyncpa [#allocation13], 0
    %25 = vsyncpa [#allocation16], 0
    %26 = vsyncpa [#allocation19], 0
    %27 = vsyncpa [#allocation22], 0
    %28 = vsyncpa [#allocation25], 0
    %29 = vsyncpa [#allocation5], 0
    %s30 = scalar_lea.sflag [#allocation5], 1
    %31 = vsyncpa %s30, 0
    loop: start=0, step=1, limit=4
    $region2: #{tpu_custom_call.1} parent=1 // loop_pre_header
      _
    $region3: #{tpu_custom_call.1} parent=1 // loop_header
      %s33 = sphi 0, %s37
      %p34 = scmp.ge.s32.totalorder %s33, 4
      %s43 = sphi 0, %s45
      %s46 = sphi 0, %s43
      %s47 = sphi 0, %s46
      %s63 = sphi 0, %s47
      %s67 = sphi 0, %s67
      %s69 = sphi 0, %s67
      %s70 = sphi 0, %s69
      %s84 = sphi 0, %s70
      %s88 = sphi 0, %s88
      %s90 = sphi 0, %s88
      %s91 = sphi 0, %s90
      %s105 = sphi 0, %s91
      %s109 = sphi 0, %s109
      %s111 = sphi 0, %s109
      %s112 = sphi 0, %s111
      %s126 = sphi 0, %s112
      %s130 = sphi 0, %s130
      %s132 = sphi 0, %s130
      %s133 = sphi 0, %s132
      %s147 = sphi 0, %s133
      %s151 = sphi 0, %s151
      %s153 = sphi 0, %s151
      %s154 = sphi 0, %s153
      %s168 = sphi 0, %s154
      %s172 = sphi 0, %s172
      %s174 = sphi 0, %s172
      %s175 = sphi 0, %s174
      %s189 = sphi 0, %s175
      %s193 = sphi 0, %s193
      %s195 = sphi 0, %s193
      %s196 = sphi 0, %s195
      %s210 = sphi 0, %s196
      %s214 = sphi 0, %s214
      %s216 = sphi 0, %s214
      %s217 = sphi 0, %s216
      %s231 = sphi 0, %s217
      %s235 = sphi 0, %s235
      %s237 = sphi 0, %s235
      %s238 = sphi 0, %s237
      %s252 = sphi 0, %s238
      %s256 = sphi 0, %s256
      %s258 = sphi 0, %s256
      %s259 = sphi 0, %s258
      %s273 = sphi 0, %s259
      %s277 = sphi 0, %s277
      %s279 = sphi 0, %s277
      %s280 = sphi 0, %s279
      %s294 = sphi 0, %s280
      %s298 = sphi 0, %s298
      %s300 = sphi 0, %s298
      %s301 = sphi 0, %s300
      %s315 = sphi 0, %s301
      %s319 = sphi 0, %s319
      %s321 = sphi 0, %s319
      %s322 = sphi 0, %s321
      %s336 = sphi 0, %s322
      %s342 = sphi 0, %s344
      %s345 = sphi 0, %s342
      %s346 = sphi 0, %s345
      %s362 = sphi 0, %s346
    $region4: #{tpu_custom_call.1} parent=1 // loop_header_branch
      %36 = sbr.rel (%p34) target = $region8
    $region5: #{tpu_custom_call.1} parent=1 // loop_body
      %s38 = ssub.s32 %s33, 1
      %s39 = ssub.s32 %s33, 2
      %s40 = sadd.s32 %s33, 1
      %s41 = ssub.s32 %s33, %s40
      %p42 = scmp.eq.s32.totalorder %s41, 0
      %s44 = sadd.s32 %s43, 1
      %s45 = scalar_select %p42, %s43, %s44
      %p48 = pneg %p42
      %p49 = scmp.eq.s32.totalorder %s33, 1
      %p50 = por %p48, %p49
      %p51 = scmp.ne.s32.totalorder %s43, %s46
      %p52 = scmp.eq.s32.totalorder %s33, 0
      %p53 = por %p51, %p52
      %p54 = scmp.ne.s32.totalorder %s43, %s46
      %p55 = scmp.eq.s32.totalorder %s38, 1
      %p56 = por %p54, %p55
      %p57 = scmp.ne.s32.totalorder %s46, %s47
      %p58 = scmp.eq.s32.totalorder %s38, 0
      %p59 = por %p57, %p58
      %p60 = scmp.ne.s32.totalorder %s46, %s47
      %p61 = scmp.eq.s32.totalorder %s39, 1
      %p62 = por %p60, %p61
      %p64 = scmp.ne.s32.totalorder %s47, %s63
      %p65 = scmp.eq.s32.totalorder %s39, 0
      %p66 = por %p64, %p65
      %s68 = sadd.s32 %s67, 1
      %p71 = scmp.eq.s32.totalorder %s33, 1
      %p72 = scmp.ne.s32.totalorder %s67, %s69
      %p73 = scmp.eq.s32.totalorder %s33, 0
      %p74 = por %p72, %p73
      %p75 = scmp.ne.s32.totalorder %s67, %s69
      %p76 = scmp.eq.s32.totalorder %s38, 1
      %p77 = por %p75, %p76
      %p78 = scmp.ne.s32.totalorder %s69, %s70
      %p79 = scmp.eq.s32.totalorder %s38, 0
      %p80 = por %p78, %p79
      %p81 = scmp.ne.s32.totalorder %s69, %s70
      %p82 = scmp.eq.s32.totalorder %s39, 1
      %p83 = por %p81, %p82
      %p85 = scmp.ne.s32.totalorder %s70, %s84
      %p86 = scmp.eq.s32.totalorder %s39, 0
      %p87 = por %p85, %p86
      %s89 = sadd.s32 %s88, 1
      %p92 = scmp.eq.s32.totalorder %s33, 1
      %p93 = scmp.ne.s32.totalorder %s88, %s90
      %p94 = scmp.eq.s32.totalorder %s33, 0
      %p95 = por %p93, %p94
      %p96 = scmp.ne.s32.totalorder %s88, %s90
      %p97 = scmp.eq.s32.totalorder %s38, 1
      %p98 = por %p96, %p97
      %p99 = scmp.ne.s32.totalorder %s90, %s91
      %p100 = scmp.eq.s32.totalorder %s38, 0
      %p101 = por %p99, %p100
      %p102 = scmp.ne.s32.totalorder %s90, %s91
      %p103 = scmp.eq.s32.totalorder %s39, 1
      %p104 = por %p102, %p103
      %p106 = scmp.ne.s32.totalorder %s91, %s105
      %p107 = scmp.eq.s32.totalorder %s39, 0
      %p108 = por %p106, %p107
      %s110 = sadd.s32 %s109, 1
      %p113 = scmp.eq.s32.totalorder %s33, 1
      %p114 = scmp.ne.s32.totalorder %s109, %s111
      %p115 = scmp.eq.s32.totalorder %s33, 0
      %p116 = por %p114, %p115
      %p117 = scmp.ne.s32.totalorder %s109, %s111
      %p118 = scmp.eq.s32.totalorder %s38, 1
      %p119 = por %p117, %p118
      %p120 = scmp.ne.s32.totalorder %s111, %s112
      %p121 = scmp.eq.s32.totalorder %s38, 0
      %p122 = por %p120, %p121
      %p123 = scmp.ne.s32.totalorder %s111, %s112
      %p124 = scmp.eq.s32.totalorder %s39, 1
      %p125 = por %p123, %p124
      %p127 = scmp.ne.s32.totalorder %s112, %s126
      %p128 = scmp.eq.s32.totalorder %s39, 0
      %p129 = por %p127, %p128
      %s131 = sadd.s32 %s130, 1
      %p134 = scmp.eq.s32.totalorder %s33, 1
      %p135 = scmp.ne.s32.totalorder %s130, %s132
      %p136 = scmp.eq.s32.totalorder %s33, 0
      %p137 = por %p135, %p136
      %p138 = scmp.ne.s32.totalorder %s130, %s132
      %p139 = scmp.eq.s32.totalorder %s38, 1
      %p140 = por %p138, %p139
      %p141 = scmp.ne.s32.totalorder %s132, %s133
      %p142 = scmp.eq.s32.totalorder %s38, 0
      %p143 = por %p141, %p142
      %p144 = scmp.ne.s32.totalorder %s132, %s133
      %p145 = scmp.eq.s32.totalorder %s39, 1
      %p146 = por %p144, %p145
      %p148 = scmp.ne.s32.totalorder %s133, %s147
      %p149 = scmp.eq.s32.totalorder %s39, 0
      %p150 = por %p148, %p149
      %s152 = sadd.s32 %s151, 1
      %p155 = scmp.eq.s32.totalorder %s33, 1
      %p156 = scmp.ne.s32.totalorder %s151, %s153
      %p157 = scmp.eq.s32.totalorder %s33, 0
      %p158 = por %p156, %p157
      %p159 = scmp.ne.s32.totalorder %s151, %s153
      %p160 = scmp.eq.s32.totalorder %s38, 1
      %p161 = por %p159, %p160
      %p162 = scmp.ne.s32.totalorder %s153, %s154
      %p163 = scmp.eq.s32.totalorder %s38, 0
      %p164 = por %p162, %p163
      %p165 = scmp.ne.s32.totalorder %s153, %s154
      %p166 = scmp.eq.s32.totalorder %s39, 1
      %p167 = por %p165, %p166
      %p169 = scmp.ne.s32.totalorder %s154, %s168
      %p170 = scmp.eq.s32.totalorder %s39, 0
      %p171 = por %p169, %p170
      %s173 = sadd.s32 %s172, 1
      %p176 = scmp.eq.s32.totalorder %s33, 1
      %p177 = scmp.ne.s32.totalorder %s172, %s174
      %p178 = scmp.eq.s32.totalorder %s33, 0
      %p179 = por %p177, %p178
      %p180 = scmp.ne.s32.totalorder %s172, %s174
      %p181 = scmp.eq.s32.totalorder %s38, 1
      %p182 = por %p180, %p181
      %p183 = scmp.ne.s32.totalorder %s174, %s175
      %p184 = scmp.eq.s32.totalorder %s38, 0
      %p185 = por %p183, %p184
      %p186 = scmp.ne.s32.totalorder %s174, %s175
      %p187 = scmp.eq.s32.totalorder %s39, 1
      %p188 = por %p186, %p187
      %p190 = scmp.ne.s32.totalorder %s175, %s189
      %p191 = scmp.eq.s32.totalorder %s39, 0
      %p192 = por %p190, %p191
      %s194 = sadd.s32 %s193, 1
      %p197 = scmp.eq.s32.totalorder %s33, 1
      %p198 = scmp.ne.s32.totalorder %s193, %s195
      %p199 = scmp.eq.s32.totalorder %s33, 0
      %p200 = por %p198, %p199
      %p201 = scmp.ne.s32.totalorder %s193, %s195
      %p202 = scmp.eq.s32.totalorder %s38, 1
      %p203 = por %p201, %p202
      %p204 = scmp.ne.s32.totalorder %s195, %s196
      %p205 = scmp.eq.s32.totalorder %s38, 0
      %p206 = por %p204, %p205
      %p207 = scmp.ne.s32.totalorder %s195, %s196
      %p208 = scmp.eq.s32.totalorder %s39, 1
      %p209 = por %p207, %p208
      %p211 = scmp.ne.s32.totalorder %s196, %s210
      %p212 = scmp.eq.s32.totalorder %s39, 0
      %p213 = por %p211, %p212
      %s215 = sadd.s32 %s214, 1
      %p218 = scmp.eq.s32.totalorder %s33, 1
      %p219 = scmp.ne.s32.totalorder %s214, %s216
      %p220 = scmp.eq.s32.totalorder %s33, 0
      %p221 = por %p219, %p220
      %p222 = scmp.ne.s32.totalorder %s214, %s216
      %p223 = scmp.eq.s32.totalorder %s38, 1
      %p224 = por %p222, %p223
      %p225 = scmp.ne.s32.totalorder %s216, %s217
      %p226 = scmp.eq.s32.totalorder %s38, 0
      %p227 = por %p225, %p226
      %p228 = scmp.ne.s32.totalorder %s216, %s217
      %p229 = scmp.eq.s32.totalorder %s39, 1
      %p230 = por %p228, %p229
      %p232 = scmp.ne.s32.totalorder %s217, %s231
      %p233 = scmp.eq.s32.totalorder %s39, 0
      %p234 = por %p232, %p233
      %s236 = sadd.s32 %s235, 1
      %p239 = scmp.eq.s32.totalorder %s33, 1
      %p240 = scmp.ne.s32.totalorder %s235, %s237
      %p241 = scmp.eq.s32.totalorder %s33, 0
      %p242 = por %p240, %p241
      %p243 = scmp.ne.s32.totalorder %s235, %s237
      %p244 = scmp.eq.s32.totalorder %s38, 1
      %p245 = por %p243, %p244
      %p246 = scmp.ne.s32.totalorder %s237, %s238
      %p247 = scmp.eq.s32.totalorder %s38, 0
      %p248 = por %p246, %p247
      %p249 = scmp.ne.s32.totalorder %s237, %s238
      %p250 = scmp.eq.s32.totalorder %s39, 1
      %p251 = por %p249, %p250
      %p253 = scmp.ne.s32.totalorder %s238, %s252
      %p254 = scmp.eq.s32.totalorder %s39, 0
      %p255 = por %p253, %p254
      %s257 = sadd.s32 %s256, 1
      %p260 = scmp.eq.s32.totalorder %s33, 1
      %p261 = scmp.ne.s32.totalorder %s256, %s258
      %p262 = scmp.eq.s32.totalorder %s33, 0
      %p263 = por %p261, %p262
      %p264 = scmp.ne.s32.totalorder %s256, %s258
      %p265 = scmp.eq.s32.totalorder %s38, 1
      %p266 = por %p264, %p265
      %p267 = scmp.ne.s32.totalorder %s258, %s259
      %p268 = scmp.eq.s32.totalorder %s38, 0
      %p269 = por %p267, %p268
      %p270 = scmp.ne.s32.totalorder %s258, %s259
      %p271 = scmp.eq.s32.totalorder %s39, 1
      %p272 = por %p270, %p271
      %p274 = scmp.ne.s32.totalorder %s259, %s273
      %p275 = scmp.eq.s32.totalorder %s39, 0
      %p276 = por %p274, %p275
      %s278 = sadd.s32 %s277, 1
      %p281 = scmp.eq.s32.totalorder %s33, 1
      %p282 = scmp.ne.s32.totalorder %s277, %s279
      %p283 = scmp.eq.s32.totalorder %s33, 0
      %p284 = por %p282, %p283
      %p285 = scmp.ne.s32.totalorder %s277, %s279
      %p286 = scmp.eq.s32.totalorder %s38, 1
      %p287 = por %p285, %p286
      %p288 = scmp.ne.s32.totalorder %s279, %s280
      %p289 = scmp.eq.s32.totalorder %s38, 0
      %p290 = por %p288, %p289
      %p291 = scmp.ne.s32.totalorder %s279, %s280
      %p292 = scmp.eq.s32.totalorder %s39, 1
      %p293 = por %p291, %p292
      %p295 = scmp.ne.s32.totalorder %s280, %s294
      %p296 = scmp.eq.s32.totalorder %s39, 0
      %p297 = por %p295, %p296
      %s299 = sadd.s32 %s298, 1
      %p302 = scmp.eq.s32.totalorder %s33, 1
      %p303 = scmp.ne.s32.totalorder %s298, %s300
      %p304 = scmp.eq.s32.totalorder %s33, 0
      %p305 = por %p303, %p304
      %p306 = scmp.ne.s32.totalorder %s298, %s300
      %p307 = scmp.eq.s32.totalorder %s38, 1
      %p308 = por %p306, %p307
      %p309 = scmp.ne.s32.totalorder %s300, %s301
      %p310 = scmp.eq.s32.totalorder %s38, 0
      %p311 = por %p309, %p310
      %p312 = scmp.ne.s32.totalorder %s300, %s301
      %p313 = scmp.eq.s32.totalorder %s39, 1
      %p314 = por %p312, %p313
      %p316 = scmp.ne.s32.totalorder %s301, %s315
      %p317 = scmp.eq.s32.totalorder %s39, 0
      %p318 = por %p316, %p317
      %s320 = sadd.s32 %s319, 1
      %p323 = scmp.eq.s32.totalorder %s33, 1
      %p324 = scmp.ne.s32.totalorder %s319, %s321
      %p325 = scmp.eq.s32.totalorder %s33, 0
      %p326 = por %p324, %p325
      %p327 = scmp.ne.s32.totalorder %s319, %s321
      %p328 = scmp.eq.s32.totalorder %s38, 1
      %p329 = por %p327, %p328
      %p330 = scmp.ne.s32.totalorder %s321, %s322
      %p331 = scmp.eq.s32.totalorder %s38, 0
      %p332 = por %p330, %p331
      %p333 = scmp.ne.s32.totalorder %s321, %s322
      %p334 = scmp.eq.s32.totalorder %s39, 1
      %p335 = por %p333, %p334
      %p337 = scmp.ne.s32.totalorder %s322, %s336
      %p338 = scmp.eq.s32.totalorder %s39, 0
      %p339 = por %p337, %p338
      %s340 = ssub.s32 %s33, %s40
      %p341 = scmp.eq.s32.totalorder %s340, 0
      %s343 = sadd.s32 %s342, 1
      %s344 = scalar_select %p341, %s342, %s343
      %p347 = pneg %p341
      %p348 = scmp.eq.s32.totalorder %s33, 1
      %p349 = por %p347, %p348
      %p350 = scmp.ne.s32.totalorder %s342, %s345
      %p351 = scmp.eq.s32.totalorder %s33, 0
      %p352 = por %p350, %p351
      %p353 = scmp.ne.s32.totalorder %s342, %s345
      %p354 = scmp.eq.s32.totalorder %s38, 1
      %p355 = por %p353, %p354
      %p356 = scmp.ne.s32.totalorder %s345, %s346
      %p357 = scmp.eq.s32.totalorder %s38, 0
      %p358 = por %p356, %p357
      %p359 = scmp.ne.s32.totalorder %s345, %s346
      %p360 = scmp.eq.s32.totalorder %s39, 1
      %p361 = por %p359, %p360
      %p363 = scmp.ne.s32.totalorder %s346, %s362
      %p364 = scmp.eq.s32.totalorder %s39, 0
      %p365 = por %p363, %p364
      %p366 = scmp.le.s32.totalorder 1, %s33
      %p367 = scmp.lt.s32.totalorder %s33, 3
      %p368 = pnand %p366, %p367
      %p369 = pneg %p368
      // Predicated region
      $region9: #{tpu_custom_call.1} parent=5 // pred_check
        _
      $region10: #{tpu_custom_call.1} parent=5 // pred_check_branch
        %371 = sbr.rel (%p368) target = $region12
      $region11: #{tpu_custom_call.1} parent=5 // pred_region
        %s372 = ssub.s32 %s33, 1
        // Predicated region
        $region13: #{tpu_custom_call.1} parent=11 // pred_check
          %p373 = pneg %p80
        $region14: #{tpu_custom_call.1} parent=11 // pred_check_branch
          %375 = sbr.rel (%p373) target = $region16
        $region15: #{tpu_custom_call.1} parent=11 // pred_region
          %s377 = ssub.s32 16, 16
          %378 = vsyncadd [#allocation7], %s377
          %s380 = sshll.u32 [#allocation6], 4
          %s381 = int_to_ptr.vmem [resolvable:$true] %s380
          %383 = dma.hbm_to_vmem [thread:$0]  %s1, 16, %s381, [#allocation7]
        $region16: #{tpu_custom_call.1} parent=11 // pred_fallthru
          _
        // Predicated region
        $region17: #{tpu_custom_call.1} parent=11 // pred_check
          %p384 = pneg %p101
        $region18: #{tpu_custom_call.1} parent=11 // pred_check_branch
          %386 = sbr.rel (%p384) target = $region20
        $region19: #{tpu_custom_call.1} parent=11 // pred_region
          %s388 = ssub.s32 16, 16
          %389 = vsyncadd [#allocation7], %s388
          %s391 = sshll.u32 [#allocation8], 4
          %s392 = int_to_ptr.vmem [resolvable:$true] %s391
          %394 = dma.hbm_to_vmem [thread:$0]  %s2, 16, %s392, [#allocation7]
        $region20: #{tpu_custom_call.1} parent=11 // pred_fallthru
          _
        // Predicated region
        $region21: #{tpu_custom_call.1} parent=11 // pred_check
          %p395 = pneg %p122
        $region22: #{tpu_custom_call.1} parent=11 // pred_check_branch
          %397 = sbr.rel (%p395) target = $region24
        $region23: #{tpu_custom_call.1} parent=11 // pred_region
          %s399 = ssub.s32 2048, 2048
          %400 = vsyncadd [#allocation10], %s399
          %s401 = sshll.u32 [#allocation9], 4
          %s402 = int_to_ptr.vmem [resolvable:$true] %s401
          %407 = dma.hbm_to_vmem [thread:$0]  %s3, 2048, %s402, [#allocation10], 128, 128, 8
        $region24: #{tpu_custom_call.1} parent=11 // pred_fallthru
          _
        // Predicated region
        $region25: #{tpu_custom_call.1} parent=11 // pred_check
          %p408 = pneg %p143
        $region26: #{tpu_custom_call.1} parent=11 // pred_check_branch
          %410 = sbr.rel (%p408) target = $region28
        $region27: #{tpu_custom_call.1} parent=11 // pred_region
          %s412 = ssub.s32 2048, 2048
          %413 = vsyncadd [#allocation10], %s412
          %s414 = sshll.u32 [#allocation11], 4
          %s415 = int_to_ptr.vmem [resolvable:$true] %s414
          %420 = dma.hbm_to_vmem [thread:$0]  %s4, 2048, %s415, [#allocation10], 128, 128, 8
        $region28: #{tpu_custom_call.1} parent=11 // pred_fallthru
          _
        // Predicated region
        $region29: #{tpu_custom_call.1} parent=11 // pred_check
          %p421 = pneg %p164
        $region30: #{tpu_custom_call.1} parent=11 // pred_check_branch
          %423 = sbr.rel (%p421) target = $region32
        $region31: #{tpu_custom_call.1} parent=11 // pred_region
          %s425 = ssub.s32 2048, 2048
          %426 = vsyncadd [#allocation13], %s425
          %s427 = sshll.u32 [#allocation12], 4
          %s428 = int_to_ptr.vmem [resolvable:$true] %s427
          %433 = dma.hbm_to_vmem [thread:$0]  %s5, 2048, %s428, [#allocation13], 128, 128, 8
        $region32: #{tpu_custom_call.1} parent=11 // pred_fallthru
          _
        // Predicated region
        $region33: #{tpu_custom_call.1} parent=11 // pred_check
          %p434 = pneg %p185
        $region34: #{tpu_custom_call.1} parent=11 // pred_check_branch
          %436 = sbr.rel (%p434) target = $region36
        $region35: #{tpu_custom_call.1} parent=11 // pred_region
          %s438 = ssub.s32 2048, 2048
          %439 = vsyncadd [#allocation13], %s438
          %s440 = sshll.u32 [#allocation14], 4
          %s441 = int_to_ptr.vmem [resolvable:$true] %s440
          %446 = dma.hbm_to_vmem [thread:$0]  %s6, 2048, %s441, [#allocation13], 64, 64, 4
        $region36: #{tpu_custom_call.1} parent=11 // pred_fallthru
          _
        // Predicated region
        $region37: #{tpu_custom_call.1} parent=11 // pred_check
          %p447 = pneg %p206
        $region38: #{tpu_custom_call.1} parent=11 // pred_check_branch
          %449 = sbr.rel (%p447) target = $region40
        $region39: #{tpu_custom_call.1} parent=11 // pred_region
          %s451 = ssub.s32 16, 16
          %452 = vsyncadd [#allocation16], %s451
          %s454 = sshll.u32 [#allocation15], 4
          %s455 = int_to_ptr.vmem [resolvable:$true] %s454
          %457 = dma.hbm_to_vmem [thread:$0]  %s7, 16, %s455, [#allocation16]
        $region40: #{tpu_custom_call.1} parent=11 // pred_fallthru
          _
        // Predicated region
        $region41: #{tpu_custom_call.1} parent=11 // pred_check
          %p458 = pneg %p227
        $region42: #{tpu_custom_call.1} parent=11 // pred_check_branch
          %460 = sbr.rel (%p458) target = $region44
        $region43: #{tpu_custom_call.1} parent=11 // pred_region
          %s462 = ssub.s32 16, 16
          %463 = vsyncadd [#allocation16], %s462
          %s465 = sshll.u32 [#allocation17], 4
          %s466 = int_to_ptr.vmem [resolvable:$true] %s465
          %468 = dma.hbm_to_vmem [thread:$0]  %s8, 16, %s466, [#allocation16]
        $region44: #{tpu_custom_call.1} parent=11 // pred_fallthru
          _
        // Predicated region
        $region45: #{tpu_custom_call.1} parent=11 // pred_check
          %p469 = pneg %p248
        $region46: #{tpu_custom_call.1} parent=11 // pred_check_branch
          %471 = sbr.rel (%p469) target = $region48
        $region47: #{tpu_custom_call.1} parent=11 // pred_region
          %s473 = ssub.s32 16, 16
          %474 = vsyncadd [#allocation19], %s473
          %s476 = sshll.u32 [#allocation18], 4
          %s477 = int_to_ptr.vmem [resolvable:$true] %s476
          %479 = dma.hbm_to_vmem [thread:$0]  %s9, 16, %s477, [#allocation19]
        $region48: #{tpu_custom_call.1} parent=11 // pred_fallthru
          _
        // Predicated region
        $region49: #{tpu_custom_call.1} parent=11 // pred_check
          %p480 = pneg %p269
        $region50: #{tpu_custom_call.1} parent=11 // pred_check_branch
          %482 = sbr.rel (%p480) target = $region52
        $region51: #{tpu_custom_call.1} parent=11 // pred_region
          %s484 = ssub.s32 36864, 36864
          %485 = vsyncadd [#allocation19], %s484
          %s486 = sshll.u32 [#allocation20], 4
          %s487 = int_to_ptr.vmem [resolvable:$true] %s486
          %492 = dma.hbm_to_vmem [thread:$0]  %s10, 36864, %s487, [#allocation19], 256, 256, 16
        $region52: #{tpu_custom_call.1} parent=11 // pred_fallthru
          _
        // Predicated region
        $region53: #{tpu_custom_call.1} parent=11 // pred_check
          %p493 = pneg %p290
        $region54: #{tpu_custom_call.1} parent=11 // pred_check_branch
          %495 = sbr.rel (%p493) target = $region56
        $region55: #{tpu_custom_call.1} parent=11 // pred_region
          %s497 = ssub.s32 64, 64
          %498 = vsyncadd [#allocation22], %s497
          %s500 = sshll.u32 [#allocation21], 4
          %s501 = int_to_ptr.vmem [resolvable:$true] %s500
          %503 = dma.hbm_to_vmem [thread:$0]  %s11, 64, %s501, [#allocation22]
        $region56: #{tpu_custom_call.1} parent=11 // pred_fallthru
          _
        // Predicated region
        $region57: #{tpu_custom_call.1} parent=11 // pred_check
          %p504 = pneg %p311
        $region58: #{tpu_custom_call.1} parent=11 // pred_check_branch
          %506 = sbr.rel (%p504) target = $region60
        $region59: #{tpu_custom_call.1} parent=11 // pred_region
          %s508 = ssub.s32 4096, 4096
          %509 = vsyncadd [#allocation22], %s508
          %s510 = sshll.u32 [#allocation23], 4
          %s511 = int_to_ptr.vmem [resolvable:$true] %s510
          %516 = dma.hbm_to_vmem [thread:$0]  %s12, 4096, %s511, [#allocation22], 64, 64, 4
        $region60: #{tpu_custom_call.1} parent=11 // pred_fallthru
          _
        // Predicated region
        $region61: #{tpu_custom_call.1} parent=11 // pred_check
          %p517 = pneg %p332
        $region62: #{tpu_custom_call.1} parent=11 // pred_check_branch
          %519 = sbr.rel (%p517) target = $region64
        $region63: #{tpu_custom_call.1} parent=11 // pred_region
          %s521 = ssub.s32 16, 16
          %522 = vsyncadd [#allocation25], %s521
          %s524 = sshll.u32 [#allocation24], 4
          %s525 = int_to_ptr.vmem [resolvable:$true] %s524
          %527 = dma.hbm_to_vmem [thread:$0]  %s13, 16, %s525, [#allocation25]
        $region64: #{tpu_custom_call.1} parent=11 // pred_fallthru
          _
      $region12: #{tpu_custom_call.1} parent=5 // pred_fallthru
        _
      %p528 = scmp.lt.s32.totalorder %s33, 2
      // Predicated region
      $region65: #{tpu_custom_call.1} parent=5 // pred_check
        %p529 = pneg %p528
      $region66: #{tpu_custom_call.1} parent=5 // pred_check_branch
        %531 = sbr.rel (%p529) target = $region68
      $region67: #{tpu_custom_call.1} parent=5 // pred_region
        // Predicated region
        $region69: #{tpu_custom_call.1} parent=67 // pred_check
          %p532 = pneg %p53
        $region70: #{tpu_custom_call.1} parent=67 // pred_check_branch
          %534 = sbr.rel (%p532) target = $region72
        $region71: #{tpu_custom_call.1} parent=67 // pred_region
          %s535 = sand.u32 %s43, 1
          %s536 = scalar_lea.sflag [#allocation4], %s535
          %s537 = sand.u32 %s43, 1
          %s538 = smul.addr %s537, 16
          %s539 = scalar_lea.vmem [#allocation3], %s538
          %s541 = ssub.s32 256, 256
          %542 = vsyncadd %s536, %s541
          %s543 = smul.addr %s33, 2
          %s544 = smul.addr %s543, 128
          %s545 = scalar_lea.hbm %s0, %s544
          %s546 = sshll.u32 %s539, 4
          %s547 = int_to_ptr.vmem [resolvable:$true] %s546
          %552 = dma.hbm_to_vmem [thread:$0]  %s545, 256, %s547, %s536, 128, 128, 8
        $region72: #{tpu_custom_call.1} parent=67 // pred_fallthru
          _
      $region68: #{tpu_custom_call.1} parent=5 // pred_fallthru
        _
      %p553 = scmp.le.s32.totalorder 1, %s33
      %p554 = scmp.lt.s32.totalorder %s33, 3
      %p555 = pnand %p553, %p554
      %p556 = pneg %p555
      // Predicated region
      $region73: #{tpu_custom_call.1} parent=5 // pred_check
        _
      $region74: #{tpu_custom_call.1} parent=5 // pred_check_branch
        %558 = sbr.rel (%p555) target = $region76
      $region75: #{tpu_custom_call.1} parent=5 // pred_region
        %s559 = ssub.s32 %s33, 1
        %s560 = sand.u32 %s46, 1
        %s561 = scalar_lea.sflag [#allocation4], %s560
        %s562 = sand.u32 %s46, 1
        %s563 = smul.addr %s562, 16
        %s564 = scalar_lea.vmem [#allocation3], %s563
        // Predicated region
        $region77: #{tpu_custom_call.1} parent=75 // pred_check
          %p565 = pneg %p59
        $region78: #{tpu_custom_call.1} parent=75 // pred_check_branch
          %567 = sbr.rel (%p565) target = $region80
        $region79: #{tpu_custom_call.1} parent=75 // pred_region
          %568 = dma.done %s561, 256
        $region80: #{tpu_custom_call.1} parent=75 // pred_fallthru
          _
        // Predicated region
        $region81: #{tpu_custom_call.1} parent=75 // pred_check
          %p569 = pneg %p80
        $region82: #{tpu_custom_call.1} parent=75 // pred_check_branch
          %571 = sbr.rel (%p569) target = $region84
        $region83: #{tpu_custom_call.1} parent=75 // pred_region
          %572 = dma.done [#allocation7], 16
        $region84: #{tpu_custom_call.1} parent=75 // pred_fallthru
          _
        // Predicated region
        $region85: #{tpu_custom_call.1} parent=75 // pred_check
          %p573 = pneg %p101
        $region86: #{tpu_custom_call.1} parent=75 // pred_check_branch
          %575 = sbr.rel (%p573) target = $region88
        $region87: #{tpu_custom_call.1} parent=75 // pred_region
          %576 = dma.done [#allocation7], 16
        $region88: #{tpu_custom_call.1} parent=75 // pred_fallthru
          _
        // Predicated region
        $region89: #{tpu_custom_call.1} parent=75 // pred_check
          %p577 = pneg %p122
        $region90: #{tpu_custom_call.1} parent=75 // pred_check_branch
          %579 = sbr.rel (%p577) target = $region92
        $region91: #{tpu_custom_call.1} parent=75 // pred_region
          %580 = dma.done [#allocation10], 2048
        $region92: #{tpu_custom_call.1} parent=75 // pred_fallthru
          _
        // Predicated region
        $region93: #{tpu_custom_call.1} parent=75 // pred_check
          %p581 = pneg %p143
        $region94: #{tpu_custom_call.1} parent=75 // pred_check_branch
          %583 = sbr.rel (%p581) target = $region96
        $region95: #{tpu_custom_call.1} parent=75 // pred_region
          %584 = dma.done [#allocation10], 2048
        $region96: #{tpu_custom_call.1} parent=75 // pred_fallthru
          _
        // Predicated region
        $region97: #{tpu_custom_call.1} parent=75 // pred_check
          %p585 = pneg %p164
        $region98: #{tpu_custom_call.1} parent=75 // pred_check_branch
          %587 = sbr.rel (%p585) target = $region100
        $region99: #{tpu_custom_call.1} parent=75 // pred_region
          %588 = dma.done [#allocation13], 2048
        $region100: #{tpu_custom_call.1} parent=75 // pred_fallthru
          _
        // Predicated region
        $region101: #{tpu_custom_call.1} parent=75 // pred_check
          %p589 = pneg %p185
        $region102: #{tpu_custom_call.1} parent=75 // pred_check_branch
          %591 = sbr.rel (%p589) target = $region104
        $region103: #{tpu_custom_call.1} parent=75 // pred_region
          %592 = dma.done [#allocation13], 2048
        $region104: #{tpu_custom_call.1} parent=75 // pred_fallthru
          _
        // Predicated region
        $region105: #{tpu_custom_call.1} parent=75 // pred_check
          %p593 = pneg %p206
        $region106: #{tpu_custom_call.1} parent=75 // pred_check_branch
          %595 = sbr.rel (%p593) target = $region108
        $region107: #{tpu_custom_call.1} parent=75 // pred_region
          %596 = dma.done [#allocation16], 16
        $region108: #{tpu_custom_call.1} parent=75 // pred_fallthru
          _
        // Predicated region
        $region109: #{tpu_custom_call.1} parent=75 // pred_check
          %p597 = pneg %p227
        $region110: #{tpu_custom_call.1} parent=75 // pred_check_branch
          %599 = sbr.rel (%p597) target = $region112
        $region111: #{tpu_custom_call.1} parent=75 // pred_region
          %600 = dma.done [#allocation16], 16
        $region112: #{tpu_custom_call.1} parent=75 // pred_fallthru
          _
        // Predicated region
        $region113: #{tpu_custom_call.1} parent=75 // pred_check
          %p601 = pneg %p248
        $region114: #{tpu_custom_call.1} parent=75 // pred_check_branch
          %603 = sbr.rel (%p601) target = $region116
        $region115: #{tpu_custom_call.1} parent=75 // pred_region
          %604 = dma.done [#allocation19], 16
        $region116: #{tpu_custom_call.1} parent=75 // pred_fallthru
          _
        // Predicated region
        $region117: #{tpu_custom_call.1} parent=75 // pred_check
          %p605 = pneg %p269
        $region118: #{tpu_custom_call.1} parent=75 // pred_check_branch
          %607 = sbr.rel (%p605) target = $region120
        $region119: #{tpu_custom_call.1} parent=75 // pred_region
          %608 = dma.done [#allocation19], 36864
        $region120: #{tpu_custom_call.1} parent=75 // pred_fallthru
          _
        // Predicated region
        $region121: #{tpu_custom_call.1} parent=75 // pred_check
          %p609 = pneg %p290
        $region122: #{tpu_custom_call.1} parent=75 // pred_check_branch
          %611 = sbr.rel (%p609) target = $region124
        $region123: #{tpu_custom_call.1} parent=75 // pred_region
          %612 = dma.done [#allocation22], 64
        $region124: #{tpu_custom_call.1} parent=75 // pred_fallthru
          _
        // Predicated region
        $region125: #{tpu_custom_call.1} parent=75 // pred_check
          %p613 = pneg %p311
        $region126: #{tpu_custom_call.1} parent=75 // pred_check_branch
          %615 = sbr.rel (%p613) target = $region128
        $region127: #{tpu_custom_call.1} parent=75 // pred_region
          %616 = dma.done [#allocation22], 4096
        $region128: #{tpu_custom_call.1} parent=75 // pred_fallthru
          _
        // Predicated region
        $region129: #{tpu_custom_call.1} parent=75 // pred_check
          %p617 = pneg %p332
        $region130: #{tpu_custom_call.1} parent=75 // pred_check_branch
          %619 = sbr.rel (%p617) target = $region132
        $region131: #{tpu_custom_call.1} parent=75 // pred_region
          %620 = dma.done [#allocation25], 16
        $region132: #{tpu_custom_call.1} parent=75 // pred_fallthru
          _
        %s621 = sand.u32 %s46, 1
        %s622 = scalar_lea.sflag [#allocation4], %s621
        %s623 = sand.u32 %s46, 1
        %s624 = smul.addr %s623, 16
        %s625 = scalar_lea.vmem [#allocation3], %s624
        %p626 = pneg %p59
        %p627 = pneg %p56
        %p628 = pneg %p80
        %p629 = pneg %p77
        %p630 = pneg %p101
        %p631 = pneg %p98
        %p632 = pneg %p122
        %p633 = pneg %p119
        %p634 = pneg %p143
        %p635 = pneg %p140
        %p636 = pneg %p164
        %p637 = pneg %p161
        %p638 = pneg %p185
        %p639 = pneg %p182
        %p640 = pneg %p206
        %p641 = pneg %p203
        %p642 = pneg %p227
        %p643 = pneg %p224
        %p644 = pneg %p248
        %p645 = pneg %p245
        %p646 = pneg %p269
        %p647 = pneg %p266
        %p648 = pneg %p290
        %p649 = pneg %p287
        %p650 = pneg %p311
        %p651 = pneg %p308
        %p652 = pneg %p332
        %p653 = pneg %p329
        %p654 = pneg %p358
        %p655 = pneg %p355
        %s656 = sand.u32 %s345, 1
        %s657 = scalar_lea.sflag [#allocation5], %s656
        %s658 = sand.u32 %s345, 1
        %s659 = smul.addr %s658, 16
        %s660 = scalar_lea.vmem [#allocation26], %s659
        %v662 = vld [vmem:[%s564] sm:$0xff]
        %v663 = vld [vmem:[%s564 + $0x8] sm:$0xff]
        %664 = vadd.xlane.f32.xlu0 %v662
        %v665 = vpop.xlane.xlu0 %664
        %666 = vadd.xlane.f32.xlu0 %v663
        %v667 = vpop.xlane.xlu0 %666
        %v668 = vrcp.pop 128.0
        %v669 = vmul.f32 %v665, %v668
        %v670 = vmul.f32 %v667, %v668
        %v671 = vsub.f32 %v662, %v669
        %v672 = vsub.f32 %v663, %v670
        %v673 = vmul.f32 %v671, %v671
        %v674 = vmul.f32 %v672, %v672
        %675 = vadd.xlane.f32.xlu0 %v673
        %v676 = vpop.xlane.xlu0 %675
        %677 = vadd.xlane.f32.xlu0 %v674
        %v678 = vpop.xlane.xlu0 %677
        %v679 = vmul.f32 %v676, %v668
        %v680 = vmul.f32 %v678, %v668
        %v681 = vadd.f32 %v679, 1e-05
        %v682 = vadd.f32 %v680, 1e-05
        %v683 = vrsqrt.pop %v681
        %v684 = vrsqrt.pop %v682
        %v685 = vmul.f32 %v671, %v683
        %v686 = vmul.f32 %v672, %v684
        %v687 = vld [vmem:[#allocation6] sm:$0x1]
        %v689 = vlaneseq
        %v690 = vshrl.u32 %v689, 7
        %v691 = vsub.s32 0, %v690
        %v692 = vrot.slane %v687, %v691
        %v694 = vmul.f32 %v685, %v692
        %v695 = vmul.f32 %v686, %v692
        %v696 = vld [vmem:[#allocation8] sm:$0x1]
        %v698 = vlaneseq
        %v699 = vshrl.u32 %v698, 7
        %v700 = vsub.s32 0, %v699
        %v701 = vrot.slane %v696, %v700
        %v703 = vadd.f32 %v694, %v701
        %v704 = vadd.f32 %v695, %v701
        %v705 = vpack.c.bf16 %v704, %v703
        %v706 = vld [vmem:[#allocation9] sm:$0xff]
        %v707 = vld [vmem:[#allocation9 + $0x8] sm:$0xff]
        %v708 = vld [vmem:[#allocation9 + $0x10] sm:$0xff]
        %v709 = vld [vmem:[#allocation9 + $0x18] sm:$0xff]
        %v710 = vld [vmem:[#allocation9 + $0x20] sm:$0xff]
        %v711 = vld [vmem:[#allocation9 + $0x28] sm:$0xff]
        %v712 = vld [vmem:[#allocation9 + $0x30] sm:$0xff]
        %v713 = vld [vmem:[#allocation9 + $0x38] sm:$0xff]
        %v714 = vld [vmem:[#allocation9 + $0x40] sm:$0xff]
        %v715 = vld [vmem:[#allocation9 + $0x48] sm:$0xff]
        %v716 = vld [vmem:[#allocation9 + $0x50] sm:$0xff]
        %v717 = vld [vmem:[#allocation9 + $0x58] sm:$0xff]
        %v718 = vld [vmem:[#allocation9 + $0x60] sm:$0xff]
        %v719 = vld [vmem:[#allocation9 + $0x68] sm:$0xff]
        %v720 = vld [vmem:[#allocation9 + $0x70] sm:$0xff]
        %v721 = vld [vmem:[#allocation9 + $0x78] sm:$0xff]
        %v738 = vunpack.c.l.b16 %v706
        %v739 = vunpack.c.h.b16 %v706
        %v740 = vunpack.c.l.b16 %v707
        %v741 = vunpack.c.h.b16 %v707
        %v742 = vunpack.c.l.b16 %v708
        %v743 = vunpack.c.h.b16 %v708
        %v744 = vunpack.c.l.b16 %v709
        %v745 = vunpack.c.h.b16 %v709
        %v746 = vunpack.c.l.b16 %v710
        %v747 = vunpack.c.h.b16 %v710
        %v748 = vunpack.c.l.b16 %v711
        %v749 = vunpack.c.h.b16 %v711
        %v750 = vunpack.c.l.b16 %v712
        %v751 = vunpack.c.h.b16 %v712
        %v752 = vunpack.c.l.b16 %v713
        %v753 = vunpack.c.h.b16 %v713
        %v754 = vunpack.c.l.b16 %v714
        %v755 = vunpack.c.h.b16 %v714
        %v756 = vunpack.c.l.b16 %v715
        %v757 = vunpack.c.h.b16 %v715
        %v758 = vunpack.c.l.b16 %v716
        %v759 = vunpack.c.h.b16 %v716
        %v760 = vunpack.c.l.b16 %v717
        %v761 = vunpack.c.h.b16 %v717
        %v762 = vunpack.c.l.b16 %v718
        %v763 = vunpack.c.h.b16 %v718
        %v764 = vunpack.c.l.b16 %v719
        %v765 = vunpack.c.h.b16 %v719
        %v766 = vunpack.c.l.b16 %v720
        %v767 = vunpack.c.h.b16 %v720
        %v768 = vunpack.c.l.b16 %v721
        %v769 = vunpack.c.h.b16 %v721
        %v770 = vpack.c.b16 %v740, %v738
        %v771 = vpack.c.b16 %v741, %v739
        %v772 = vpack.c.b16 %v744, %v742
        %v773 = vpack.c.b16 %v745, %v743
        %v774 = vpack.c.b16 %v748, %v746
        %v775 = vpack.c.b16 %v749, %v747
        %v776 = vpack.c.b16 %v752, %v750
        %v777 = vpack.c.b16 %v753, %v751
        %v778 = vpack.c.b16 %v756, %v754
        %v779 = vpack.c.b16 %v757, %v755
        %v780 = vpack.c.b16 %v760, %v758
        %v781 = vpack.c.b16 %v761, %v759
        %v782 = vpack.c.b16 %v764, %v762
        %v783 = vpack.c.b16 %v765, %v763
        %v784 = vpack.c.b16 %v768, %v766
        %v785 = vpack.c.b16 %v769, %v767
        %802 = vmatprep.subr.bf16.mxu0 %v785
        %803 = vmatpush1.bf16.msra.mxu0 %v784
        %804 = vmatprep.subr.bf16.mxu0 %v783
        %805 = vmatpush1.bf16.msra.mxu0 %v782
        %806 = vmatprep.subr.bf16.mxu0 %v781
        %807 = vmatpush1.bf16.msra.mxu0 %v780
        %808 = vmatprep.subr.bf16.mxu0 %v779
        %809 = vmatpush1.bf16.msra.mxu0 %v778
        %810 = vmatprep.subr.bf16.mxu0 %v777
        %811 = vmatpush1.bf16.msra.mxu0 %v776
        %812 = vmatprep.subr.bf16.mxu0 %v775
        %813 = vmatpush1.bf16.msra.mxu0 %v774
        %814 = vmatprep.subr.bf16.mxu0 %v773
        %815 = vmatpush1.bf16.msra.mxu0 %v772
        %816 = vmatprep.subr.bf16.mxu0 %v771
        %817 = vmatpush1.bf16.msra.mxu0 %v770
        %818 = vmatprep.subr.bf16.mxu0 0
        %819 = vmatpush2.bf16.msra.mxu0 0
        %820 = vmatprep.subr.bf16.mxu0 0
        %821 = vmatpush2.bf16.msra.mxu0 0
        %822 = vmatprep.subr.bf16.mxu0 0
        %823 = vmatpush2.bf16.msra.mxu0 0
        %824 = vmatprep.subr.bf16.mxu0 0
        %825 = vmatpush2.bf16.msra.mxu0 0
        %826 = vmatprep.subr.bf16.mxu0 0
        %827 = vmatpush2.bf16.msra.mxu0 0
        %828 = vmatprep.subr.bf16.mxu0 0
        %829 = vmatpush2.bf16.msra.mxu0 0
        %830 = vmatprep.subr.bf16.mxu0 0
        %831 = vmatpush2.bf16.msra.mxu0 0
        %832 = vmatprep.subr.bf16.mxu0 0
        %833 = vmatpush2.bf16.msra.mxu0 0
        %834 = vmatprep.mubr.bf16.mxu0 0
        %835 = vmatmul.mubr.bf16.gmra.mxu0 %v705
        %v836 = vpop.f32.mrf.mxu0
        %v837 = vadd.f32 0.0, %v836
        %v838 = vpop.f32.mrf.mxu0
        %v839 = vadd.f32 0.0, %v838
        %v840 = vpop.f32.mrf.mxu0
        %v841 = vadd.f32 0.0, %v840
        %v842 = vpop.f32.mrf.mxu0
        %v843 = vadd.f32 0.0, %v842
        %844 = vdwg.mxu0
        %v845 = vld [vmem:[#allocation11] sm:$0xff]
        %v846 = vld [vmem:[#allocation11 + $0x8] sm:$0xff]
        %v847 = vld [vmem:[#allocation11 + $0x10] sm:$0xff]
        %v848 = vld [vmem:[#allocation11 + $0x18] sm:$0xff]
        %v849 = vld [vmem:[#allocation11 + $0x20] sm:$0xff]
        %v850 = vld [vmem:[#allocation11 + $0x28] sm:$0xff]
        %v851 = vld [vmem:[#allocation11 + $0x30] sm:$0xff]
        %v852 = vld [vmem:[#allocation11 + $0x38] sm:$0xff]
        %v853 = vld [vmem:[#allocation11 + $0x40] sm:$0xff]
        %v854 = vld [vmem:[#allocation11 + $0x48] sm:$0xff]
        %v855 = vld [vmem:[#allocation11 + $0x50] sm:$0xff]
        %v856 = vld [vmem:[#allocation11 + $0x58] sm:$0xff]
        %v857 = vld [vmem:[#allocation11 + $0x60] sm:$0xff]
        %v858 = vld [vmem:[#allocation11 + $0x68] sm:$0xff]
        %v859 = vld [vmem:[#allocation11 + $0x70] sm:$0xff]
        %v860 = vld [vmem:[#allocation11 + $0x78] sm:$0xff]
        %v877 = vunpack.c.l.b16 %v845
        %v878 = vunpack.c.h.b16 %v845
        %v879 = vunpack.c.l.b16 %v846
        %v880 = vunpack.c.h.b16 %v846
        %v881 = vunpack.c.l.b16 %v847
        %v882 = vunpack.c.h.b16 %v847
        %v883 = vunpack.c.l.b16 %v848
        %v884 = vunpack.c.h.b16 %v848
        %v885 = vunpack.c.l.b16 %v849
        %v886 = vunpack.c.h.b16 %v849
        %v887 = vunpack.c.l.b16 %v850
        %v888 = vunpack.c.h.b16 %v850
        %v889 = vunpack.c.l.b16 %v851
        %v890 = vunpack.c.h.b16 %v851
        %v891 = vunpack.c.l.b16 %v852
        %v892 = vunpack.c.h.b16 %v852
        %v893 = vunpack.c.l.b16 %v853
        %v894 = vunpack.c.h.b16 %v853
        %v895 = vunpack.c.l.b16 %v854
        %v896 = vunpack.c.h.b16 %v854
        %v897 = vunpack.c.l.b16 %v855
        %v898 = vunpack.c.h.b16 %v855
        %v899 = vunpack.c.l.b16 %v856
        %v900 = vunpack.c.h.b16 %v856
        %v901 = vunpack.c.l.b16 %v857
        %v902 = vunpack.c.h.b16 %v857
        %v903 = vunpack.c.l.b16 %v858
        %v904 = vunpack.c.h.b16 %v858
        %v905 = vunpack.c.l.b16 %v859
        %v906 = vunpack.c.h.b16 %v859
        %v907 = vunpack.c.l.b16 %v860
        %v908 = vunpack.c.h.b16 %v860
        %v909 = vpack.c.b16 %v879, %v877
        %v910 = vpack.c.b16 %v880, %v878
        %v911 = vpack.c.b16 %v883, %v881
        %v912 = vpack.c.b16 %v884, %v882
        %v913 = vpack.c.b16 %v887, %v885
        %v914 = vpack.c.b16 %v888, %v886
        %v915 = vpack.c.b16 %v891, %v889
        %v916 = vpack.c.b16 %v892, %v890
        %v917 = vpack.c.b16 %v895, %v893
        %v918 = vpack.c.b16 %v896, %v894
        %v919 = vpack.c.b16 %v899, %v897
        %v920 = vpack.c.b16 %v900, %v898
        %v921 = vpack.c.b16 %v903, %v901
        %v922 = vpack.c.b16 %v904, %v902
        %v923 = vpack.c.b16 %v907, %v905
        %v924 = vpack.c.b16 %v908, %v906
        %941 = vmatprep.subr.bf16.mxu0 %v924
        %942 = vmatpush1.bf16.msra.mxu0 %v923
        %943 = vmatprep.subr.bf16.mxu0 %v922
        %944 = vmatpush1.bf16.msra.mxu0 %v921
        %945 = vmatprep.subr.bf16.mxu0 %v920
        %946 = vmatpush1.bf16.msra.mxu0 %v919
        %947 = vmatprep.subr.bf16.mxu0 %v918
        %948 = vmatpush1.bf16.msra.mxu0 %v917
        %949 = vmatprep.subr.bf16.mxu0 %v916
        %950 = vmatpush1.bf16.msra.mxu0 %v915
        %951 = vmatprep.subr.bf16.mxu0 %v914
        %952 = vmatpush1.bf16.msra.mxu0 %v913
        %953 = vmatprep.subr.bf16.mxu0 %v912
        %954 = vmatpush1.bf16.msra.mxu0 %v911
        %955 = vmatprep.subr.bf16.mxu0 %v910
        %956 = vmatpush1.bf16.msra.mxu0 %v909
        %957 = vmatprep.subr.bf16.mxu0 0
        %958 = vmatpush2.bf16.msra.mxu0 0
        %959 = vmatprep.subr.bf16.mxu0 0
        %960 = vmatpush2.bf16.msra.mxu0 0
        %961 = vmatprep.subr.bf16.mxu0 0
        %962 = vmatpush2.bf16.msra.mxu0 0
        %963 = vmatprep.subr.bf16.mxu0 0
        %964 = vmatpush2.bf16.msra.mxu0 0
        %965 = vmatprep.subr.bf16.mxu0 0
        %966 = vmatpush2.bf16.msra.mxu0 0
        %967 = vmatprep.subr.bf16.mxu0 0
        %968 = vmatpush2.bf16.msra.mxu0 0
        %969 = vmatprep.subr.bf16.mxu0 0
        %970 = vmatpush2.bf16.msra.mxu0 0
        %971 = vmatprep.subr.bf16.mxu0 0
        %972 = vmatpush2.bf16.msra.mxu0 0
        %973 = vmatprep.mubr.bf16.mxu0 0
        %974 = vmatmul.mubr.bf16.gmra.mxu0 %v705
        %v975 = vpop.f32.mrf.mxu0
        %v976 = vadd.f32 0.0, %v975
        %v977 = vpop.f32.mrf.mxu0
        %v978 = vadd.f32 0.0, %v977
        %v979 = vpop.f32.mrf.mxu0
        %v980 = vadd.f32 0.0, %v979
        %v981 = vpop.f32.mrf.mxu0
        %v982 = vadd.f32 0.0, %v981
        %983 = vdwg.mxu0
        %v984 = vld [vmem:[#allocation12] sm:$0xff]
        %v985 = vld [vmem:[#allocation12 + $0x8] sm:$0xff]
        %v986 = vld [vmem:[#allocation12 + $0x10] sm:$0xff]
        %v987 = vld [vmem:[#allocation12 + $0x18] sm:$0xff]
        %v988 = vld [vmem:[#allocation12 + $0x20] sm:$0xff]
        %v989 = vld [vmem:[#allocation12 + $0x28] sm:$0xff]
        %v990 = vld [vmem:[#allocation12 + $0x30] sm:$0xff]
        %v991 = vld [vmem:[#allocation12 + $0x38] sm:$0xff]
        %v992 = vld [vmem:[#allocation12 + $0x40] sm:$0xff]
        %v993 = vld [vmem:[#allocation12 + $0x48] sm:$0xff]
        %v994 = vld [vmem:[#allocation12 + $0x50] sm:$0xff]
        %v995 = vld [vmem:[#allocation12 + $0x58] sm:$0xff]
        %v996 = vld [vmem:[#allocation12 + $0x60] sm:$0xff]
        %v997 = vld [vmem:[#allocation12 + $0x68] sm:$0xff]
        %v998 = vld [vmem:[#allocation12 + $0x70] sm:$0xff]
        %v999 = vld [vmem:[#allocation12 + $0x78] sm:$0xff]
        %v1016 = vunpack.c.l.b16 %v984
        %v1017 = vunpack.c.h.b16 %v984
        %v1018 = vunpack.c.l.b16 %v985
        %v1019 = vunpack.c.h.b16 %v985
        %v1020 = vunpack.c.l.b16 %v986
        %v1021 = vunpack.c.h.b16 %v986
        %v1022 = vunpack.c.l.b16 %v987
        %v1023 = vunpack.c.h.b16 %v987
        %v1024 = vunpack.c.l.b16 %v988
        %v1025 = vunpack.c.h.b16 %v988
        %v1026 = vunpack.c.l.b16 %v989
        %v1027 = vunpack.c.h.b16 %v989
        %v1028 = vunpack.c.l.b16 %v990
        %v1029 = vunpack.c.h.b16 %v990
        %v1030 = vunpack.c.l.b16 %v991
        %v1031 = vunpack.c.h.b16 %v991
        %v1032 = vunpack.c.l.b16 %v992
        %v1033 = vunpack.c.h.b16 %v992
        %v1034 = vunpack.c.l.b16 %v993
        %v1035 = vunpack.c.h.b16 %v993
        %v1036 = vunpack.c.l.b16 %v994
        %v1037 = vunpack.c.h.b16 %v994
        %v1038 = vunpack.c.l.b16 %v995
        %v1039 = vunpack.c.h.b16 %v995
        %v1040 = vunpack.c.l.b16 %v996
        %v1041 = vunpack.c.h.b16 %v996
        %v1042 = vunpack.c.l.b16 %v997
        %v1043 = vunpack.c.h.b16 %v997
        %v1044 = vunpack.c.l.b16 %v998
        %v1045 = vunpack.c.h.b16 %v998
        %v1046 = vunpack.c.l.b16 %v999
        %v1047 = vunpack.c.h.b16 %v999
        %v1048 = vpack.c.b16 %v1018, %v1016
        %v1049 = vpack.c.b16 %v1019, %v1017
        %v1050 = vpack.c.b16 %v1022, %v1020
        %v1051 = vpack.c.b16 %v1023, %v1021
        %v1052 = vpack.c.b16 %v1026, %v1024
        %v1053 = vpack.c.b16 %v1027, %v1025
        %v1054 = vpack.c.b16 %v1030, %v1028
        %v1055 = vpack.c.b16 %v1031, %v1029
        %v1056 = vpack.c.b16 %v1034, %v1032
        %v1057 = vpack.c.b16 %v1035, %v1033
        %v1058 = vpack.c.b16 %v1038, %v1036
        %v1059 = vpack.c.b16 %v1039, %v1037
        %v1060 = vpack.c.b16 %v1042, %v1040
        %v1061 = vpack.c.b16 %v1043, %v1041
        %v1062 = vpack.c.b16 %v1046, %v1044
        %v1063 = vpack.c.b16 %v1047, %v1045
        %1080 = vmatprep.subr.bf16.mxu0 %v1063
        %1081 = vmatpush1.bf16.msra.mxu0 %v1062
        %1082 = vmatprep.subr.bf16.mxu0 %v1061
        %1083 = vmatpush1.bf16.msra.mxu0 %v1060
        %1084 = vmatprep.subr.bf16.mxu0 %v1059
        %1085 = vmatpush1.bf16.msra.mxu0 %v1058
        %1086 = vmatprep.subr.bf16.mxu0 %v1057
        %1087 = vmatpush1.bf16.msra.mxu0 %v1056
        %1088 = vmatprep.subr.bf16.mxu0 %v1055
        %1089 = vmatpush1.bf16.msra.mxu0 %v1054
        %1090 = vmatprep.subr.bf16.mxu0 %v1053
        %1091 = vmatpush1.bf16.msra.mxu0 %v1052
        %1092 = vmatprep.subr.bf16.mxu0 %v1051
        %1093 = vmatpush1.bf16.msra.mxu0 %v1050
        %1094 = vmatprep.subr.bf16.mxu0 %v1049
        %1095 = vmatpush1.bf16.msra.mxu0 %v1048
        %1096 = vmatprep.subr.bf16.mxu0 0
        %1097 = vmatpush2.bf16.msra.mxu0 0
        %1098 = vmatprep.subr.bf16.mxu0 0
        %1099 = vmatpush2.bf16.msra.mxu0 0
        %1100 = vmatprep.subr.bf16.mxu0 0
        %1101 = vmatpush2.bf16.msra.mxu0 0
        %1102 = vmatprep.subr.bf16.mxu0 0
        %1103 = vmatpush2.bf16.msra.mxu0 0
        %1104 = vmatprep.subr.bf16.mxu0 0
        %1105 = vmatpush2.bf16.msra.mxu0 0
        %1106 = vmatprep.subr.bf16.mxu0 0
        %1107 = vmatpush2.bf16.msra.mxu0 0
        %1108 = vmatprep.subr.bf16.mxu0 0
        %1109 = vmatpush2.bf16.msra.mxu0 0
        %1110 = vmatprep.subr.bf16.mxu0 0
        %1111 = vmatpush2.bf16.msra.mxu0 0
        %1112 = vmatprep.mubr.bf16.mxu0 0
        %1113 = vmatmul.mubr.bf16.gmra.mxu0 %v705
        %v1114 = vpop.f32.mrf.mxu0
        %v1115 = vadd.f32 0.0, %v1114
        %v1116 = vpop.f32.mrf.mxu0
        %v1117 = vadd.f32 0.0, %v1116
        %v1118 = vpop.f32.mrf.mxu0
        %v1119 = vadd.f32 0.0, %v1118
        %v1120 = vpop.f32.mrf.mxu0
        %v1121 = vadd.f32 0.0, %v1120
        %1122 = vdwg.mxu0
        %v1123 = vpack.c.bf16 %v841, %v837
        %v1124 = vpack.c.bf16 %v843, %v839
        %1126 = vrot.lane.b32.xlu0 %v1123, 64
        %v1127 = vpop.permute.xlu0 %1126
        %1129 = vrot.lane.b32.xlu0 %v1124, 64
        %v1130 = vpop.permute.xlu0 %1129
        %v1131 = vpack.c.bf16 %v980, %v976
        %v1132 = vpack.c.bf16 %v982, %v978
        %1134 = vrot.lane.b32.xlu0 %v1131, 64
        %v1135 = vpop.permute.xlu0 %1134
        %1137 = vrot.lane.b32.xlu0 %v1132, 64
        %v1138 = vpop.permute.xlu0 %1137
        %v1139 = vpack.c.bf16 %v1119, %v1115
        %v1140 = vpack.c.bf16 %v1121, %v1117
        %1142 = vrot.lane.b32.xlu0 %v1139, 64
        %v1143 = vpop.permute.xlu0 %1142
        %1146 = vrot.lane.b32.xlu0 %v1140, 64
        %v1147 = vpop.permute.xlu0 %1146
        %vm1149 = vcmask 523264
        %v1151 = vsel %vm1149, %v1123, 0
        %v1154 = vsel %vm1149, %v1131, 0
        %1156 = vmatprep.subr.bf16.mxu0 0
        %1157 = vmatpush1.bf16.xpose.msra.mxu0 0
        %1158 = vmatprep.subr.bf16.mxu0 0
        %1159 = vmatpush1.bf16.xpose.msra.mxu0 0
        %1160 = vmatprep.subr.bf16.mxu0 0
        %1161 = vmatpush1.bf16.xpose.msra.mxu0 0
        %1162 = vmatprep.subr.bf16.mxu0 0
        %1163 = vmatpush1.bf16.xpose.msra.mxu0 0
        %1164 = vmatprep.subr.bf16.mxu0 0
        %1165 = vmatpush1.bf16.xpose.msra.mxu0 0
        %1166 = vmatprep.subr.bf16.mxu0 0
        %1167 = vmatpush1.bf16.xpose.msra.mxu0 0
        %1168 = vmatprep.subr.bf16.mxu0 0
        %1169 = vmatpush1.bf16.xpose.msra.mxu0 0
        %1170 = vmatprep.subr.bf16.mxu0 0
        %1171 = vmatpush1.bf16.xpose.msra.mxu0 %v1154
        %1172 = vmatprep.subr.bf16.mxu0 0
        %1173 = vmatpush2.bf16.xpose.msra.mxu0 0
        %1174 = vmatprep.subr.bf16.mxu0 0
        %1175 = vmatpush2.bf16.xpose.msra.mxu0 0
        %1176 = vmatprep.subr.bf16.mxu0 0
        %1177 = vmatpush2.bf16.xpose.msra.mxu0 0
        %1178 = vmatprep.subr.bf16.mxu0 0
        %1179 = vmatpush2.bf16.xpose.msra.mxu0 0
        %1180 = vmatprep.subr.bf16.mxu0 0
        %1181 = vmatpush2.bf16.xpose.msra.mxu0 0
        %1182 = vmatprep.subr.bf16.mxu0 0
        %1183 = vmatpush2.bf16.xpose.msra.mxu0 0
        %1184 = vmatprep.subr.bf16.mxu0 0
        %1185 = vmatpush2.bf16.xpose.msra.mxu0 0
        %1186 = vmatprep.subr.bf16.mxu0 0
        %1187 = vmatpush2.bf16.xpose.msra.mxu0 0
        %1188 = vmatprep.mubr.bf16.mxu0 0
        %1189 = vmatmul.mubr.bf16.gmra.mxu0 %v1151
        %v1190 = vpop.f32.mrf.mxu0
        %v1191 = vadd.f32 0.0, %v1190
        %v1192 = vpop.f32.mrf.mxu0
        %v1193 = vpop.f32.mrf.mxu0
        %v1194 = vadd.f32 0.0, %v1193
        %v1195 = vpop.f32.mrf.mxu0
        %1196 = vdwg.mxu0
        %v1198 = vsel %vm1149, %v1127, 0
        %v1201 = vsel %vm1149, %v1135, 0
        %1203 = vmatprep.subr.bf16.mxu0 0
        %1204 = vmatpush1.bf16.xpose.msra.mxu0 0
        %1205 = vmatprep.subr.bf16.mxu0 0
        %1206 = vmatpush1.bf16.xpose.msra.mxu0 0
        %1207 = vmatprep.subr.bf16.mxu0 0
        %1208 = vmatpush1.bf16.xpose.msra.mxu0 0
        %1209 = vmatprep.subr.bf16.mxu0 0
        %1210 = vmatpush1.bf16.xpose.msra.mxu0 0
        %1211 = vmatprep.subr.bf16.mxu0 0
        %1212 = vmatpush1.bf16.xpose.msra.mxu0 0
        %1213 = vmatprep.subr.bf16.mxu0 0
        %1214 = vmatpush1.bf16.xpose.msra.mxu0 0
        %1215 = vmatprep.subr.bf16.mxu0 0
        %1216 = vmatpush1.bf16.xpose.msra.mxu0 0
        %1217 = vmatprep.subr.bf16.mxu0 0
        %1218 = vmatpush1.bf16.xpose.msra.mxu0 %v1201
        %1219 = vmatprep.subr.bf16.mxu0 0
        %1220 = vmatpush2.bf16.xpose.msra.mxu0 0
        %1221 = vmatprep.subr.bf16.mxu0 0
        %1222 = vmatpush2.bf16.xpose.msra.mxu0 0
        %1223 = vmatprep.subr.bf16.mxu0 0
        %1224 = vmatpush2.bf16.xpose.msra.mxu0 0
        %1225 = vmatprep.subr.bf16.mxu0 0
        %1226 = vmatpush2.bf16.xpose.msra.mxu0 0
        %1227 = vmatprep.subr.bf16.mxu0 0
        %1228 = vmatpush2.bf16.xpose.msra.mxu0 0
        %1229 = vmatprep.subr.bf16.mxu0 0
        %1230 = vmatpush2.bf16.xpose.msra.mxu0 0
        %1231 = vmatprep.subr.bf16.mxu0 0
        %1232 = vmatpush2.bf16.xpose.msra.mxu0 0
        %1233 = vmatprep.subr.bf16.mxu0 0
        %1234 = vmatpush2.bf16.xpose.msra.mxu0 0
        %1235 = vmatprep.mubr.bf16.mxu0 0
        %1236 = vmatmul.mubr.bf16.gmra.mxu0 %v1198
        %v1237 = vpop.f32.mrf.mxu0
        %v1238 = vadd.f32 0.0, %v1237
        %v1239 = vpop.f32.mrf.mxu0
        %v1240 = vpop.f32.mrf.mxu0
        %v1241 = vadd.f32 0.0, %v1240
        %v1242 = vpop.f32.mrf.mxu0
        %1243 = vdwg.mxu0
        %v1245 = vsel %vm1149, %v1124, 0
        %v1248 = vsel %vm1149, %v1132, 0
        %1250 = vmatprep.subr.bf16.mxu0 0
        %1251 = vmatpush1.bf16.xpose.msra.mxu0 0
        %1252 = vmatprep.subr.bf16.mxu0 0
        %1253 = vmatpush1.bf16.xpose.msra.mxu0 0
        %1254 = vmatprep.subr.bf16.mxu0 0
        %1255 = vmatpush1.bf16.xpose.msra.mxu0 0
        %1256 = vmatprep.subr.bf16.mxu0 0
        %1257 = vmatpush1.bf16.xpose.msra.mxu0 0
        %1258 = vmatprep.subr.bf16.mxu0 0
        %1259 = vmatpush1.bf16.xpose.msra.mxu0 0
        %1260 = vmatprep.subr.bf16.mxu0 0
        %1261 = vmatpush1.bf16.xpose.msra.mxu0 0
        %1262 = vmatprep.subr.bf16.mxu0 0
        %1263 = vmatpush1.bf16.xpose.msra.mxu0 0
        %1264 = vmatprep.subr.bf16.mxu0 0
        %1265 = vmatpush1.bf16.xpose.msra.mxu0 %v1248
        %1266 = vmatprep.subr.bf16.mxu0 0
        %1267 = vmatpush2.bf16.xpose.msra.mxu0 0
        %1268 = vmatprep.subr.bf16.mxu0 0
        %1269 = vmatpush2.bf16.xpose.msra.mxu0 0
        %1270 = vmatprep.subr.bf16.mxu0 0
        %1271 = vmatpush2.bf16.xpose.msra.mxu0 0
        %1272 = vmatprep.subr.bf16.mxu0 0
        %1273 = vmatpush2.bf16.xpose.msra.mxu0 0
        %1274 = vmatprep.subr.bf16.mxu0 0
        %1275 = vmatpush2.bf16.xpose.msra.mxu0 0
        %1276 = vmatprep.subr.bf16.mxu0 0
        %1277 = vmatpush2.bf16.xpose.msra.mxu0 0
        %1278 = vmatprep.subr.bf16.mxu0 0
        %1279 = vmatpush2.bf16.xpose.msra.mxu0 0
        %1280 = vmatprep.subr.bf16.mxu0 0
        %1281 = vmatpush2.bf16.xpose.msra.mxu0 0
        %1282 = vmatprep.mubr.bf16.mxu0 0
        %1283 = vmatmul.mubr.bf16.gmra.mxu0 %v1245
        %v1284 = vpop.f32.mrf.mxu0
        %v1285 = vadd.f32 0.0, %v1284
        %v1286 = vpop.f32.mrf.mxu0
        %v1287 = vpop.f32.mrf.mxu0
        %v1288 = vadd.f32 0.0, %v1287
        %v1289 = vpop.f32.mrf.mxu0
        %1290 = vdwg.mxu0
        %v1292 = vsel %vm1149, %v1130, 0
        %v1295 = vsel %vm1149, %v1138, 0
        %1297 = vmatprep.subr.bf16.mxu0 0
        %1298 = vmatpush1.bf16.xpose.msra.mxu0 0
        %1299 = vmatprep.subr.bf16.mxu0 0
        %1300 = vmatpush1.bf16.xpose.msra.mxu0 0
        %1301 = vmatprep.subr.bf16.mxu0 0
        %1302 = vmatpush1.bf16.xpose.msra.mxu0 0
        %1303 = vmatprep.subr.bf16.mxu0 0
        %1304 = vmatpush1.bf16.xpose.msra.mxu0 0
        %1305 = vmatprep.subr.bf16.mxu0 0
        %1306 = vmatpush1.bf16.xpose.msra.mxu0 0
        %1307 = vmatprep.subr.bf16.mxu0 0
        %1308 = vmatpush1.bf16.xpose.msra.mxu0 0
        %1309 = vmatprep.subr.bf16.mxu0 0
        %1310 = vmatpush1.bf16.xpose.msra.mxu0 0
        %1311 = vmatprep.subr.bf16.mxu0 0
        %1312 = vmatpush1.bf16.xpose.msra.mxu0 %v1295
        %1313 = vmatprep.subr.bf16.mxu0 0
        %1314 = vmatpush2.bf16.xpose.msra.mxu0 0
        %1315 = vmatprep.subr.bf16.mxu0 0
        %1316 = vmatpush2.bf16.xpose.msra.mxu0 0
        %1317 = vmatprep.subr.bf16.mxu0 0
        %1318 = vmatpush2.bf16.xpose.msra.mxu0 0
        %1319 = vmatprep.subr.bf16.mxu0 0
        %1320 = vmatpush2.bf16.xpose.msra.mxu0 0
        %1321 = vmatprep.subr.bf16.mxu0 0
        %1322 = vmatpush2.bf16.xpose.msra.mxu0 0
        %1323 = vmatprep.subr.bf16.mxu0 0
        %1324 = vmatpush2.bf16.xpose.msra.mxu0 0
        %1325 = vmatprep.subr.bf16.mxu0 0
        %1326 = vmatpush2.bf16.xpose.msra.mxu0 0
        %1327 = vmatprep.subr.bf16.mxu0 0
        %1328 = vmatpush2.bf16.xpose.msra.mxu0 0
        %1329 = vmatprep.mubr.bf16.mxu0 0
        %1330 = vmatmul.mubr.bf16.gmra.mxu0 %v1292
        %v1331 = vpop.f32.mrf.mxu0
        %v1332 = vadd.f32 0.0, %v1331
        %v1333 = vpop.f32.mrf.mxu0
        %v1334 = vpop.f32.mrf.mxu0
        %v1335 = vadd.f32 0.0, %v1334
        %v1336 = vpop.f32.mrf.mxu0
        %1337 = vdwg.mxu0
        %vm1338 = vcmask 130048
        %v1339 = vsel %vm1338, %v1191, -inf
        %1340 = vmax.xlane.f32.xlu0 %v1339
        %v1341 = vpop.xlane.xlu0 %1340
        %v1342 = vsel %vm1338, %v1194, -inf
        %1343 = vmax.xlane.f32.xlu0 %v1342
        %v1344 = vpop.xlane.xlu0 %1343
        %v1345 = vsel %vm1338, %v1238, -inf
        %1346 = vmax.xlane.f32.xlu0 %v1345
        %v1347 = vpop.xlane.xlu0 %1346
        %v1348 = vsel %vm1338, %v1241, -inf
        %1349 = vmax.xlane.f32.xlu0 %v1348
        %v1350 = vpop.xlane.xlu0 %1349
        %v1351 = vsel %vm1338, %v1285, -inf
        %1352 = vmax.xlane.f32.xlu0 %v1351
        %v1353 = vpop.xlane.xlu0 %1352
        %v1354 = vsel %vm1338, %v1288, -inf
        %1355 = vmax.xlane.f32.xlu0 %v1354
        %v1356 = vpop.xlane.xlu0 %1355
        %v1357 = vsel %vm1338, %v1332, -inf
        %1358 = vmax.xlane.f32.xlu0 %v1357
        %v1359 = vpop.xlane.xlu0 %1358
        %v1360 = vsel %vm1338, %v1335, -inf
        %1361 = vmax.xlane.f32.xlu0 %v1360
        %v1362 = vpop.xlane.xlu0 %1361
        %v1363 = vsub.f32 %v1191, %v1341
        %v1364 = vsub.f32 %v1194, %v1344
        %v1365 = vsub.f32 %v1238, %v1347
        %v1366 = vsub.f32 %v1241, %v1350
        %v1367 = vsub.f32 %v1285, %v1353
        %v1368 = vsub.f32 %v1288, %v1356
        %v1369 = vsub.f32 %v1332, %v1359
        %v1370 = vsub.f32 %v1335, %v1362
        %v1371 = vmul.f32 %v1363, 1.442695
        %v1372 = vpow.pop %v1371
        %v1373 = vmul.f32 %v1364, 1.442695
        %v1374 = vpow.pop %v1373
        %v1375 = vmul.f32 %v1365, 1.442695
        %v1376 = vpow.pop %v1375
        %v1377 = vmul.f32 %v1366, 1.442695
        %v1378 = vpow.pop %v1377
        %v1379 = vmul.f32 %v1367, 1.442695
        %v1380 = vpow.pop %v1379
        %v1381 = vmul.f32 %v1368, 1.442695
        %v1382 = vpow.pop %v1381
        %v1383 = vmul.f32 %v1369, 1.442695
        %v1384 = vpow.pop %v1383
        %v1385 = vmul.f32 %v1370, 1.442695
        %v1386 = vpow.pop %v1385
        %v1387 = vsel %vm1338, %v1372, 0.0
        %1388 = vadd.xlane.f32.xlu0 %v1387
        %v1389 = vpop.xlane.xlu0 %1388
        %v1390 = vsel %vm1338, %v1374, 0.0
        %1391 = vadd.xlane.f32.xlu0 %v1390
        %v1392 = vpop.xlane.xlu0 %1391
        %v1393 = vsel %vm1338, %v1376, 0.0
        %1394 = vadd.xlane.f32.xlu0 %v1393
        %v1395 = vpop.xlane.xlu0 %1394
        %v1396 = vsel %vm1338, %v1378, 0.0
        %1397 = vadd.xlane.f32.xlu0 %v1396
        %v1398 = vpop.xlane.xlu0 %1397
        %v1399 = vsel %vm1338, %v1380, 0.0
        %1400 = vadd.xlane.f32.xlu0 %v1399
        %v1401 = vpop.xlane.xlu0 %1400
        %v1402 = vsel %vm1338, %v1382, 0.0
        %1403 = vadd.xlane.f32.xlu0 %v1402
        %v1404 = vpop.xlane.xlu0 %1403
        %v1405 = vsel %vm1338, %v1384, 0.0
        %1406 = vadd.xlane.f32.xlu0 %v1405
        %v1407 = vpop.xlane.xlu0 %1406
        %v1408 = vsel %vm1338, %v1386, 0.0
        %1409 = vadd.xlane.f32.xlu0 %v1408
        %v1410 = vpop.xlane.xlu0 %1409
        %v1411 = vrcp.pop %v1389
        %v1412 = vrcp.pop %v1392
        %v1413 = vrcp.pop %v1395
        %v1414 = vrcp.pop %v1398
        %v1415 = vrcp.pop %v1401
        %v1416 = vrcp.pop %v1404
        %v1417 = vrcp.pop %v1407
        %v1418 = vrcp.pop %v1410
        %v1419 = vmul.f32 %v1372, %v1411
        %v1420 = vmul.f32 %v1374, %v1412
        %v1421 = vmul.f32 %v1376, %v1413
        %v1422 = vmul.f32 %v1378, %v1414
        %v1423 = vmul.f32 %v1380, %v1415
        %v1424 = vmul.f32 %v1382, %v1416
        %v1425 = vmul.f32 %v1384, %v1417
        %v1426 = vmul.f32 %v1386, %v1418
        %v1427 = vpack.c.bf16 %v1420, %v1419
        %v1428 = vpack.c.bf16 %v1422, %v1421
        %v1429 = vpack.c.bf16 %v1424, %v1423
        %v1430 = vpack.c.bf16 %v1426, %v1425
        %v1432 = vsel %vm1338, %v1427, 0
        %1434 = vmatprep.subr.bf16.mxu0 0
        %1435 = vmatpush1.bf16.msra.mxu0 0
        %1436 = vmatprep.subr.bf16.mxu0 0
        %1437 = vmatpush1.bf16.msra.mxu0 0
        %1438 = vmatprep.subr.bf16.mxu0 0
        %1439 = vmatpush1.bf16.msra.mxu0 0
        %1440 = vmatprep.subr.bf16.mxu0 0
        %1441 = vmatpush1.bf16.msra.mxu0 0
        %1442 = vmatprep.subr.bf16.mxu0 0
        %1443 = vmatpush1.bf16.msra.mxu0 0
        %1444 = vmatprep.subr.bf16.mxu0 0
        %1445 = vmatpush1.bf16.msra.mxu0 0
        %1446 = vmatprep.subr.bf16.mxu0 0
        %1447 = vmatpush1.bf16.msra.mxu0 0
        %1448 = vmatprep.subr.bf16.mxu0 0
        %1449 = vmatpush1.bf16.msra.mxu0 %v1139
        %1450 = vmatprep.subr.bf16.mxu0 0
        %1451 = vmatpush2.bf16.msra.mxu0 0
        %1452 = vmatprep.subr.bf16.mxu0 0
        %1453 = vmatpush2.bf16.msra.mxu0 0
        %1454 = vmatprep.subr.bf16.mxu0 0
        %1455 = vmatpush2.bf16.msra.mxu0 0
        %1456 = vmatprep.subr.bf16.mxu0 0
        %1457 = vmatpush2.bf16.msra.mxu0 0
        %1458 = vmatprep.subr.bf16.mxu0 0
        %1459 = vmatpush2.bf16.msra.mxu0 0
        %1460 = vmatprep.subr.bf16.mxu0 0
        %1461 = vmatpush2.bf16.msra.mxu0 0
        %1462 = vmatprep.subr.bf16.mxu0 0
        %1463 = vmatpush2.bf16.msra.mxu0 0
        %1464 = vmatprep.subr.bf16.mxu0 0
        %1465 = vmatpush2.bf16.msra.mxu0 0
        %1466 = vmatprep.mubr.bf16.mxu0 0
        %1467 = vmatmul.mubr.bf16.gmra.mxu0 %v1432
        %v1468 = vpop.f32.mrf.mxu0
        %v1469 = vadd.f32 0.0, %v1468
        %v1470 = vpop.f32.mrf.mxu0
        %v1471 = vpop.f32.mrf.mxu0
        %v1472 = vadd.f32 0.0, %v1471
        %v1473 = vpop.f32.mrf.mxu0
        %1474 = vdwg.mxu0
        %v1476 = vsel %vm1338, %v1428, 0
        %1478 = vmatprep.subr.bf16.mxu0 0
        %1479 = vmatpush1.bf16.msra.mxu0 0
        %1480 = vmatprep.subr.bf16.mxu0 0
        %1481 = vmatpush1.bf16.msra.mxu0 0
        %1482 = vmatprep.subr.bf16.mxu0 0
        %1483 = vmatpush1.bf16.msra.mxu0 0
        %1484 = vmatprep.subr.bf16.mxu0 0
        %1485 = vmatpush1.bf16.msra.mxu0 0
        %1486 = vmatprep.subr.bf16.mxu0 0
        %1487 = vmatpush1.bf16.msra.mxu0 0
        %1488 = vmatprep.subr.bf16.mxu0 0
        %1489 = vmatpush1.bf16.msra.mxu0 0
        %1490 = vmatprep.subr.bf16.mxu0 0
        %1491 = vmatpush1.bf16.msra.mxu0 0
        %1492 = vmatprep.subr.bf16.mxu0 0
        %1493 = vmatpush1.bf16.msra.mxu0 %v1143
        %1494 = vmatprep.subr.bf16.mxu0 0
        %1495 = vmatpush2.bf16.msra.mxu0 0
        %1496 = vmatprep.subr.bf16.mxu0 0
        %1497 = vmatpush2.bf16.msra.mxu0 0
        %1498 = vmatprep.subr.bf16.mxu0 0
        %1499 = vmatpush2.bf16.msra.mxu0 0
        %1500 = vmatprep.subr.bf16.mxu0 0
        %1501 = vmatpush2.bf16.msra.mxu0 0
        %1502 = vmatprep.subr.bf16.mxu0 0
        %1503 = vmatpush2.bf16.msra.mxu0 0
        %1504 = vmatprep.subr.bf16.mxu0 0
        %1505 = vmatpush2.bf16.msra.mxu0 0
        %1506 = vmatprep.subr.bf16.mxu0 0
        %1507 = vmatpush2.bf16.msra.mxu0 0
        %1508 = vmatprep.subr.bf16.mxu0 0
        %1509 = vmatpush2.bf16.msra.mxu0 0
        %1510 = vmatprep.mubr.bf16.mxu0 0
        %1511 = vmatmul.mubr.bf16.gmra.mxu0 %v1476
        %v1512 = vpop.f32.mrf.mxu0
        %v1513 = vadd.f32 0.0, %v1512
        %v1514 = vpop.f32.mrf.mxu0
        %v1515 = vpop.f32.mrf.mxu0
        %v1516 = vadd.f32 0.0, %v1515
        %v1517 = vpop.f32.mrf.mxu0
        %1518 = vdwg.mxu0
        %v1520 = vsel %vm1338, %v1429, 0
        %1522 = vmatprep.subr.bf16.mxu0 0
        %1523 = vmatpush1.bf16.msra.mxu0 0
        %1524 = vmatprep.subr.bf16.mxu0 0
        %1525 = vmatpush1.bf16.msra.mxu0 0
        %1526 = vmatprep.subr.bf16.mxu0 0
        %1527 = vmatpush1.bf16.msra.mxu0 0
        %1528 = vmatprep.subr.bf16.mxu0 0
        %1529 = vmatpush1.bf16.msra.mxu0 0
        %1530 = vmatprep.subr.bf16.mxu0 0
        %1531 = vmatpush1.bf16.msra.mxu0 0
        %1532 = vmatprep.subr.bf16.mxu0 0
        %1533 = vmatpush1.bf16.msra.mxu0 0
        %1534 = vmatprep.subr.bf16.mxu0 0
        %1535 = vmatpush1.bf16.msra.mxu0 0
        %1536 = vmatprep.subr.bf16.mxu0 0
        %1537 = vmatpush1.bf16.msra.mxu0 %v1140
        %1538 = vmatprep.subr.bf16.mxu0 0
        %1539 = vmatpush2.bf16.msra.mxu0 0
        %1540 = vmatprep.subr.bf16.mxu0 0
        %1541 = vmatpush2.bf16.msra.mxu0 0
        %1542 = vmatprep.subr.bf16.mxu0 0
        %1543 = vmatpush2.bf16.msra.mxu0 0
        %1544 = vmatprep.subr.bf16.mxu0 0
        %1545 = vmatpush2.bf16.msra.mxu0 0
        %1546 = vmatprep.subr.bf16.mxu0 0
        %1547 = vmatpush2.bf16.msra.mxu0 0
        %1548 = vmatprep.subr.bf16.mxu0 0
        %1549 = vmatpush2.bf16.msra.mxu0 0
        %1550 = vmatprep.subr.bf16.mxu0 0
        %1551 = vmatpush2.bf16.msra.mxu0 0
        %1552 = vmatprep.subr.bf16.mxu0 0
        %1553 = vmatpush2.bf16.msra.mxu0 0
        %1554 = vmatprep.mubr.bf16.mxu0 0
        %1555 = vmatmul.mubr.bf16.gmra.mxu0 %v1520
        %v1556 = vpop.f32.mrf.mxu0
        %v1557 = vadd.f32 0.0, %v1556
        %v1558 = vpop.f32.mrf.mxu0
        %v1559 = vpop.f32.mrf.mxu0
        %v1560 = vadd.f32 0.0, %v1559
        %v1561 = vpop.f32.mrf.mxu0
        %1562 = vdwg.mxu0
        %v1564 = vsel %vm1338, %v1430, 0
        %1566 = vmatprep.subr.bf16.mxu0 0
        %1567 = vmatpush1.bf16.msra.mxu0 0
        %1568 = vmatprep.subr.bf16.mxu0 0
        %1569 = vmatpush1.bf16.msra.mxu0 0
        %1570 = vmatprep.subr.bf16.mxu0 0
        %1571 = vmatpush1.bf16.msra.mxu0 0
        %1572 = vmatprep.subr.bf16.mxu0 0
        %1573 = vmatpush1.bf16.msra.mxu0 0
        %1574 = vmatprep.subr.bf16.mxu0 0
        %1575 = vmatpush1.bf16.msra.mxu0 0
        %1576 = vmatprep.subr.bf16.mxu0 0
        %1577 = vmatpush1.bf16.msra.mxu0 0
        %1578 = vmatprep.subr.bf16.mxu0 0
        %1579 = vmatpush1.bf16.msra.mxu0 0
        %1580 = vmatprep.subr.bf16.mxu0 0
        %1581 = vmatpush1.bf16.msra.mxu0 %v1147
        %1582 = vmatprep.subr.bf16.mxu0 0
        %1583 = vmatpush2.bf16.msra.mxu0 0
        %1584 = vmatprep.subr.bf16.mxu0 0
        %1585 = vmatpush2.bf16.msra.mxu0 0
        %1586 = vmatprep.subr.bf16.mxu0 0
        %1587 = vmatpush2.bf16.msra.mxu0 0
        %1588 = vmatprep.subr.bf16.mxu0 0
        %1589 = vmatpush2.bf16.msra.mxu0 0
        %1590 = vmatprep.subr.bf16.mxu0 0
        %1591 = vmatpush2.bf16.msra.mxu0 0
        %1592 = vmatprep.subr.bf16.mxu0 0
        %1593 = vmatpush2.bf16.msra.mxu0 0
        %1594 = vmatprep.subr.bf16.mxu0 0
        %1595 = vmatpush2.bf16.msra.mxu0 0
        %1596 = vmatprep.subr.bf16.mxu0 0
        %1597 = vmatpush2.bf16.msra.mxu0 0
        %1598 = vmatprep.mubr.bf16.mxu0 0
        %1599 = vmatmul.mubr.bf16.gmra.mxu0 %v1564
        %v1600 = vpop.f32.mrf.mxu0
        %v1601 = vadd.f32 0.0, %v1600
        %v1602 = vpop.f32.mrf.mxu0
        %v1603 = vpop.f32.mrf.mxu0
        %v1604 = vadd.f32 0.0, %v1603
        %v1605 = vpop.f32.mrf.mxu0
        %1606 = vdwg.mxu0
        %1609 = vrot.lane.b32.xlu0 %v1513, 64
        %v1610 = vpop.permute.xlu0 %1609
        %1611 = vrot.lane.b32.xlu0 %v1516, 64
        %v1612 = vpop.permute.xlu0 %1611
        %1617 = vrot.lane.b32.xlu0 %v1601, 64
        %v1618 = vpop.permute.xlu0 %1617
        %1619 = vrot.lane.b32.xlu0 %v1604, 64
        %v1620 = vpop.permute.xlu0 %1619
        %v1623 = vsel %vm1149, %v1469, %v1610
        %v1624 = vsel %vm1149, %v1472, %v1612
        %v1625 = vsel %vm1149, %v1557, %v1618
        %v1626 = vsel %vm1149, %v1560, %v1620
        %v1627 = vpack.c.bf16 %v1624, %v1623
        %v1628 = vpack.c.bf16 %v1626, %v1625
        %v1629 = vld [vmem:[#allocation14] sm:$0xf]
        %v1630 = vld [vmem:[#allocation14 + $0x4] sm:$0xf]
        %v1631 = vld [vmem:[#allocation14 + $0x8] sm:$0xf]
        %v1632 = vld [vmem:[#allocation14 + $0xc] sm:$0xf]
        %v1633 = vld [vmem:[#allocation14 + $0x10] sm:$0xf]
        %v1634 = vld [vmem:[#allocation14 + $0x14] sm:$0xf]
        %v1635 = vld [vmem:[#allocation14 + $0x18] sm:$0xf]
        %v1636 = vld [vmem:[#allocation14 + $0x1c] sm:$0xf]
        %v1637 = vld [vmem:[#allocation14 + $0x20] sm:$0xf]
        %v1638 = vld [vmem:[#allocation14 + $0x24] sm:$0xf]
        %v1639 = vld [vmem:[#allocation14 + $0x28] sm:$0xf]
        %v1640 = vld [vmem:[#allocation14 + $0x2c] sm:$0xf]
        %v1641 = vld [vmem:[#allocation14 + $0x30] sm:$0xf]
        %v1642 = vld [vmem:[#allocation14 + $0x34] sm:$0xf]
        %v1643 = vld [vmem:[#allocation14 + $0x38] sm:$0xf]
        %v1644 = vld [vmem:[#allocation14 + $0x3c] sm:$0xf]
        %v1645 = vld [vmem:[#allocation14 + $0x40] sm:$0xf]
        %v1646 = vld [vmem:[#allocation14 + $0x44] sm:$0xf]
        %v1647 = vld [vmem:[#allocation14 + $0x48] sm:$0xf]
        %v1648 = vld [vmem:[#allocation14 + $0x4c] sm:$0xf]
        %v1649 = vld [vmem:[#allocation14 + $0x50] sm:$0xf]
        %v1650 = vld [vmem:[#allocation14 + $0x54] sm:$0xf]
        %v1651 = vld [vmem:[#allocation14 + $0x58] sm:$0xf]
        %v1652 = vld [vmem:[#allocation14 + $0x5c] sm:$0xf]
        %v1653 = vld [vmem:[#allocation14 + $0x60] sm:$0xf]
        %v1654 = vld [vmem:[#allocation14 + $0x64] sm:$0xf]
        %v1655 = vld [vmem:[#allocation14 + $0x68] sm:$0xf]
        %v1656 = vld [vmem:[#allocation14 + $0x6c] sm:$0xf]
        %v1657 = vld [vmem:[#allocation14 + $0x70] sm:$0xf]
        %v1658 = vld [vmem:[#allocation14 + $0x74] sm:$0xf]
        %v1659 = vld [vmem:[#allocation14 + $0x78] sm:$0xf]
        %v1660 = vld [vmem:[#allocation14 + $0x7c] sm:$0xf]
        %v1661 = vld [vmem:[#allocation15] sm:$0x1]
        %v1663 = vlaneseq
        %v1664 = vshrl.u32 %v1663, 7
        %v1665 = vsub.s32 0, %v1664
        %v1666 = vrot.slane %v1661, %v1665
        %v1700 = vunpack.c.l.b16 %v1629
        %v1701 = vunpack.c.l.b16 %v1630
        %v1702 = vunpack.c.l.b16 %v1631
        %v1703 = vunpack.c.l.b16 %v1632
        %v1704 = vunpack.c.l.b16 %v1633
        %v1705 = vunpack.c.l.b16 %v1634
        %v1706 = vunpack.c.l.b16 %v1635
        %v1707 = vunpack.c.l.b16 %v1636
        %v1708 = vunpack.c.l.b16 %v1637
        %v1709 = vunpack.c.l.b16 %v1638
        %v1710 = vunpack.c.l.b16 %v1639
        %v1711 = vunpack.c.l.b16 %v1640
        %v1712 = vunpack.c.l.b16 %v1641
        %v1713 = vunpack.c.l.b16 %v1642
        %v1714 = vunpack.c.l.b16 %v1643
        %v1715 = vunpack.c.l.b16 %v1644
        %v1716 = vunpack.c.l.b16 %v1645
        %v1717 = vunpack.c.l.b16 %v1646
        %v1718 = vunpack.c.l.b16 %v1647
        %v1719 = vunpack.c.l.b16 %v1648
        %v1720 = vunpack.c.l.b16 %v1649
        %v1721 = vunpack.c.l.b16 %v1650
        %v1722 = vunpack.c.l.b16 %v1651
        %v1723 = vunpack.c.l.b16 %v1652
        %v1724 = vunpack.c.l.b16 %v1653
        %v1725 = vunpack.c.l.b16 %v1654
        %v1726 = vunpack.c.l.b16 %v1655
        %v1727 = vunpack.c.l.b16 %v1656
        %v1728 = vunpack.c.l.b16 %v1657
        %v1729 = vunpack.c.l.b16 %v1658
        %v1730 = vunpack.c.l.b16 %v1659
        %v1731 = vunpack.c.l.b16 %v1660
        %v1732 = vpack.c.b16 %v1701, %v1700
        %v1733 = vpack.c.b16 %v1703, %v1702
        %v1734 = vpack.c.b16 %v1705, %v1704
        %v1735 = vpack.c.b16 %v1707, %v1706
        %v1736 = vpack.c.b16 %v1709, %v1708
        %v1737 = vpack.c.b16 %v1711, %v1710
        %v1738 = vpack.c.b16 %v1713, %v1712
        %v1739 = vpack.c.b16 %v1715, %v1714
        %v1740 = vpack.c.b16 %v1717, %v1716
        %v1741 = vpack.c.b16 %v1719, %v1718
        %v1742 = vpack.c.b16 %v1721, %v1720
        %v1743 = vpack.c.b16 %v1723, %v1722
        %v1744 = vpack.c.b16 %v1725, %v1724
        %v1745 = vpack.c.b16 %v1727, %v1726
        %v1746 = vpack.c.b16 %v1729, %v1728
        %v1747 = vpack.c.b16 %v1731, %v1730
        %1764 = vmatprep.subr.bf16.mxu0 0
        %1765 = vmatpush1.bf16.msra.mxu0 %v1739
        %1766 = vmatprep.subr.bf16.mxu0 0
        %1767 = vmatpush1.bf16.msra.mxu0 %v1738
        %1768 = vmatprep.subr.bf16.mxu0 0
        %1769 = vmatpush1.bf16.msra.mxu0 %v1737
        %1770 = vmatprep.subr.bf16.mxu0 0
        %1771 = vmatpush1.bf16.msra.mxu0 %v1736
        %1772 = vmatprep.subr.bf16.mxu0 0
        %1773 = vmatpush1.bf16.msra.mxu0 %v1735
        %1774 = vmatprep.subr.bf16.mxu0 0
        %1775 = vmatpush1.bf16.msra.mxu0 %v1734
        %1776 = vmatprep.subr.bf16.mxu0 0
        %1777 = vmatpush1.bf16.msra.mxu0 %v1733
        %1778 = vmatprep.subr.bf16.mxu0 0
        %1779 = vmatpush1.bf16.msra.mxu0 %v1732
        %1780 = vmatprep.subr.bf16.mxu0 0
        %1781 = vmatpush2.bf16.msra.mxu0 %v1747
        %1782 = vmatprep.subr.bf16.mxu0 0
        %1783 = vmatpush2.bf16.msra.mxu0 %v1746
        %1784 = vmatprep.subr.bf16.mxu0 0
        %1785 = vmatpush2.bf16.msra.mxu0 %v1745
        %1786 = vmatprep.subr.bf16.mxu0 0
        %1787 = vmatpush2.bf16.msra.mxu0 %v1744
        %1788 = vmatprep.subr.bf16.mxu0 0
        %1789 = vmatpush2.bf16.msra.mxu0 %v1743
        %1790 = vmatprep.subr.bf16.mxu0 0
        %1791 = vmatpush2.bf16.msra.mxu0 %v1742
        %1792 = vmatprep.subr.bf16.mxu0 0
        %1793 = vmatpush2.bf16.msra.mxu0 %v1741
        %1794 = vmatprep.subr.bf16.mxu0 0
        %1795 = vmatpush2.bf16.msra.mxu0 %v1740
        %1796 = vmatprep.mubr.bf16.mxu0 %v1628
        %1797 = vmatmul.mubr.bf16.gmra.mxu0 %v1627
        %v1798 = vpop.f32.mrf.mxu0
        %v1799 = vadd.f32 %v1666, %v1798
        %v1800 = vpop.f32.mrf.mxu0
        %v1801 = vpop.f32.mrf.mxu0
        %v1802 = vadd.f32 %v1666, %v1801
        %v1803 = vpop.f32.mrf.mxu0
        %1804 = vdwg.mxu0
        %v1805 = vadd.f32 %v1799, %v662
        %v1806 = vadd.f32 %v1802, %v663
        %1807 = vadd.xlane.f32.xlu0 %v1805
        %v1808 = vpop.xlane.xlu0 %1807
        %1809 = vadd.xlane.f32.xlu0 %v1806
        %v1810 = vpop.xlane.xlu0 %1809
        %v1811 = vmul.f32 %v1808, %v668
        %v1812 = vmul.f32 %v1810, %v668
        %v1813 = vsub.f32 %v1805, %v1811
        %v1814 = vsub.f32 %v1806, %v1812
        %v1815 = vmul.f32 %v1813, %v1813
        %v1816 = vmul.f32 %v1814, %v1814
        %1817 = vadd.xlane.f32.xlu0 %v1815
        %v1818 = vpop.xlane.xlu0 %1817
        %1819 = vadd.xlane.f32.xlu0 %v1816
        %v1820 = vpop.xlane.xlu0 %1819
        %v1821 = vmul.f32 %v1818, %v668
        %v1822 = vmul.f32 %v1820, %v668
        %v1823 = vadd.f32 %v1821, 1e-05
        %v1824 = vadd.f32 %v1822, 1e-05
        %v1825 = vrsqrt.pop %v1823
        %v1826 = vrsqrt.pop %v1824
        %v1827 = vmul.f32 %v1813, %v1825
        %v1828 = vmul.f32 %v1814, %v1826
        %v1829 = vld [vmem:[#allocation17] sm:$0x1]
        %v1831 = vlaneseq
        %v1832 = vshrl.u32 %v1831, 7
        %v1833 = vsub.s32 0, %v1832
        %v1834 = vrot.slane %v1829, %v1833
        %v1836 = vmul.f32 %v1827, %v1834
        %v1837 = vmul.f32 %v1828, %v1834
        %v1838 = vld [vmem:[#allocation18] sm:$0x1]
        %v1840 = vlaneseq
        %v1841 = vshrl.u32 %v1840, 7
        %v1842 = vsub.s32 0, %v1841
        %v1843 = vrot.slane %v1838, %v1842
        %v1845 = vadd.f32 %v1836, %v1843
        %v1846 = vadd.f32 %v1837, %v1843
        %1847 = vst [vmem:[#allocation2] sm:$0xff] 0.0
        %1848 = vst [vmem:[#allocation2 + $0x8] sm:$0xff] 0.0
        %1849 = vst [vmem:[#allocation2 + $0x10] sm:$0xff] 0.0
        %1850 = vst [vmem:[#allocation2 + $0x4] sm:$0xff] %v1845
        %1851 = vst [vmem:[#allocation2 + $0xc] sm:$0xff] %v1846
        %v1852 = vld [vmem:[#allocation2] sm:$0xff]
        %v1853 = vld [vmem:[#allocation2 + $0x8] sm:$0xff]
        %v1854 = vld [vmem:[#allocation2 + $0x1] sm:$0xff]
        %v1855 = vld [vmem:[#allocation2 + $0x9] sm:$0xff]
        %v1856 = vld [vmem:[#allocation2 + $0x2] sm:$0xff]
        %v1857 = vld [vmem:[#allocation2 + $0xa] sm:$0xff]
        %v1858 = vld [vmem:[#allocation2 + $0x3] sm:$0xff]
        %v1859 = vld [vmem:[#allocation2 + $0xb] sm:$0xff]
        %v1860 = vld [vmem:[#allocation2 + $0x4] sm:$0xff]
        %v1861 = vld [vmem:[#allocation2 + $0xc] sm:$0xff]
        %v1862 = vld [vmem:[#allocation2 + $0x5] sm:$0xff]
        %v1863 = vld [vmem:[#allocation2 + $0xd] sm:$0xff]
        %v1864 = vld [vmem:[#allocation2 + $0x6] sm:$0xff]
        %v1865 = vld [vmem:[#allocation2 + $0xe] sm:$0xff]
        %v1866 = vld [vmem:[#allocation2 + $0x7] sm:$0xff]
        %v1867 = vld [vmem:[#allocation2 + $0xf] sm:$0xff]
        %v1868 = vld [vmem:[#allocation2 + $0x8] sm:$0xff]
        %v1869 = vld [vmem:[#allocation2 + $0x10] sm:$0xff]
        %v1870 = vpack.c.bf16 %v1853, %v1852
        %v1871 = vpack.c.bf16 %v1855, %v1854
        %v1872 = vpack.c.bf16 %v1857, %v1856
        %v1873 = vpack.c.bf16 %v1859, %v1858
        %v1874 = vpack.c.bf16 %v1861, %v1860
        %v1875 = vpack.c.bf16 %v1863, %v1862
        %v1876 = vpack.c.bf16 %v1865, %v1864
        %v1877 = vpack.c.bf16 %v1867, %v1866
        %v1878 = vpack.c.bf16 %v1869, %v1868
        %v1879 = vld [vmem:[#allocation20] sm:$0xff]
        %v1880 = vld [vmem:[#allocation20 + $0x8] sm:$0xff]
        %v1881 = vld [vmem:[#allocation20 + $0x10] sm:$0xff]
        %v1882 = vld [vmem:[#allocation20 + $0x18] sm:$0xff]
        %v1883 = vld [vmem:[#allocation20 + $0x20] sm:$0xff]
        %v1884 = vld [vmem:[#allocation20 + $0x28] sm:$0xff]
        %v1885 = vld [vmem:[#allocation20 + $0x30] sm:$0xff]
        %v1886 = vld [vmem:[#allocation20 + $0x38] sm:$0xff]
        %v1887 = vld [vmem:[#allocation20 + $0x40] sm:$0xff]
        %v1888 = vld [vmem:[#allocation20 + $0x48] sm:$0xff]
        %v1889 = vld [vmem:[#allocation20 + $0x50] sm:$0xff]
        %v1890 = vld [vmem:[#allocation20 + $0x58] sm:$0xff]
        %v1891 = vld [vmem:[#allocation20 + $0x60] sm:$0xff]
        %v1892 = vld [vmem:[#allocation20 + $0x68] sm:$0xff]
        %v1893 = vld [vmem:[#allocation20 + $0x70] sm:$0xff]
        %v1894 = vld [vmem:[#allocation20 + $0x78] sm:$0xff]
        %v1895 = vld [vmem:[#allocation20 + $0x80] sm:$0xff]
        %v1896 = vld [vmem:[#allocation20 + $0x88] sm:$0xff]
        %v1897 = vld [vmem:[#allocation20 + $0x90] sm:$0xff]
        %v1898 = vld [vmem:[#allocation20 + $0x98] sm:$0xff]
        %v1899 = vld [vmem:[#allocation20 + $0xa0] sm:$0xff]
        %v1900 = vld [vmem:[#allocation20 + $0xa8] sm:$0xff]
        %v1901 = vld [vmem:[#allocation20 + $0xb0] sm:$0xff]
        %v1902 = vld [vmem:[#allocation20 + $0xb8] sm:$0xff]
        %v1903 = vld [vmem:[#allocation20 + $0xc0] sm:$0xff]
        %v1904 = vld [vmem:[#allocation20 + $0xc8] sm:$0xff]
        %v1905 = vld [vmem:[#allocation20 + $0xd0] sm:$0xff]
        %v1906 = vld [vmem:[#allocation20 + $0xd8] sm:$0xff]
        %v1907 = vld [vmem:[#allocation20 + $0xe0] sm:$0xff]
        %v1908 = vld [vmem:[#allocation20 + $0xe8] sm:$0xff]
        %v1909 = vld [vmem:[#allocation20 + $0xf0] sm:$0xff]
        %v1910 = vld [vmem:[#allocation20 + $0xf8] sm:$0xff]
        %v1911 = vld [vmem:[#allocation20 + $0x100] sm:$0xff]
        %v1912 = vld [vmem:[#allocation20 + $0x108] sm:$0xff]
        %v1913 = vld [vmem:[#allocation20 + $0x110] sm:$0xff]
        %v1914 = vld [vmem:[#allocation20 + $0x118] sm:$0xff]
        %v1915 = vld [vmem:[#allocation20 + $0x120] sm:$0xff]
        %v1916 = vld [vmem:[#allocation20 + $0x128] sm:$0xff]
        %v1917 = vld [vmem:[#allocation20 + $0x130] sm:$0xff]
        %v1918 = vld [vmem:[#allocation20 + $0x138] sm:$0xff]
        %v1919 = vld [vmem:[#allocation20 + $0x140] sm:$0xff]
        %v1920 = vld [vmem:[#allocation20 + $0x148] sm:$0xff]
        %v1921 = vld [vmem:[#allocation20 + $0x150] sm:$0xff]
        %v1922 = vld [vmem:[#allocation20 + $0x158] sm:$0xff]
        %v1923 = vld [vmem:[#allocation20 + $0x160] sm:$0xff]
        %v1924 = vld [vmem:[#allocation20 + $0x168] sm:$0xff]
        %v1925 = vld [vmem:[#allocation20 + $0x170] sm:$0xff]
        %v1926 = vld [vmem:[#allocation20 + $0x178] sm:$0xff]
        %v1927 = vld [vmem:[#allocation20 + $0x180] sm:$0xff]
        %v1928 = vld [vmem:[#allocation20 + $0x188] sm:$0xff]
        %v1929 = vld [vmem:[#allocation20 + $0x190] sm:$0xff]
        %v1930 = vld [vmem:[#allocation20 + $0x198] sm:$0xff]
        %v1931 = vld [vmem:[#allocation20 + $0x1a0] sm:$0xff]
        %v1932 = vld [vmem:[#allocation20 + $0x1a8] sm:$0xff]
        %v1933 = vld [vmem:[#allocation20 + $0x1b0] sm:$0xff]
        %v1934 = vld [vmem:[#allocation20 + $0x1b8] sm:$0xff]
        %v1935 = vld [vmem:[#allocation20 + $0x1c0] sm:$0xff]
        %v1936 = vld [vmem:[#allocation20 + $0x1c8] sm:$0xff]
        %v1937 = vld [vmem:[#allocation20 + $0x1d0] sm:$0xff]
        %v1938 = vld [vmem:[#allocation20 + $0x1d8] sm:$0xff]
        %v1939 = vld [vmem:[#allocation20 + $0x1e0] sm:$0xff]
        %v1940 = vld [vmem:[#allocation20 + $0x1e8] sm:$0xff]
        %v1941 = vld [vmem:[#allocation20 + $0x1f0] sm:$0xff]
        %v1942 = vld [vmem:[#allocation20 + $0x1f8] sm:$0xff]
        %v1943 = vld [vmem:[#allocation20 + $0x200] sm:$0xff]
        %v1944 = vld [vmem:[#allocation20 + $0x208] sm:$0xff]
        %v1945 = vld [vmem:[#allocation20 + $0x210] sm:$0xff]
        %v1946 = vld [vmem:[#allocation20 + $0x218] sm:$0xff]
        %v1947 = vld [vmem:[#allocation20 + $0x220] sm:$0xff]
        %v1948 = vld [vmem:[#allocation20 + $0x228] sm:$0xff]
        %v1949 = vld [vmem:[#allocation20 + $0x230] sm:$0xff]
        %v1950 = vld [vmem:[#allocation20 + $0x238] sm:$0xff]
        %v1951 = vld [vmem:[#allocation20 + $0x240] sm:$0xff]
        %v1952 = vld [vmem:[#allocation20 + $0x248] sm:$0xff]
        %v1953 = vld [vmem:[#allocation20 + $0x250] sm:$0xff]
        %v1954 = vld [vmem:[#allocation20 + $0x258] sm:$0xff]
        %v1955 = vld [vmem:[#allocation20 + $0x260] sm:$0xff]
        %v1956 = vld [vmem:[#allocation20 + $0x268] sm:$0xff]
        %v1957 = vld [vmem:[#allocation20 + $0x270] sm:$0xff]
        %v1958 = vld [vmem:[#allocation20 + $0x278] sm:$0xff]
        %v1959 = vld [vmem:[#allocation20 + $0x280] sm:$0xff]
        %v1960 = vld [vmem:[#allocation20 + $0x288] sm:$0xff]
        %v1961 = vld [vmem:[#allocation20 + $0x290] sm:$0xff]
        %v1962 = vld [vmem:[#allocation20 + $0x298] sm:$0xff]
        %v1963 = vld [vmem:[#allocation20 + $0x2a0] sm:$0xff]
        %v1964 = vld [vmem:[#allocation20 + $0x2a8] sm:$0xff]
        %v1965 = vld [vmem:[#allocation20 + $0x2b0] sm:$0xff]
        %v1966 = vld [vmem:[#allocation20 + $0x2b8] sm:$0xff]
        %v1967 = vld [vmem:[#allocation20 + $0x2c0] sm:$0xff]
        %v1968 = vld [vmem:[#allocation20 + $0x2c8] sm:$0xff]
        %v1969 = vld [vmem:[#allocation20 + $0x2d0] sm:$0xff]
        %v1970 = vld [vmem:[#allocation20 + $0x2d8] sm:$0xff]
        %v1971 = vld [vmem:[#allocation20 + $0x2e0] sm:$0xff]
        %v1972 = vld [vmem:[#allocation20 + $0x2e8] sm:$0xff]
        %v1973 = vld [vmem:[#allocation20 + $0x2f0] sm:$0xff]
        %v1974 = vld [vmem:[#allocation20 + $0x2f8] sm:$0xff]
        %v1975 = vld [vmem:[#allocation20 + $0x300] sm:$0xff]
        %v1976 = vld [vmem:[#allocation20 + $0x308] sm:$0xff]
        %v1977 = vld [vmem:[#allocation20 + $0x310] sm:$0xff]
        %v1978 = vld [vmem:[#allocation20 + $0x318] sm:$0xff]
        %v1979 = vld [vmem:[#allocation20 + $0x320] sm:$0xff]
        %v1980 = vld [vmem:[#allocation20 + $0x328] sm:$0xff]
        %v1981 = vld [vmem:[#allocation20 + $0x330] sm:$0xff]
        %v1982 = vld [vmem:[#allocation20 + $0x338] sm:$0xff]
        %v1983 = vld [vmem:[#allocation20 + $0x340] sm:$0xff]
        %v1984 = vld [vmem:[#allocation20 + $0x348] sm:$0xff]
        %v1985 = vld [vmem:[#allocation20 + $0x350] sm:$0xff]
        %v1986 = vld [vmem:[#allocation20 + $0x358] sm:$0xff]
        %v1987 = vld [vmem:[#allocation20 + $0x360] sm:$0xff]
        %v1988 = vld [vmem:[#allocation20 + $0x368] sm:$0xff]
        %v1989 = vld [vmem:[#allocation20 + $0x370] sm:$0xff]
        %v1990 = vld [vmem:[#allocation20 + $0x378] sm:$0xff]
        %v1991 = vld [vmem:[#allocation20 + $0x380] sm:$0xff]
        %v1992 = vld [vmem:[#allocation20 + $0x388] sm:$0xff]
        %v1993 = vld [vmem:[#allocation20 + $0x390] sm:$0xff]
        %v1994 = vld [vmem:[#allocation20 + $0x398] sm:$0xff]
        %v1995 = vld [vmem:[#allocation20 + $0x3a0] sm:$0xff]
        %v1996 = vld [vmem:[#allocation20 + $0x3a8] sm:$0xff]
        %v1997 = vld [vmem:[#allocation20 + $0x3b0] sm:$0xff]
        %v1998 = vld [vmem:[#allocation20 + $0x3b8] sm:$0xff]
        %v1999 = vld [vmem:[#allocation20 + $0x3c0] sm:$0xff]
        %v2000 = vld [vmem:[#allocation20 + $0x3c8] sm:$0xff]
        %v2001 = vld [vmem:[#allocation20 + $0x3d0] sm:$0xff]
        %v2002 = vld [vmem:[#allocation20 + $0x3d8] sm:$0xff]
        %v2003 = vld [vmem:[#allocation20 + $0x3e0] sm:$0xff]
        %v2004 = vld [vmem:[#allocation20 + $0x3e8] sm:$0xff]
        %v2005 = vld [vmem:[#allocation20 + $0x3f0] sm:$0xff]
        %v2006 = vld [vmem:[#allocation20 + $0x3f8] sm:$0xff]
        %v2007 = vld [vmem:[#allocation20 + $0x400] sm:$0xff]
        %v2008 = vld [vmem:[#allocation20 + $0x408] sm:$0xff]
        %v2009 = vld [vmem:[#allocation20 + $0x410] sm:$0xff]
        %v2010 = vld [vmem:[#allocation20 + $0x418] sm:$0xff]
        %v2011 = vld [vmem:[#allocation20 + $0x420] sm:$0xff]
        %v2012 = vld [vmem:[#allocation20 + $0x428] sm:$0xff]
        %v2013 = vld [vmem:[#allocation20 + $0x430] sm:$0xff]
        %v2014 = vld [vmem:[#allocation20 + $0x438] sm:$0xff]
        %v2015 = vld [vmem:[#allocation20 + $0x440] sm:$0xff]
        %v2016 = vld [vmem:[#allocation20 + $0x448] sm:$0xff]
        %v2017 = vld [vmem:[#allocation20 + $0x450] sm:$0xff]
        %v2018 = vld [vmem:[#allocation20 + $0x458] sm:$0xff]
        %v2019 = vld [vmem:[#allocation20 + $0x460] sm:$0xff]
        %v2020 = vld [vmem:[#allocation20 + $0x468] sm:$0xff]
        %v2021 = vld [vmem:[#allocation20 + $0x470] sm:$0xff]
        %v2022 = vld [vmem:[#allocation20 + $0x478] sm:$0xff]
        %v2023 = vld [vmem:[#allocation20 + $0x480] sm:$0xff]
        %v2024 = vld [vmem:[#allocation20 + $0x488] sm:$0xff]
        %v2025 = vld [vmem:[#allocation20 + $0x490] sm:$0xff]
        %v2026 = vld [vmem:[#allocation20 + $0x498] sm:$0xff]
        %v2027 = vld [vmem:[#allocation20 + $0x4a0] sm:$0xff]
        %v2028 = vld [vmem:[#allocation20 + $0x4a8] sm:$0xff]
        %v2029 = vld [vmem:[#allocation20 + $0x4b0] sm:$0xff]
        %v2030 = vld [vmem:[#allocation20 + $0x4b8] sm:$0xff]
        %v2031 = vld [vmem:[#allocation20 + $0x4c0] sm:$0xff]
        %v2032 = vld [vmem:[#allocation20 + $0x4c8] sm:$0xff]
        %v2033 = vld [vmem:[#allocation20 + $0x4d0] sm:$0xff]
        %v2034 = vld [vmem:[#allocation20 + $0x4d8] sm:$0xff]
        %v2035 = vld [vmem:[#allocation20 + $0x4e0] sm:$0xff]
        %v2036 = vld [vmem:[#allocation20 + $0x4e8] sm:$0xff]
        %v2037 = vld [vmem:[#allocation20 + $0x4f0] sm:$0xff]
        %v2038 = vld [vmem:[#allocation20 + $0x4f8] sm:$0xff]
        %v2039 = vld [vmem:[#allocation20 + $0x500] sm:$0xff]
        %v2040 = vld [vmem:[#allocation20 + $0x508] sm:$0xff]
        %v2041 = vld [vmem:[#allocation20 + $0x510] sm:$0xff]
        %v2042 = vld [vmem:[#allocation20 + $0x518] sm:$0xff]
        %v2043 = vld [vmem:[#allocation20 + $0x520] sm:$0xff]
        %v2044 = vld [vmem:[#allocation20 + $0x528] sm:$0xff]
        %v2045 = vld [vmem:[#allocation20 + $0x530] sm:$0xff]
        %v2046 = vld [vmem:[#allocation20 + $0x538] sm:$0xff]
        %v2047 = vld [vmem:[#allocation20 + $0x540] sm:$0xff]
        %v2048 = vld [vmem:[#allocation20 + $0x548] sm:$0xff]
        %v2049 = vld [vmem:[#allocation20 + $0x550] sm:$0xff]
        %v2050 = vld [vmem:[#allocation20 + $0x558] sm:$0xff]
        %v2051 = vld [vmem:[#allocation20 + $0x560] sm:$0xff]
        %v2052 = vld [vmem:[#allocation20 + $0x568] sm:$0xff]
        %v2053 = vld [vmem:[#allocation20 + $0x570] sm:$0xff]
        %v2054 = vld [vmem:[#allocation20 + $0x578] sm:$0xff]
        %v2055 = vld [vmem:[#allocation20 + $0x580] sm:$0xff]
        %v2056 = vld [vmem:[#allocation20 + $0x588] sm:$0xff]
        %v2057 = vld [vmem:[#allocation20 + $0x590] sm:$0xff]
        %v2058 = vld [vmem:[#allocation20 + $0x598] sm:$0xff]
        %v2059 = vld [vmem:[#allocation20 + $0x5a0] sm:$0xff]
        %v2060 = vld [vmem:[#allocation20 + $0x5a8] sm:$0xff]
        %v2061 = vld [vmem:[#allocation20 + $0x5b0] sm:$0xff]
        %v2062 = vld [vmem:[#allocation20 + $0x5b8] sm:$0xff]
        %v2063 = vld [vmem:[#allocation20 + $0x5c0] sm:$0xff]
        %v2064 = vld [vmem:[#allocation20 + $0x5c8] sm:$0xff]
        %v2065 = vld [vmem:[#allocation20 + $0x5d0] sm:$0xff]
        %v2066 = vld [vmem:[#allocation20 + $0x5d8] sm:$0xff]
        %v2067 = vld [vmem:[#allocation20 + $0x5e0] sm:$0xff]
        %v2068 = vld [vmem:[#allocation20 + $0x5e8] sm:$0xff]
        %v2069 = vld [vmem:[#allocation20 + $0x5f0] sm:$0xff]
        %v2070 = vld [vmem:[#allocation20 + $0x5f8] sm:$0xff]
        %v2071 = vld [vmem:[#allocation20 + $0x600] sm:$0xff]
        %v2072 = vld [vmem:[#allocation20 + $0x608] sm:$0xff]
        %v2073 = vld [vmem:[#allocation20 + $0x610] sm:$0xff]
        %v2074 = vld [vmem:[#allocation20 + $0x618] sm:$0xff]
        %v2075 = vld [vmem:[#allocation20 + $0x620] sm:$0xff]
        %v2076 = vld [vmem:[#allocation20 + $0x628] sm:$0xff]
        %v2077 = vld [vmem:[#allocation20 + $0x630] sm:$0xff]
        %v2078 = vld [vmem:[#allocation20 + $0x638] sm:$0xff]
        %v2079 = vld [vmem:[#allocation20 + $0x640] sm:$0xff]
        %v2080 = vld [vmem:[#allocation20 + $0x648] sm:$0xff]
        %v2081 = vld [vmem:[#allocation20 + $0x650] sm:$0xff]
        %v2082 = vld [vmem:[#allocation20 + $0x658] sm:$0xff]
        %v2083 = vld [vmem:[#allocation20 + $0x660] sm:$0xff]
        %v2084 = vld [vmem:[#allocation20 + $0x668] sm:$0xff]
        %v2085 = vld [vmem:[#allocation20 + $0x670] sm:$0xff]
        %v2086 = vld [vmem:[#allocation20 + $0x678] sm:$0xff]
        %v2087 = vld [vmem:[#allocation20 + $0x680] sm:$0xff]
        %v2088 = vld [vmem:[#allocation20 + $0x688] sm:$0xff]
        %v2089 = vld [vmem:[#allocation20 + $0x690] sm:$0xff]
        %v2090 = vld [vmem:[#allocation20 + $0x698] sm:$0xff]
        %v2091 = vld [vmem:[#allocation20 + $0x6a0] sm:$0xff]
        %v2092 = vld [vmem:[#allocation20 + $0x6a8] sm:$0xff]
        %v2093 = vld [vmem:[#allocation20 + $0x6b0] sm:$0xff]
        %v2094 = vld [vmem:[#allocation20 + $0x6b8] sm:$0xff]
        %v2095 = vld [vmem:[#allocation20 + $0x6c0] sm:$0xff]
        %v2096 = vld [vmem:[#allocation20 + $0x6c8] sm:$0xff]
        %v2097 = vld [vmem:[#allocation20 + $0x6d0] sm:$0xff]
        %v2098 = vld [vmem:[#allocation20 + $0x6d8] sm:$0xff]
        %v2099 = vld [vmem:[#allocation20 + $0x6e0] sm:$0xff]
        %v2100 = vld [vmem:[#allocation20 + $0x6e8] sm:$0xff]
        %v2101 = vld [vmem:[#allocation20 + $0x6f0] sm:$0xff]
        %v2102 = vld [vmem:[#allocation20 + $0x6f8] sm:$0xff]
        %v2103 = vld [vmem:[#allocation20 + $0x700] sm:$0xff]
        %v2104 = vld [vmem:[#allocation20 + $0x708] sm:$0xff]
        %v2105 = vld [vmem:[#allocation20 + $0x710] sm:$0xff]
        %v2106 = vld [vmem:[#allocation20 + $0x718] sm:$0xff]
        %v2107 = vld [vmem:[#allocation20 + $0x720] sm:$0xff]
        %v2108 = vld [vmem:[#allocation20 + $0x728] sm:$0xff]
        %v2109 = vld [vmem:[#allocation20 + $0x730] sm:$0xff]
        %v2110 = vld [vmem:[#allocation20 + $0x738] sm:$0xff]
        %v2111 = vld [vmem:[#allocation20 + $0x740] sm:$0xff]
        %v2112 = vld [vmem:[#allocation20 + $0x748] sm:$0xff]
        %v2113 = vld [vmem:[#allocation20 + $0x750] sm:$0xff]
        %v2114 = vld [vmem:[#allocation20 + $0x758] sm:$0xff]
        %v2115 = vld [vmem:[#allocation20 + $0x760] sm:$0xff]
        %v2116 = vld [vmem:[#allocation20 + $0x768] sm:$0xff]
        %v2117 = vld [vmem:[#allocation20 + $0x770] sm:$0xff]
        %v2118 = vld [vmem:[#allocation20 + $0x778] sm:$0xff]
        %v2119 = vld [vmem:[#allocation20 + $0x780] sm:$0xff]
        %v2120 = vld [vmem:[#allocation20 + $0x788] sm:$0xff]
        %v2121 = vld [vmem:[#allocation20 + $0x790] sm:$0xff]
        %v2122 = vld [vmem:[#allocation20 + $0x798] sm:$0xff]
        %v2123 = vld [vmem:[#allocation20 + $0x7a0] sm:$0xff]
        %v2124 = vld [vmem:[#allocation20 + $0x7a8] sm:$0xff]
        %v2125 = vld [vmem:[#allocation20 + $0x7b0] sm:$0xff]
        %v2126 = vld [vmem:[#allocation20 + $0x7b8] sm:$0xff]
        %v2127 = vld [vmem:[#allocation20 + $0x7c0] sm:$0xff]
        %v2128 = vld [vmem:[#allocation20 + $0x7c8] sm:$0xff]
        %v2129 = vld [vmem:[#allocation20 + $0x7d0] sm:$0xff]
        %v2130 = vld [vmem:[#allocation20 + $0x7d8] sm:$0xff]
        %v2131 = vld [vmem:[#allocation20 + $0x7e0] sm:$0xff]
        %v2132 = vld [vmem:[#allocation20 + $0x7e8] sm:$0xff]
        %v2133 = vld [vmem:[#allocation20 + $0x7f0] sm:$0xff]
        %v2134 = vld [vmem:[#allocation20 + $0x7f8] sm:$0xff]
        %v2135 = vld [vmem:[#allocation20 + $0x800] sm:$0xff]
        %v2136 = vld [vmem:[#allocation20 + $0x808] sm:$0xff]
        %v2137 = vld [vmem:[#allocation20 + $0x810] sm:$0xff]
        %v2138 = vld [vmem:[#allocation20 + $0x818] sm:$0xff]
        %v2139 = vld [vmem:[#allocation20 + $0x820] sm:$0xff]
        %v2140 = vld [vmem:[#allocation20 + $0x828] sm:$0xff]
        %v2141 = vld [vmem:[#allocation20 + $0x830] sm:$0xff]
        %v2142 = vld [vmem:[#allocation20 + $0x838] sm:$0xff]
        %v2143 = vld [vmem:[#allocation20 + $0x840] sm:$0xff]
        %v2144 = vld [vmem:[#allocation20 + $0x848] sm:$0xff]
        %v2145 = vld [vmem:[#allocation20 + $0x850] sm:$0xff]
        %v2146 = vld [vmem:[#allocation20 + $0x858] sm:$0xff]
        %v2147 = vld [vmem:[#allocation20 + $0x860] sm:$0xff]
        %v2148 = vld [vmem:[#allocation20 + $0x868] sm:$0xff]
        %v2149 = vld [vmem:[#allocation20 + $0x870] sm:$0xff]
        %v2150 = vld [vmem:[#allocation20 + $0x878] sm:$0xff]
        %v2151 = vld [vmem:[#allocation20 + $0x880] sm:$0xff]
        %v2152 = vld [vmem:[#allocation20 + $0x888] sm:$0xff]
        %v2153 = vld [vmem:[#allocation20 + $0x890] sm:$0xff]
        %v2154 = vld [vmem:[#allocation20 + $0x898] sm:$0xff]
        %v2155 = vld [vmem:[#allocation20 + $0x8a0] sm:$0xff]
        %v2156 = vld [vmem:[#allocation20 + $0x8a8] sm:$0xff]
        %v2157 = vld [vmem:[#allocation20 + $0x8b0] sm:$0xff]
        %v2158 = vld [vmem:[#allocation20 + $0x8b8] sm:$0xff]
        %v2159 = vld [vmem:[#allocation20 + $0x8c0] sm:$0xff]
        %v2160 = vld [vmem:[#allocation20 + $0x8c8] sm:$0xff]
        %v2161 = vld [vmem:[#allocation20 + $0x8d0] sm:$0xff]
        %v2162 = vld [vmem:[#allocation20 + $0x8d8] sm:$0xff]
        %v2163 = vld [vmem:[#allocation20 + $0x8e0] sm:$0xff]
        %v2164 = vld [vmem:[#allocation20 + $0x8e8] sm:$0xff]
        %v2165 = vld [vmem:[#allocation20 + $0x8f0] sm:$0xff]
        %v2166 = vld [vmem:[#allocation20 + $0x8f8] sm:$0xff]
        %v2167 = vld [vmem:[#allocation21] sm:$0xf]
        %v2169 = vlaneseq
        %v2170 = vshrl.u32 %v2169, 7
        %v2171 = vsub.s32 0, %v2170
        %v2172 = vrot.slane %v2167, %v2171
        %v2173 = vlaneseq
        %v2174 = vshrl.u32 %v2173, 7
        %v2175 = vsub.s32 1, %v2174
        %v2176 = vrot.slane %v2167, %v2175
        %v2177 = vlaneseq
        %v2178 = vshrl.u32 %v2177, 7
        %v2179 = vsub.s32 2, %v2178
        %v2180 = vrot.slane %v2167, %v2179
        %v2181 = vlaneseq
        %v2182 = vshrl.u32 %v2181, 7
        %v2183 = vsub.s32 3, %v2182
        %v2184 = vrot.slane %v2167, %v2183
        %v2477 = vunpack.c.l.b16 %v1879
        %v2478 = vunpack.c.h.b16 %v1879
        %v2479 = vunpack.c.l.b16 %v1880
        %v2480 = vunpack.c.h.b16 %v1880
        %v2481 = vunpack.c.l.b16 %v1881
        %v2482 = vunpack.c.h.b16 %v1881
        %v2483 = vunpack.c.l.b16 %v1882
        %v2484 = vunpack.c.h.b16 %v1882
        %v2485 = vunpack.c.l.b16 %v1883
        %v2486 = vunpack.c.h.b16 %v1883
        %v2487 = vunpack.c.l.b16 %v1884
        %v2488 = vunpack.c.h.b16 %v1884
        %v2489 = vunpack.c.l.b16 %v1885
        %v2490 = vunpack.c.h.b16 %v1885
        %v2491 = vunpack.c.l.b16 %v1886
        %v2492 = vunpack.c.h.b16 %v1886
        %v2493 = vunpack.c.l.b16 %v1887
        %v2494 = vunpack.c.h.b16 %v1887
        %v2495 = vunpack.c.l.b16 %v1888
        %v2496 = vunpack.c.h.b16 %v1888
        %v2497 = vunpack.c.l.b16 %v1889
        %v2498 = vunpack.c.h.b16 %v1889
        %v2499 = vunpack.c.l.b16 %v1890
        %v2500 = vunpack.c.h.b16 %v1890
        %v2501 = vunpack.c.l.b16 %v1891
        %v2502 = vunpack.c.h.b16 %v1891
        %v2503 = vunpack.c.l.b16 %v1892
        %v2504 = vunpack.c.h.b16 %v1892
        %v2505 = vunpack.c.l.b16 %v1893
        %v2506 = vunpack.c.h.b16 %v1893
        %v2507 = vunpack.c.l.b16 %v1894
        %v2508 = vunpack.c.h.b16 %v1894
        %v2509 = vunpack.c.l.b16 %v1895
        %v2510 = vunpack.c.h.b16 %v1895
        %v2511 = vunpack.c.l.b16 %v1896
        %v2512 = vunpack.c.h.b16 %v1896
        %v2513 = vunpack.c.l.b16 %v1897
        %v2514 = vunpack.c.h.b16 %v1897
        %v2515 = vunpack.c.l.b16 %v1898
        %v2516 = vunpack.c.h.b16 %v1898
        %v2517 = vunpack.c.l.b16 %v1899
        %v2518 = vunpack.c.h.b16 %v1899
        %v2519 = vunpack.c.l.b16 %v1900
        %v2520 = vunpack.c.h.b16 %v1900
        %v2521 = vunpack.c.l.b16 %v1901
        %v2522 = vunpack.c.h.b16 %v1901
        %v2523 = vunpack.c.l.b16 %v1902
        %v2524 = vunpack.c.h.b16 %v1902
        %v2525 = vunpack.c.l.b16 %v1903
        %v2526 = vunpack.c.h.b16 %v1903
        %v2527 = vunpack.c.l.b16 %v1904
        %v2528 = vunpack.c.h.b16 %v1904
        %v2529 = vunpack.c.l.b16 %v1905
        %v2530 = vunpack.c.h.b16 %v1905
        %v2531 = vunpack.c.l.b16 %v1906
        %v2532 = vunpack.c.h.b16 %v1906
        %v2533 = vunpack.c.l.b16 %v1907
        %v2534 = vunpack.c.h.b16 %v1907
        %v2535 = vunpack.c.l.b16 %v1908
        %v2536 = vunpack.c.h.b16 %v1908
        %v2537 = vunpack.c.l.b16 %v1909
        %v2538 = vunpack.c.h.b16 %v1909
        %v2539 = vunpack.c.l.b16 %v1910
        %v2540 = vunpack.c.h.b16 %v1910
        %v2541 = vunpack.c.l.b16 %v1911
        %v2542 = vunpack.c.h.b16 %v1911
        %v2543 = vunpack.c.l.b16 %v1912
        %v2544 = vunpack.c.h.b16 %v1912
        %v2545 = vunpack.c.l.b16 %v1913
        %v2546 = vunpack.c.h.b16 %v1913
        %v2547 = vunpack.c.l.b16 %v1914
        %v2548 = vunpack.c.h.b16 %v1914
        %v2549 = vunpack.c.l.b16 %v1915
        %v2550 = vunpack.c.h.b16 %v1915
        %v2551 = vunpack.c.l.b16 %v1916
        %v2552 = vunpack.c.h.b16 %v1916
        %v2553 = vunpack.c.l.b16 %v1917
        %v2554 = vunpack.c.h.b16 %v1917
        %v2555 = vunpack.c.l.b16 %v1918
        %v2556 = vunpack.c.h.b16 %v1918
        %v2557 = vunpack.c.l.b16 %v1919
        %v2558 = vunpack.c.h.b16 %v1919
        %v2559 = vunpack.c.l.b16 %v1920
        %v2560 = vunpack.c.h.b16 %v1920
        %v2561 = vunpack.c.l.b16 %v1921
        %v2562 = vunpack.c.h.b16 %v1921
        %v2563 = vunpack.c.l.b16 %v1922
        %v2564 = vunpack.c.h.b16 %v1922
        %v2565 = vunpack.c.l.b16 %v1923
        %v2566 = vunpack.c.h.b16 %v1923
        %v2567 = vunpack.c.l.b16 %v1924
        %v2568 = vunpack.c.h.b16 %v1924
        %v2569 = vunpack.c.l.b16 %v1925
        %v2570 = vunpack.c.h.b16 %v1925
        %v2571 = vunpack.c.l.b16 %v1926
        %v2572 = vunpack.c.h.b16 %v1926
        %v2573 = vunpack.c.l.b16 %v1927
        %v2574 = vunpack.c.h.b16 %v1927
        %v2575 = vunpack.c.l.b16 %v1928
        %v2576 = vunpack.c.h.b16 %v1928
        %v2577 = vunpack.c.l.b16 %v1929
        %v2578 = vunpack.c.h.b16 %v1929
        %v2579 = vunpack.c.l.b16 %v1930
        %v2580 = vunpack.c.h.b16 %v1930
        %v2581 = vunpack.c.l.b16 %v1931
        %v2582 = vunpack.c.h.b16 %v1931
        %v2583 = vunpack.c.l.b16 %v1932
        %v2584 = vunpack.c.h.b16 %v1932
        %v2585 = vunpack.c.l.b16 %v1933
        %v2586 = vunpack.c.h.b16 %v1933
        %v2587 = vunpack.c.l.b16 %v1934
        %v2588 = vunpack.c.h.b16 %v1934
        %v2589 = vunpack.c.l.b16 %v1935
        %v2590 = vunpack.c.h.b16 %v1935
        %v2591 = vunpack.c.l.b16 %v1936
        %v2592 = vunpack.c.h.b16 %v1936
        %v2593 = vunpack.c.l.b16 %v1937
        %v2594 = vunpack.c.h.b16 %v1937
        %v2595 = vunpack.c.l.b16 %v1938
        %v2596 = vunpack.c.h.b16 %v1938
        %v2597 = vunpack.c.l.b16 %v1939
        %v2598 = vunpack.c.h.b16 %v1939
        %v2599 = vunpack.c.l.b16 %v1940
        %v2600 = vunpack.c.h.b16 %v1940
        %v2601 = vunpack.c.l.b16 %v1941
        %v2602 = vunpack.c.h.b16 %v1941
        %v2603 = vunpack.c.l.b16 %v1942
        %v2604 = vunpack.c.h.b16 %v1942
        %v2605 = vunpack.c.l.b16 %v1943
        %v2606 = vunpack.c.h.b16 %v1943
        %v2607 = vunpack.c.l.b16 %v1944
        %v2608 = vunpack.c.h.b16 %v1944
        %v2609 = vunpack.c.l.b16 %v1945
        %v2610 = vunpack.c.h.b16 %v1945
        %v2611 = vunpack.c.l.b16 %v1946
        %v2612 = vunpack.c.h.b16 %v1946
        %v2613 = vunpack.c.l.b16 %v1947
        %v2614 = vunpack.c.h.b16 %v1947
        %v2615 = vunpack.c.l.b16 %v1948
        %v2616 = vunpack.c.h.b16 %v1948
        %v2617 = vunpack.c.l.b16 %v1949
        %v2618 = vunpack.c.h.b16 %v1949
        %v2619 = vunpack.c.l.b16 %v1950
        %v2620 = vunpack.c.h.b16 %v1950
        %v2621 = vunpack.c.l.b16 %v1951
        %v2622 = vunpack.c.h.b16 %v1951
        %v2623 = vunpack.c.l.b16 %v1952
        %v2624 = vunpack.c.h.b16 %v1952
        %v2625 = vunpack.c.l.b16 %v1953
        %v2626 = vunpack.c.h.b16 %v1953
        %v2627 = vunpack.c.l.b16 %v1954
        %v2628 = vunpack.c.h.b16 %v1954
        %v2629 = vunpack.c.l.b16 %v1955
        %v2630 = vunpack.c.h.b16 %v1955
        %v2631 = vunpack.c.l.b16 %v1956
        %v2632 = vunpack.c.h.b16 %v1956
        %v2633 = vunpack.c.l.b16 %v1957
        %v2634 = vunpack.c.h.b16 %v1957
        %v2635 = vunpack.c.l.b16 %v1958
        %v2636 = vunpack.c.h.b16 %v1958
        %v2637 = vunpack.c.l.b16 %v1959
        %v2638 = vunpack.c.h.b16 %v1959
        %v2639 = vunpack.c.l.b16 %v1960
        %v2640 = vunpack.c.h.b16 %v1960
        %v2641 = vunpack.c.l.b16 %v1961
        %v2642 = vunpack.c.h.b16 %v1961
        %v2643 = vunpack.c.l.b16 %v1962
        %v2644 = vunpack.c.h.b16 %v1962
        %v2645 = vunpack.c.l.b16 %v1963
        %v2646 = vunpack.c.h.b16 %v1963
        %v2647 = vunpack.c.l.b16 %v1964
        %v2648 = vunpack.c.h.b16 %v1964
        %v2649 = vunpack.c.l.b16 %v1965
        %v2650 = vunpack.c.h.b16 %v1965
        %v2651 = vunpack.c.l.b16 %v1966
        %v2652 = vunpack.c.h.b16 %v1966
        %v2653 = vunpack.c.l.b16 %v1967
        %v2654 = vunpack.c.h.b16 %v1967
        %v2655 = vunpack.c.l.b16 %v1968
        %v2656 = vunpack.c.h.b16 %v1968
        %v2657 = vunpack.c.l.b16 %v1969
        %v2658 = vunpack.c.h.b16 %v1969
        %v2659 = vunpack.c.l.b16 %v1970
        %v2660 = vunpack.c.h.b16 %v1970
        %v2661 = vunpack.c.l.b16 %v1971
        %v2662 = vunpack.c.h.b16 %v1971
        %v2663 = vunpack.c.l.b16 %v1972
        %v2664 = vunpack.c.h.b16 %v1972
        %v2665 = vunpack.c.l.b16 %v1973
        %v2666 = vunpack.c.h.b16 %v1973
        %v2667 = vunpack.c.l.b16 %v1974
        %v2668 = vunpack.c.h.b16 %v1974
        %v2669 = vunpack.c.l.b16 %v1975
        %v2670 = vunpack.c.h.b16 %v1975
        %v2671 = vunpack.c.l.b16 %v1976
        %v2672 = vunpack.c.h.b16 %v1976
        %v2673 = vunpack.c.l.b16 %v1977
        %v2674 = vunpack.c.h.b16 %v1977
        %v2675 = vunpack.c.l.b16 %v1978
        %v2676 = vunpack.c.h.b16 %v1978
        %v2677 = vunpack.c.l.b16 %v1979
        %v2678 = vunpack.c.h.b16 %v1979
        %v2679 = vunpack.c.l.b16 %v1980
        %v2680 = vunpack.c.h.b16 %v1980
        %v2681 = vunpack.c.l.b16 %v1981
        %v2682 = vunpack.c.h.b16 %v1981
        %v2683 = vunpack.c.l.b16 %v1982
        %v2684 = vunpack.c.h.b16 %v1982
        %v2685 = vunpack.c.l.b16 %v1983
        %v2686 = vunpack.c.h.b16 %v1983
        %v2687 = vunpack.c.l.b16 %v1984
        %v2688 = vunpack.c.h.b16 %v1984
        %v2689 = vunpack.c.l.b16 %v1985
        %v2690 = vunpack.c.h.b16 %v1985
        %v2691 = vunpack.c.l.b16 %v1986
        %v2692 = vunpack.c.h.b16 %v1986
        %v2693 = vunpack.c.l.b16 %v1987
        %v2694 = vunpack.c.h.b16 %v1987
        %v2695 = vunpack.c.l.b16 %v1988
        %v2696 = vunpack.c.h.b16 %v1988
        %v2697 = vunpack.c.l.b16 %v1989
        %v2698 = vunpack.c.h.b16 %v1989
        %v2699 = vunpack.c.l.b16 %v1990
        %v2700 = vunpack.c.h.b16 %v1990
        %v2701 = vunpack.c.l.b16 %v1991
        %v2702 = vunpack.c.h.b16 %v1991
        %v2703 = vunpack.c.l.b16 %v1992
        %v2704 = vunpack.c.h.b16 %v1992
        %v2705 = vunpack.c.l.b16 %v1993
        %v2706 = vunpack.c.h.b16 %v1993
        %v2707 = vunpack.c.l.b16 %v1994
        %v2708 = vunpack.c.h.b16 %v1994
        %v2709 = vunpack.c.l.b16 %v1995
        %v2710 = vunpack.c.h.b16 %v1995
        %v2711 = vunpack.c.l.b16 %v1996
        %v2712 = vunpack.c.h.b16 %v1996
        %v2713 = vunpack.c.l.b16 %v1997
        %v2714 = vunpack.c.h.b16 %v1997
        %v2715 = vunpack.c.l.b16 %v1998
        %v2716 = vunpack.c.h.b16 %v1998
        %v2717 = vunpack.c.l.b16 %v1999
        %v2718 = vunpack.c.h.b16 %v1999
        %v2719 = vunpack.c.l.b16 %v2000
        %v2720 = vunpack.c.h.b16 %v2000
        %v2721 = vunpack.c.l.b16 %v2001
        %v2722 = vunpack.c.h.b16 %v2001
        %v2723 = vunpack.c.l.b16 %v2002
        %v2724 = vunpack.c.h.b16 %v2002
        %v2725 = vunpack.c.l.b16 %v2003
        %v2726 = vunpack.c.h.b16 %v2003
        %v2727 = vunpack.c.l.b16 %v2004
        %v2728 = vunpack.c.h.b16 %v2004
        %v2729 = vunpack.c.l.b16 %v2005
        %v2730 = vunpack.c.h.b16 %v2005
        %v2731 = vunpack.c.l.b16 %v2006
        %v2732 = vunpack.c.h.b16 %v2006
        %v2733 = vunpack.c.l.b16 %v2007
        %v2734 = vunpack.c.h.b16 %v2007
        %v2735 = vunpack.c.l.b16 %v2008
        %v2736 = vunpack.c.h.b16 %v2008
        %v2737 = vunpack.c.l.b16 %v2009
        %v2738 = vunpack.c.h.b16 %v2009
        %v2739 = vunpack.c.l.b16 %v2010
        %v2740 = vunpack.c.h.b16 %v2010
        %v2741 = vunpack.c.l.b16 %v2011
        %v2742 = vunpack.c.h.b16 %v2011
        %v2743 = vunpack.c.l.b16 %v2012
        %v2744 = vunpack.c.h.b16 %v2012
        %v2745 = vunpack.c.l.b16 %v2013
        %v2746 = vunpack.c.h.b16 %v2013
        %v2747 = vunpack.c.l.b16 %v2014
        %v2748 = vunpack.c.h.b16 %v2014
        %v2749 = vunpack.c.l.b16 %v2015
        %v2750 = vunpack.c.h.b16 %v2015
        %v2751 = vunpack.c.l.b16 %v2016
        %v2752 = vunpack.c.h.b16 %v2016
        %v2753 = vunpack.c.l.b16 %v2017
        %v2754 = vunpack.c.h.b16 %v2017
        %v2755 = vunpack.c.l.b16 %v2018
        %v2756 = vunpack.c.h.b16 %v2018
        %v2757 = vunpack.c.l.b16 %v2019
        %v2758 = vunpack.c.h.b16 %v2019
        %v2759 = vunpack.c.l.b16 %v2020
        %v2760 = vunpack.c.h.b16 %v2020
        %v2761 = vunpack.c.l.b16 %v2021
        %v2762 = vunpack.c.h.b16 %v2021
        %v2763 = vunpack.c.l.b16 %v2022
        %v2764 = vunpack.c.h.b16 %v2022
        %v2765 = vunpack.c.l.b16 %v2023
        %v2766 = vunpack.c.h.b16 %v2023
        %v2767 = vunpack.c.l.b16 %v2024
        %v2768 = vunpack.c.h.b16 %v2024
        %v2769 = vunpack.c.l.b16 %v2025
        %v2770 = vunpack.c.h.b16 %v2025
        %v2771 = vunpack.c.l.b16 %v2026
        %v2772 = vunpack.c.h.b16 %v2026
        %v2773 = vunpack.c.l.b16 %v2027
        %v2774 = vunpack.c.h.b16 %v2027
        %v2775 = vunpack.c.l.b16 %v2028
        %v2776 = vunpack.c.h.b16 %v2028
        %v2777 = vunpack.c.l.b16 %v2029
        %v2778 = vunpack.c.h.b16 %v2029
        %v2779 = vunpack.c.l.b16 %v2030
        %v2780 = vunpack.c.h.b16 %v2030
        %v2781 = vunpack.c.l.b16 %v2031
        %v2782 = vunpack.c.h.b16 %v2031
        %v2783 = vunpack.c.l.b16 %v2032
        %v2784 = vunpack.c.h.b16 %v2032
        %v2785 = vunpack.c.l.b16 %v2033
        %v2786 = vunpack.c.h.b16 %v2033
        %v2787 = vunpack.c.l.b16 %v2034
        %v2788 = vunpack.c.h.b16 %v2034
        %v2789 = vunpack.c.l.b16 %v2035
        %v2790 = vunpack.c.h.b16 %v2035
        %v2791 = vunpack.c.l.b16 %v2036
        %v2792 = vunpack.c.h.b16 %v2036
        %v2793 = vunpack.c.l.b16 %v2037
        %v2794 = vunpack.c.h.b16 %v2037
        %v2795 = vunpack.c.l.b16 %v2038
        %v2796 = vunpack.c.h.b16 %v2038
        %v2797 = vunpack.c.l.b16 %v2039
        %v2798 = vunpack.c.h.b16 %v2039
        %v2799 = vunpack.c.l.b16 %v2040
        %v2800 = vunpack.c.h.b16 %v2040
        %v2801 = vunpack.c.l.b16 %v2041
        %v2802 = vunpack.c.h.b16 %v2041
        %v2803 = vunpack.c.l.b16 %v2042
        %v2804 = vunpack.c.h.b16 %v2042
        %v2805 = vunpack.c.l.b16 %v2043
        %v2806 = vunpack.c.h.b16 %v2043
        %v2807 = vunpack.c.l.b16 %v2044
        %v2808 = vunpack.c.h.b16 %v2044
        %v2809 = vunpack.c.l.b16 %v2045
        %v2810 = vunpack.c.h.b16 %v2045
        %v2811 = vunpack.c.l.b16 %v2046
        %v2812 = vunpack.c.h.b16 %v2046
        %v2813 = vunpack.c.l.b16 %v2047
        %v2814 = vunpack.c.h.b16 %v2047
        %v2815 = vunpack.c.l.b16 %v2048
        %v2816 = vunpack.c.h.b16 %v2048
        %v2817 = vunpack.c.l.b16 %v2049
        %v2818 = vunpack.c.h.b16 %v2049
        %v2819 = vunpack.c.l.b16 %v2050
        %v2820 = vunpack.c.h.b16 %v2050
        %v2821 = vunpack.c.l.b16 %v2051
        %v2822 = vunpack.c.h.b16 %v2051
        %v2823 = vunpack.c.l.b16 %v2052
        %v2824 = vunpack.c.h.b16 %v2052
        %v2825 = vunpack.c.l.b16 %v2053
        %v2826 = vunpack.c.h.b16 %v2053
        %v2827 = vunpack.c.l.b16 %v2054
        %v2828 = vunpack.c.h.b16 %v2054
        %v2829 = vunpack.c.l.b16 %v2055
        %v2830 = vunpack.c.h.b16 %v2055
        %v2831 = vunpack.c.l.b16 %v2056
        %v2832 = vunpack.c.h.b16 %v2056
        %v2833 = vunpack.c.l.b16 %v2057
        %v2834 = vunpack.c.h.b16 %v2057
        %v2835 = vunpack.c.l.b16 %v2058
        %v2836 = vunpack.c.h.b16 %v2058
        %v2837 = vunpack.c.l.b16 %v2059
        %v2838 = vunpack.c.h.b16 %v2059
        %v2839 = vunpack.c.l.b16 %v2060
        %v2840 = vunpack.c.h.b16 %v2060
        %v2841 = vunpack.c.l.b16 %v2061
        %v2842 = vunpack.c.h.b16 %v2061
        %v2843 = vunpack.c.l.b16 %v2062
        %v2844 = vunpack.c.h.b16 %v2062
        %v2845 = vunpack.c.l.b16 %v2063
        %v2846 = vunpack.c.h.b16 %v2063
        %v2847 = vunpack.c.l.b16 %v2064
        %v2848 = vunpack.c.h.b16 %v2064
        %v2849 = vunpack.c.l.b16 %v2065
        %v2850 = vunpack.c.h.b16 %v2065
        %v2851 = vunpack.c.l.b16 %v2066
        %v2852 = vunpack.c.h.b16 %v2066
        %v2853 = vunpack.c.l.b16 %v2067
        %v2854 = vunpack.c.h.b16 %v2067
        %v2855 = vunpack.c.l.b16 %v2068
        %v2856 = vunpack.c.h.b16 %v2068
        %v2857 = vunpack.c.l.b16 %v2069
        %v2858 = vunpack.c.h.b16 %v2069
        %v2859 = vunpack.c.l.b16 %v2070
        %v2860 = vunpack.c.h.b16 %v2070
        %v2861 = vunpack.c.l.b16 %v2071
        %v2862 = vunpack.c.h.b16 %v2071
        %v2863 = vunpack.c.l.b16 %v2072
        %v2864 = vunpack.c.h.b16 %v2072
        %v2865 = vunpack.c.l.b16 %v2073
        %v2866 = vunpack.c.h.b16 %v2073
        %v2867 = vunpack.c.l.b16 %v2074
        %v2868 = vunpack.c.h.b16 %v2074
        %v2869 = vunpack.c.l.b16 %v2075
        %v2870 = vunpack.c.h.b16 %v2075
        %v2871 = vunpack.c.l.b16 %v2076
        %v2872 = vunpack.c.h.b16 %v2076
        %v2873 = vunpack.c.l.b16 %v2077
        %v2874 = vunpack.c.h.b16 %v2077
        %v2875 = vunpack.c.l.b16 %v2078
        %v2876 = vunpack.c.h.b16 %v2078
        %v2877 = vunpack.c.l.b16 %v2079
        %v2878 = vunpack.c.h.b16 %v2079
        %v2879 = vunpack.c.l.b16 %v2080
        %v2880 = vunpack.c.h.b16 %v2080
        %v2881 = vunpack.c.l.b16 %v2081
        %v2882 = vunpack.c.h.b16 %v2081
        %v2883 = vunpack.c.l.b16 %v2082
        %v2884 = vunpack.c.h.b16 %v2082
        %v2885 = vunpack.c.l.b16 %v2083
        %v2886 = vunpack.c.h.b16 %v2083
        %v2887 = vunpack.c.l.b16 %v2084
        %v2888 = vunpack.c.h.b16 %v2084
        %v2889 = vunpack.c.l.b16 %v2085
        %v2890 = vunpack.c.h.b16 %v2085
        %v2891 = vunpack.c.l.b16 %v2086
        %v2892 = vunpack.c.h.b16 %v2086
        %v2893 = vunpack.c.l.b16 %v2087
        %v2894 = vunpack.c.h.b16 %v2087
        %v2895 = vunpack.c.l.b16 %v2088
        %v2896 = vunpack.c.h.b16 %v2088
        %v2897 = vunpack.c.l.b16 %v2089
        %v2898 = vunpack.c.h.b16 %v2089
        %v2899 = vunpack.c.l.b16 %v2090
        %v2900 = vunpack.c.h.b16 %v2090
        %v2901 = vunpack.c.l.b16 %v2091
        %v2902 = vunpack.c.h.b16 %v2091
        %v2903 = vunpack.c.l.b16 %v2092
        %v2904 = vunpack.c.h.b16 %v2092
        %v2905 = vunpack.c.l.b16 %v2093
        %v2906 = vunpack.c.h.b16 %v2093
        %v2907 = vunpack.c.l.b16 %v2094
        %v2908 = vunpack.c.h.b16 %v2094
        %v2909 = vunpack.c.l.b16 %v2095
        %v2910 = vunpack.c.h.b16 %v2095
        %v2911 = vunpack.c.l.b16 %v2096
        %v2912 = vunpack.c.h.b16 %v2096
        %v2913 = vunpack.c.l.b16 %v2097
        %v2914 = vunpack.c.h.b16 %v2097
        %v2915 = vunpack.c.l.b16 %v2098
        %v2916 = vunpack.c.h.b16 %v2098
        %v2917 = vunpack.c.l.b16 %v2099
        %v2918 = vunpack.c.h.b16 %v2099
        %v2919 = vunpack.c.l.b16 %v2100
        %v2920 = vunpack.c.h.b16 %v2100
        %v2921 = vunpack.c.l.b16 %v2101
        %v2922 = vunpack.c.h.b16 %v2101
        %v2923 = vunpack.c.l.b16 %v2102
        %v2924 = vunpack.c.h.b16 %v2102
        %v2925 = vunpack.c.l.b16 %v2103
        %v2926 = vunpack.c.h.b16 %v2103
        %v2927 = vunpack.c.l.b16 %v2104
        %v2928 = vunpack.c.h.b16 %v2104
        %v2929 = vunpack.c.l.b16 %v2105
        %v2930 = vunpack.c.h.b16 %v2105
        %v2931 = vunpack.c.l.b16 %v2106
        %v2932 = vunpack.c.h.b16 %v2106
        %v2933 = vunpack.c.l.b16 %v2107
        %v2934 = vunpack.c.h.b16 %v2107
        %v2935 = vunpack.c.l.b16 %v2108
        %v2936 = vunpack.c.h.b16 %v2108
        %v2937 = vunpack.c.l.b16 %v2109
        %v2938 = vunpack.c.h.b16 %v2109
        %v2939 = vunpack.c.l.b16 %v2110
        %v2940 = vunpack.c.h.b16 %v2110
        %v2941 = vunpack.c.l.b16 %v2111
        %v2942 = vunpack.c.h.b16 %v2111
        %v2943 = vunpack.c.l.b16 %v2112
        %v2944 = vunpack.c.h.b16 %v2112
        %v2945 = vunpack.c.l.b16 %v2113
        %v2946 = vunpack.c.h.b16 %v2113
        %v2947 = vunpack.c.l.b16 %v2114
        %v2948 = vunpack.c.h.b16 %v2114
        %v2949 = vunpack.c.l.b16 %v2115
        %v2950 = vunpack.c.h.b16 %v2115
        %v2951 = vunpack.c.l.b16 %v2116
        %v2952 = vunpack.c.h.b16 %v2116
        %v2953 = vunpack.c.l.b16 %v2117
        %v2954 = vunpack.c.h.b16 %v2117
        %v2955 = vunpack.c.l.b16 %v2118
        %v2956 = vunpack.c.h.b16 %v2118
        %v2957 = vunpack.c.l.b16 %v2119
        %v2958 = vunpack.c.h.b16 %v2119
        %v2959 = vunpack.c.l.b16 %v2120
        %v2960 = vunpack.c.h.b16 %v2120
        %v2961 = vunpack.c.l.b16 %v2121
        %v2962 = vunpack.c.h.b16 %v2121
        %v2963 = vunpack.c.l.b16 %v2122
        %v2964 = vunpack.c.h.b16 %v2122
        %v2965 = vunpack.c.l.b16 %v2123
        %v2966 = vunpack.c.h.b16 %v2123
        %v2967 = vunpack.c.l.b16 %v2124
        %v2968 = vunpack.c.h.b16 %v2124
        %v2969 = vunpack.c.l.b16 %v2125
        %v2970 = vunpack.c.h.b16 %v2125
        %v2971 = vunpack.c.l.b16 %v2126
        %v2972 = vunpack.c.h.b16 %v2126
        %v2973 = vunpack.c.l.b16 %v2127
        %v2974 = vunpack.c.h.b16 %v2127
        %v2975 = vunpack.c.l.b16 %v2128
        %v2976 = vunpack.c.h.b16 %v2128
        %v2977 = vunpack.c.l.b16 %v2129
        %v2978 = vunpack.c.h.b16 %v2129
        %v2979 = vunpack.c.l.b16 %v2130
        %v2980 = vunpack.c.h.b16 %v2130
        %v2981 = vunpack.c.l.b16 %v2131
        %v2982 = vunpack.c.h.b16 %v2131
        %v2983 = vunpack.c.l.b16 %v2132
        %v2984 = vunpack.c.h.b16 %v2132
        %v2985 = vunpack.c.l.b16 %v2133
        %v2986 = vunpack.c.h.b16 %v2133
        %v2987 = vunpack.c.l.b16 %v2134
        %v2988 = vunpack.c.h.b16 %v2134
        %v2989 = vunpack.c.l.b16 %v2135
        %v2990 = vunpack.c.h.b16 %v2135
        %v2991 = vunpack.c.l.b16 %v2136
        %v2992 = vunpack.c.h.b16 %v2136
        %v2993 = vunpack.c.l.b16 %v2137
        %v2994 = vunpack.c.h.b16 %v2137
        %v2995 = vunpack.c.l.b16 %v2138
        %v2996 = vunpack.c.h.b16 %v2138
        %v2997 = vunpack.c.l.b16 %v2139
        %v2998 = vunpack.c.h.b16 %v2139
        %v2999 = vunpack.c.l.b16 %v2140
        %v3000 = vunpack.c.h.b16 %v2140
        %v3001 = vunpack.c.l.b16 %v2141
        %v3002 = vunpack.c.h.b16 %v2141
        %v3003 = vunpack.c.l.b16 %v2142
        %v3004 = vunpack.c.h.b16 %v2142
        %v3005 = vunpack.c.l.b16 %v2143
        %v3006 = vunpack.c.h.b16 %v2143
        %v3007 = vunpack.c.l.b16 %v2144
        %v3008 = vunpack.c.h.b16 %v2144
        %v3009 = vunpack.c.l.b16 %v2145
        %v3010 = vunpack.c.h.b16 %v2145
        %v3011 = vunpack.c.l.b16 %v2146
        %v3012 = vunpack.c.h.b16 %v2146
        %v3013 = vunpack.c.l.b16 %v2147
        %v3014 = vunpack.c.h.b16 %v2147
        %v3015 = vunpack.c.l.b16 %v2148
        %v3016 = vunpack.c.h.b16 %v2148
        %v3017 = vunpack.c.l.b16 %v2149
        %v3018 = vunpack.c.h.b16 %v2149
        %v3019 = vunpack.c.l.b16 %v2150
        %v3020 = vunpack.c.h.b16 %v2150
        %v3021 = vunpack.c.l.b16 %v2151
        %v3022 = vunpack.c.h.b16 %v2151
        %v3023 = vunpack.c.l.b16 %v2152
        %v3024 = vunpack.c.h.b16 %v2152
        %v3025 = vunpack.c.l.b16 %v2153
        %v3026 = vunpack.c.h.b16 %v2153
        %v3027 = vunpack.c.l.b16 %v2154
        %v3028 = vunpack.c.h.b16 %v2154
        %v3029 = vunpack.c.l.b16 %v2155
        %v3030 = vunpack.c.h.b16 %v2155
        %v3031 = vunpack.c.l.b16 %v2156
        %v3032 = vunpack.c.h.b16 %v2156
        %v3033 = vunpack.c.l.b16 %v2157
        %v3034 = vunpack.c.h.b16 %v2157
        %v3035 = vunpack.c.l.b16 %v2158
        %v3036 = vunpack.c.h.b16 %v2158
        %v3037 = vunpack.c.l.b16 %v2159
        %v3038 = vunpack.c.h.b16 %v2159
        %v3039 = vunpack.c.l.b16 %v2160
        %v3040 = vunpack.c.h.b16 %v2160
        %v3041 = vunpack.c.l.b16 %v2161
        %v3042 = vunpack.c.h.b16 %v2161
        %v3043 = vunpack.c.l.b16 %v2162
        %v3044 = vunpack.c.h.b16 %v2162
        %v3045 = vunpack.c.l.b16 %v2163
        %v3046 = vunpack.c.h.b16 %v2163
        %v3047 = vunpack.c.l.b16 %v2164
        %v3048 = vunpack.c.h.b16 %v2164
        %v3049 = vunpack.c.l.b16 %v2165
        %v3050 = vunpack.c.h.b16 %v2165
        %v3051 = vunpack.c.l.b16 %v2166
        %v3052 = vunpack.c.h.b16 %v2166
        %v3053 = vpack.c.b16 %v2481, %v2477
        %v3054 = vpack.c.b16 %v2482, %v2478
        %v3055 = vpack.c.b16 %v2483, %v2479
        %v3056 = vpack.c.b16 %v2484, %v2480
        %v3057 = vpack.c.b16 %v2489, %v2485
        %v3058 = vpack.c.b16 %v2490, %v2486
        %v3059 = vpack.c.b16 %v2491, %v2487
        %v3060 = vpack.c.b16 %v2492, %v2488
        %v3061 = vpack.c.b16 %v2497, %v2493
        %v3062 = vpack.c.b16 %v2498, %v2494
        %v3063 = vpack.c.b16 %v2499, %v2495
        %v3064 = vpack.c.b16 %v2500, %v2496
        %v3065 = vpack.c.b16 %v2505, %v2501
        %v3066 = vpack.c.b16 %v2506, %v2502
        %v3067 = vpack.c.b16 %v2507, %v2503
        %v3068 = vpack.c.b16 %v2508, %v2504
        %v3069 = vpack.c.b16 %v2513, %v2509
        %v3070 = vpack.c.b16 %v2514, %v2510
        %v3071 = vpack.c.b16 %v2515, %v2511
        %v3072 = vpack.c.b16 %v2516, %v2512
        %v3073 = vpack.c.b16 %v2521, %v2517
        %v3074 = vpack.c.b16 %v2522, %v2518
        %v3075 = vpack.c.b16 %v2523, %v2519
        %v3076 = vpack.c.b16 %v2524, %v2520
        %v3077 = vpack.c.b16 %v2529, %v2525
        %v3078 = vpack.c.b16 %v2530, %v2526
        %v3079 = vpack.c.b16 %v2531, %v2527
        %v3080 = vpack.c.b16 %v2532, %v2528
        %v3081 = vpack.c.b16 %v2537, %v2533
        %v3082 = vpack.c.b16 %v2538, %v2534
        %v3083 = vpack.c.b16 %v2539, %v2535
        %v3084 = vpack.c.b16 %v2540, %v2536
        %v3085 = vpack.c.b16 %v2545, %v2541
        %v3086 = vpack.c.b16 %v2546, %v2542
        %v3087 = vpack.c.b16 %v2547, %v2543
        %v3088 = vpack.c.b16 %v2548, %v2544
        %v3089 = vpack.c.b16 %v2553, %v2549
        %v3090 = vpack.c.b16 %v2554, %v2550
        %v3091 = vpack.c.b16 %v2555, %v2551
        %v3092 = vpack.c.b16 %v2556, %v2552
        %v3093 = vpack.c.b16 %v2561, %v2557
        %v3094 = vpack.c.b16 %v2562, %v2558
        %v3095 = vpack.c.b16 %v2563, %v2559
        %v3096 = vpack.c.b16 %v2564, %v2560
        %v3097 = vpack.c.b16 %v2569, %v2565
        %v3098 = vpack.c.b16 %v2570, %v2566
        %v3099 = vpack.c.b16 %v2571, %v2567
        %v3100 = vpack.c.b16 %v2572, %v2568
        %v3101 = vpack.c.b16 %v2577, %v2573
        %v3102 = vpack.c.b16 %v2578, %v2574
        %v3103 = vpack.c.b16 %v2579, %v2575
        %v3104 = vpack.c.b16 %v2580, %v2576
        %v3105 = vpack.c.b16 %v2585, %v2581
        %v3106 = vpack.c.b16 %v2586, %v2582
        %v3107 = vpack.c.b16 %v2587, %v2583
        %v3108 = vpack.c.b16 %v2588, %v2584
        %v3109 = vpack.c.b16 %v2593, %v2589
        %v3110 = vpack.c.b16 %v2594, %v2590
        %v3111 = vpack.c.b16 %v2595, %v2591
        %v3112 = vpack.c.b16 %v2596, %v2592
        %v3113 = vpack.c.b16 %v2601, %v2597
        %v3114 = vpack.c.b16 %v2602, %v2598
        %v3115 = vpack.c.b16 %v2603, %v2599
        %v3116 = vpack.c.b16 %v2604, %v2600
        %v3117 = vpack.c.b16 %v2609, %v2605
        %v3118 = vpack.c.b16 %v2610, %v2606
        %v3119 = vpack.c.b16 %v2611, %v2607
        %v3120 = vpack.c.b16 %v2612, %v2608
        %v3121 = vpack.c.b16 %v2617, %v2613
        %v3122 = vpack.c.b16 %v2618, %v2614
        %v3123 = vpack.c.b16 %v2619, %v2615
        %v3124 = vpack.c.b16 %v2620, %v2616
        %v3125 = vpack.c.b16 %v2625, %v2621
        %v3126 = vpack.c.b16 %v2626, %v2622
        %v3127 = vpack.c.b16 %v2627, %v2623
        %v3128 = vpack.c.b16 %v2628, %v2624
        %v3129 = vpack.c.b16 %v2633, %v2629
        %v3130 = vpack.c.b16 %v2634, %v2630
        %v3131 = vpack.c.b16 %v2635, %v2631
        %v3132 = vpack.c.b16 %v2636, %v2632
        %v3133 = vpack.c.b16 %v2641, %v2637
        %v3134 = vpack.c.b16 %v2642, %v2638
        %v3135 = vpack.c.b16 %v2643, %v2639
        %v3136 = vpack.c.b16 %v2644, %v2640
        %v3137 = vpack.c.b16 %v2649, %v2645
        %v3138 = vpack.c.b16 %v2650, %v2646
        %v3139 = vpack.c.b16 %v2651, %v2647
        %v3140 = vpack.c.b16 %v2652, %v2648
        %v3141 = vpack.c.b16 %v2657, %v2653
        %v3142 = vpack.c.b16 %v2658, %v2654
        %v3143 = vpack.c.b16 %v2659, %v2655
        %v3144 = vpack.c.b16 %v2660, %v2656
        %v3145 = vpack.c.b16 %v2665, %v2661
        %v3146 = vpack.c.b16 %v2666, %v2662
        %v3147 = vpack.c.b16 %v2667, %v2663
        %v3148 = vpack.c.b16 %v2668, %v2664
        %v3149 = vpack.c.b16 %v2673, %v2669
        %v3150 = vpack.c.b16 %v2674, %v2670
        %v3151 = vpack.c.b16 %v2675, %v2671
        %v3152 = vpack.c.b16 %v2676, %v2672
        %v3153 = vpack.c.b16 %v2681, %v2677
        %v3154 = vpack.c.b16 %v2682, %v2678
        %v3155 = vpack.c.b16 %v2683, %v2679
        %v3156 = vpack.c.b16 %v2684, %v2680
        %v3157 = vpack.c.b16 %v2689, %v2685
        %v3158 = vpack.c.b16 %v2690, %v2686
        %v3159 = vpack.c.b16 %v2691, %v2687
        %v3160 = vpack.c.b16 %v2692, %v2688
        %v3161 = vpack.c.b16 %v2697, %v2693
        %v3162 = vpack.c.b16 %v2698, %v2694
        %v3163 = vpack.c.b16 %v2699, %v2695
        %v3164 = vpack.c.b16 %v2700, %v2696
        %v3165 = vpack.c.b16 %v2705, %v2701
        %v3166 = vpack.c.b16 %v2706, %v2702
        %v3167 = vpack.c.b16 %v2707, %v2703
        %v3168 = vpack.c.b16 %v2708, %v2704
        %v3169 = vpack.c.b16 %v2713, %v2709
        %v3170 = vpack.c.b16 %v2714, %v2710
        %v3171 = vpack.c.b16 %v2715, %v2711
        %v3172 = vpack.c.b16 %v2716, %v2712
        %v3173 = vpack.c.b16 %v2721, %v2717
        %v3174 = vpack.c.b16 %v2722, %v2718
        %v3175 = vpack.c.b16 %v2723, %v2719
        %v3176 = vpack.c.b16 %v2724, %v2720
        %v3177 = vpack.c.b16 %v2729, %v2725
        %v3178 = vpack.c.b16 %v2730, %v2726
        %v3179 = vpack.c.b16 %v2731, %v2727
        %v3180 = vpack.c.b16 %v2732, %v2728
        %v3181 = vpack.c.b16 %v2737, %v2733
        %v3182 = vpack.c.b16 %v2738, %v2734
        %v3183 = vpack.c.b16 %v2739, %v2735
        %v3184 = vpack.c.b16 %v2740, %v2736
        %v3185 = vpack.c.b16 %v2745, %v2741
        %v3186 = vpack.c.b16 %v2746, %v2742
        %v3187 = vpack.c.b16 %v2747, %v2743
        %v3188 = vpack.c.b16 %v2748, %v2744
        %v3189 = vpack.c.b16 %v2753, %v2749
        %v3190 = vpack.c.b16 %v2754, %v2750
        %v3191 = vpack.c.b16 %v2755, %v2751
        %v3192 = vpack.c.b16 %v2756, %v2752
        %v3193 = vpack.c.b16 %v2761, %v2757
        %v3194 = vpack.c.b16 %v2762, %v2758
        %v3195 = vpack.c.b16 %v2763, %v2759
        %v3196 = vpack.c.b16 %v2764, %v2760
        %v3197 = vpack.c.b16 %v2769, %v2765
        %v3198 = vpack.c.b16 %v2770, %v2766
        %v3199 = vpack.c.b16 %v2771, %v2767
        %v3200 = vpack.c.b16 %v2772, %v2768
        %v3201 = vpack.c.b16 %v2777, %v2773
        %v3202 = vpack.c.b16 %v2778, %v2774
        %v3203 = vpack.c.b16 %v2779, %v2775
        %v3204 = vpack.c.b16 %v2780, %v2776
        %v3205 = vpack.c.b16 %v2785, %v2781
        %v3206 = vpack.c.b16 %v2786, %v2782
        %v3207 = vpack.c.b16 %v2787, %v2783
        %v3208 = vpack.c.b16 %v2788, %v2784
        %v3209 = vpack.c.b16 %v2793, %v2789
        %v3210 = vpack.c.b16 %v2794, %v2790
        %v3211 = vpack.c.b16 %v2795, %v2791
        %v3212 = vpack.c.b16 %v2796, %v2792
        %v3213 = vpack.c.b16 %v2801, %v2797
        %v3214 = vpack.c.b16 %v2802, %v2798
        %v3215 = vpack.c.b16 %v2803, %v2799
        %v3216 = vpack.c.b16 %v2804, %v2800
        %v3217 = vpack.c.b16 %v2809, %v2805
        %v3218 = vpack.c.b16 %v2810, %v2806
        %v3219 = vpack.c.b16 %v2811, %v2807
        %v3220 = vpack.c.b16 %v2812, %v2808
        %v3221 = vpack.c.b16 %v2817, %v2813
        %v3222 = vpack.c.b16 %v2818, %v2814
        %v3223 = vpack.c.b16 %v2819, %v2815
        %v3224 = vpack.c.b16 %v2820, %v2816
        %v3225 = vpack.c.b16 %v2825, %v2821
        %v3226 = vpack.c.b16 %v2826, %v2822
        %v3227 = vpack.c.b16 %v2827, %v2823
        %v3228 = vpack.c.b16 %v2828, %v2824
        %v3229 = vpack.c.b16 %v2833, %v2829
        %v3230 = vpack.c.b16 %v2834, %v2830
        %v3231 = vpack.c.b16 %v2835, %v2831
        %v3232 = vpack.c.b16 %v2836, %v2832
        %v3233 = vpack.c.b16 %v2841, %v2837
        %v3234 = vpack.c.b16 %v2842, %v2838
        %v3235 = vpack.c.b16 %v2843, %v2839
        %v3236 = vpack.c.b16 %v2844, %v2840
        %v3237 = vpack.c.b16 %v2849, %v2845
        %v3238 = vpack.c.b16 %v2850, %v2846
        %v3239 = vpack.c.b16 %v2851, %v2847
        %v3240 = vpack.c.b16 %v2852, %v2848
        %v3241 = vpack.c.b16 %v2857, %v2853
        %v3242 = vpack.c.b16 %v2858, %v2854
        %v3243 = vpack.c.b16 %v2859, %v2855
        %v3244 = vpack.c.b16 %v2860, %v2856
        %v3245 = vpack.c.b16 %v2865, %v2861
        %v3246 = vpack.c.b16 %v2866, %v2862
        %v3247 = vpack.c.b16 %v2867, %v2863
        %v3248 = vpack.c.b16 %v2868, %v2864
        %v3249 = vpack.c.b16 %v2873, %v2869
        %v3250 = vpack.c.b16 %v2874, %v2870
        %v3251 = vpack.c.b16 %v2875, %v2871
        %v3252 = vpack.c.b16 %v2876, %v2872
        %v3253 = vpack.c.b16 %v2881, %v2877
        %v3254 = vpack.c.b16 %v2882, %v2878
        %v3255 = vpack.c.b16 %v2883, %v2879
        %v3256 = vpack.c.b16 %v2884, %v2880
        %v3257 = vpack.c.b16 %v2889, %v2885
        %v3258 = vpack.c.b16 %v2890, %v2886
        %v3259 = vpack.c.b16 %v2891, %v2887
        %v3260 = vpack.c.b16 %v2892, %v2888
        %v3261 = vpack.c.b16 %v2897, %v2893
        %v3262 = vpack.c.b16 %v2898, %v2894
        %v3263 = vpack.c.b16 %v2899, %v2895
        %v3264 = vpack.c.b16 %v2900, %v2896
        %v3265 = vpack.c.b16 %v2905, %v2901
        %v3266 = vpack.c.b16 %v2906, %v2902
        %v3267 = vpack.c.b16 %v2907, %v2903
        %v3268 = vpack.c.b16 %v2908, %v2904
        %v3269 = vpack.c.b16 %v2913, %v2909
        %v3270 = vpack.c.b16 %v2914, %v2910
        %v3271 = vpack.c.b16 %v2915, %v2911
        %v3272 = vpack.c.b16 %v2916, %v2912
        %v3273 = vpack.c.b16 %v2921, %v2917
        %v3274 = vpack.c.b16 %v2922, %v2918
        %v3275 = vpack.c.b16 %v2923, %v2919
        %v3276 = vpack.c.b16 %v2924, %v2920
        %v3277 = vpack.c.b16 %v2929, %v2925
        %v3278 = vpack.c.b16 %v2930, %v2926
        %v3279 = vpack.c.b16 %v2931, %v2927
        %v3280 = vpack.c.b16 %v2932, %v2928
        %v3281 = vpack.c.b16 %v2937, %v2933
        %v3282 = vpack.c.b16 %v2938, %v2934
        %v3283 = vpack.c.b16 %v2939, %v2935
        %v3284 = vpack.c.b16 %v2940, %v2936
        %v3285 = vpack.c.b16 %v2945, %v2941
        %v3286 = vpack.c.b16 %v2946, %v2942
        %v3287 = vpack.c.b16 %v2947, %v2943
        %v3288 = vpack.c.b16 %v2948, %v2944
        %v3289 = vpack.c.b16 %v2953, %v2949
        %v3290 = vpack.c.b16 %v2954, %v2950
        %v3291 = vpack.c.b16 %v2955, %v2951
        %v3292 = vpack.c.b16 %v2956, %v2952
        %v3293 = vpack.c.b16 %v2961, %v2957
        %v3294 = vpack.c.b16 %v2962, %v2958
        %v3295 = vpack.c.b16 %v2963, %v2959
        %v3296 = vpack.c.b16 %v2964, %v2960
        %v3297 = vpack.c.b16 %v2969, %v2965
        %v3298 = vpack.c.b16 %v2970, %v2966
        %v3299 = vpack.c.b16 %v2971, %v2967
        %v3300 = vpack.c.b16 %v2972, %v2968
        %v3301 = vpack.c.b16 %v2977, %v2973
        %v3302 = vpack.c.b16 %v2978, %v2974
        %v3303 = vpack.c.b16 %v2979, %v2975
        %v3304 = vpack.c.b16 %v2980, %v2976
        %v3305 = vpack.c.b16 %v2985, %v2981
        %v3306 = vpack.c.b16 %v2986, %v2982
        %v3307 = vpack.c.b16 %v2987, %v2983
        %v3308 = vpack.c.b16 %v2988, %v2984
        %v3309 = vpack.c.b16 %v2993, %v2989
        %v3310 = vpack.c.b16 %v2994, %v2990
        %v3311 = vpack.c.b16 %v2995, %v2991
        %v3312 = vpack.c.b16 %v2996, %v2992
        %v3313 = vpack.c.b16 %v3001, %v2997
        %v3314 = vpack.c.b16 %v3002, %v2998
        %v3315 = vpack.c.b16 %v3003, %v2999
        %v3316 = vpack.c.b16 %v3004, %v3000
        %v3317 = vpack.c.b16 %v3009, %v3005
        %v3318 = vpack.c.b16 %v3010, %v3006
        %v3319 = vpack.c.b16 %v3011, %v3007
        %v3320 = vpack.c.b16 %v3012, %v3008
        %v3321 = vpack.c.b16 %v3017, %v3013
        %v3322 = vpack.c.b16 %v3018, %v3014
        %v3323 = vpack.c.b16 %v3019, %v3015
        %v3324 = vpack.c.b16 %v3020, %v3016
        %v3325 = vpack.c.b16 %v3025, %v3021
        %v3326 = vpack.c.b16 %v3026, %v3022
        %v3327 = vpack.c.b16 %v3027, %v3023
        %v3328 = vpack.c.b16 %v3028, %v3024
        %v3329 = vpack.c.b16 %v3033, %v3029
        %v3330 = vpack.c.b16 %v3034, %v3030
        %v3331 = vpack.c.b16 %v3035, %v3031
        %v3332 = vpack.c.b16 %v3036, %v3032
        %v3333 = vpack.c.b16 %v3041, %v3037
        %v3334 = vpack.c.b16 %v3042, %v3038
        %v3335 = vpack.c.b16 %v3043, %v3039
        %v3336 = vpack.c.b16 %v3044, %v3040
        %v3337 = vpack.c.b16 %v3049, %v3045
        %v3338 = vpack.c.b16 %v3050, %v3046
        %v3339 = vpack.c.b16 %v3051, %v3047
        %v3340 = vpack.c.b16 %v3052, %v3048
        %3629 = vmatprep.subr.bf16.mxu0 %v3082
        %3630 = vmatpush1.bf16.msra.mxu0 %v3081
        %3631 = vmatprep.subr.bf16.mxu0 %v3078
        %3632 = vmatpush1.bf16.msra.mxu0 %v3077
        %3633 = vmatprep.subr.bf16.mxu0 %v3074
        %3634 = vmatpush1.bf16.msra.mxu0 %v3073
        %3635 = vmatprep.subr.bf16.mxu0 %v3070
        %3636 = vmatpush1.bf16.msra.mxu0 %v3069
        %3637 = vmatprep.subr.bf16.mxu0 %v3066
        %3638 = vmatpush1.bf16.msra.mxu0 %v3065
        %3639 = vmatprep.subr.bf16.mxu0 %v3062
        %3640 = vmatpush1.bf16.msra.mxu0 %v3061
        %3641 = vmatprep.subr.bf16.mxu0 %v3058
        %3642 = vmatpush1.bf16.msra.mxu0 %v3057
        %3643 = vmatprep.subr.bf16.mxu0 %v3054
        %3644 = vmatpush1.bf16.msra.mxu0 %v3053
        %3645 = vmatprep.subr.bf16.mxu0 %v3114
        %3646 = vmatpush2.bf16.msra.mxu0 %v3113
        %3647 = vmatprep.subr.bf16.mxu0 %v3110
        %3648 = vmatpush2.bf16.msra.mxu0 %v3109
        %3649 = vmatprep.subr.bf16.mxu0 %v3106
        %3650 = vmatpush2.bf16.msra.mxu0 %v3105
        %3651 = vmatprep.subr.bf16.mxu0 %v3102
        %3652 = vmatpush2.bf16.msra.mxu0 %v3101
        %3653 = vmatprep.subr.bf16.mxu0 %v3098
        %3654 = vmatpush2.bf16.msra.mxu0 %v3097
        %3655 = vmatprep.subr.bf16.mxu0 %v3094
        %3656 = vmatpush2.bf16.msra.mxu0 %v3093
        %3657 = vmatprep.subr.bf16.mxu0 %v3090
        %3658 = vmatpush2.bf16.msra.mxu0 %v3089
        %3659 = vmatprep.subr.bf16.mxu0 %v3086
        %3660 = vmatpush2.bf16.msra.mxu0 %v3085
        %3661 = vmatprep.mubr.bf16.mxu0 %v1871
        %3662 = vmatmul.mubr.bf16.gmra.mxu0 %v1870
        %v3663 = vpop.f32.mrf.mxu0
        %v3664 = vadd.f32 %v2172, %v3663
        %v3665 = vpop.f32.mrf.mxu0
        %v3666 = vadd.f32 %v2176, %v3665
        %v3667 = vpop.f32.mrf.mxu0
        %v3668 = vadd.f32 %v2172, %v3667
        %v3669 = vpop.f32.mrf.mxu0
        %v3670 = vadd.f32 %v2176, %v3669
        %3671 = vdwg.mxu0
        %3672 = vmatprep.subr.bf16.mxu0 %v3146
        %3673 = vmatpush1.bf16.msra.mxu0 %v3145
        %3674 = vmatprep.subr.bf16.mxu0 %v3142
        %3675 = vmatpush1.bf16.msra.mxu0 %v3141
        %3676 = vmatprep.subr.bf16.mxu0 %v3138
        %3677 = vmatpush1.bf16.msra.mxu0 %v3137
        %3678 = vmatprep.subr.bf16.mxu0 %v3134
        %3679 = vmatpush1.bf16.msra.mxu0 %v3133
        %3680 = vmatprep.subr.bf16.mxu0 %v3130
        %3681 = vmatpush1.bf16.msra.mxu0 %v3129
        %3682 = vmatprep.subr.bf16.mxu0 %v3126
        %3683 = vmatpush1.bf16.msra.mxu0 %v3125
        %3684 = vmatprep.subr.bf16.mxu0 %v3122
        %3685 = vmatpush1.bf16.msra.mxu0 %v3121
        %3686 = vmatprep.subr.bf16.mxu0 %v3118
        %3687 = vmatpush1.bf16.msra.mxu0 %v3117
        %3688 = vmatprep.subr.bf16.mxu0 %v3178
        %3689 = vmatpush2.bf16.msra.mxu0 %v3177
        %3690 = vmatprep.subr.bf16.mxu0 %v3174
        %3691 = vmatpush2.bf16.msra.mxu0 %v3173
        %3692 = vmatprep.subr.bf16.mxu0 %v3170
        %3693 = vmatpush2.bf16.msra.mxu0 %v3169
        %3694 = vmatprep.subr.bf16.mxu0 %v3166
        %3695 = vmatpush2.bf16.msra.mxu0 %v3165
        %3696 = vmatprep.subr.bf16.mxu0 %v3162
        %3697 = vmatpush2.bf16.msra.mxu0 %v3161
        %3698 = vmatprep.subr.bf16.mxu0 %v3158
        %3699 = vmatpush2.bf16.msra.mxu0 %v3157
        %3700 = vmatprep.subr.bf16.mxu0 %v3154
        %3701 = vmatpush2.bf16.msra.mxu0 %v3153
        %3702 = vmatprep.subr.bf16.mxu0 %v3150
        %3703 = vmatpush2.bf16.msra.mxu0 %v3149
        %3704 = vmatprep.mubr.bf16.mxu0 %v1873
        %3705 = vmatmul.mubr.bf16.gmra.mxu0 %v1872
        %v3706 = vpop.f32.mrf.mxu0
        %v3707 = vadd.f32 %v3664, %v3706
        %v3708 = vpop.f32.mrf.mxu0
        %v3709 = vadd.f32 %v3666, %v3708
        %v3710 = vpop.f32.mrf.mxu0
        %v3711 = vadd.f32 %v3668, %v3710
        %v3712 = vpop.f32.mrf.mxu0
        %v3713 = vadd.f32 %v3670, %v3712
        %3714 = vdwg.mxu0
        %3715 = vmatprep.subr.bf16.mxu0 %v3210
        %3716 = vmatpush1.bf16.msra.mxu0 %v3209
        %3717 = vmatprep.subr.bf16.mxu0 %v3206
        %3718 = vmatpush1.bf16.msra.mxu0 %v3205
        %3719 = vmatprep.subr.bf16.mxu0 %v3202
        %3720 = vmatpush1.bf16.msra.mxu0 %v3201
        %3721 = vmatprep.subr.bf16.mxu0 %v3198
        %3722 = vmatpush1.bf16.msra.mxu0 %v3197
        %3723 = vmatprep.subr.bf16.mxu0 %v3194
        %3724 = vmatpush1.bf16.msra.mxu0 %v3193
        %3725 = vmatprep.subr.bf16.mxu0 %v3190
        %3726 = vmatpush1.bf16.msra.mxu0 %v3189
        %3727 = vmatprep.subr.bf16.mxu0 %v3186
        %3728 = vmatpush1.bf16.msra.mxu0 %v3185
        %3729 = vmatprep.subr.bf16.mxu0 %v3182
        %3730 = vmatpush1.bf16.msra.mxu0 %v3181
        %3731 = vmatprep.subr.bf16.mxu0 %v3242
        %3732 = vmatpush2.bf16.msra.mxu0 %v3241
        %3733 = vmatprep.subr.bf16.mxu0 %v3238
        %3734 = vmatpush2.bf16.msra.mxu0 %v3237
        %3735 = vmatprep.subr.bf16.mxu0 %v3234
        %3736 = vmatpush2.bf16.msra.mxu0 %v3233
        %3737 = vmatprep.subr.bf16.mxu0 %v3230
        %3738 = vmatpush2.bf16.msra.mxu0 %v3229
        %3739 = vmatprep.subr.bf16.mxu0 %v3226
        %3740 = vmatpush2.bf16.msra.mxu0 %v3225
        %3741 = vmatprep.subr.bf16.mxu0 %v3222
        %3742 = vmatpush2.bf16.msra.mxu0 %v3221
        %3743 = vmatprep.subr.bf16.mxu0 %v3218
        %3744 = vmatpush2.bf16.msra.mxu0 %v3217
        %3745 = vmatprep.subr.bf16.mxu0 %v3214
        %3746 = vmatpush2.bf16.msra.mxu0 %v3213
        %3747 = vmatprep.mubr.bf16.mxu0 %v1875
        %3748 = vmatmul.mubr.bf16.gmra.mxu0 %v1874
        %v3749 = vpop.f32.mrf.mxu0
        %v3750 = vadd.f32 %v3707, %v3749
        %v3751 = vpop.f32.mrf.mxu0
        %v3752 = vadd.f32 %v3709, %v3751
        %v3753 = vpop.f32.mrf.mxu0
        %v3754 = vadd.f32 %v3711, %v3753
        %v3755 = vpop.f32.mrf.mxu0
        %v3756 = vadd.f32 %v3713, %v3755
        %3757 = vdwg.mxu0
        %3758 = vmatprep.subr.bf16.mxu0 %v3274
        %3759 = vmatpush1.bf16.msra.mxu0 %v3273
        %3760 = vmatprep.subr.bf16.mxu0 %v3270
        %3761 = vmatpush1.bf16.msra.mxu0 %v3269
        %3762 = vmatprep.subr.bf16.mxu0 %v3266
        %3763 = vmatpush1.bf16.msra.mxu0 %v3265
        %3764 = vmatprep.subr.bf16.mxu0 %v3262
        %3765 = vmatpush1.bf16.msra.mxu0 %v3261
        %3766 = vmatprep.subr.bf16.mxu0 %v3258
        %3767 = vmatpush1.bf16.msra.mxu0 %v3257
        %3768 = vmatprep.subr.bf16.mxu0 %v3254
        %3769 = vmatpush1.bf16.msra.mxu0 %v3253
        %3770 = vmatprep.subr.bf16.mxu0 %v3250
        %3771 = vmatpush1.bf16.msra.mxu0 %v3249
        %3772 = vmatprep.subr.bf16.mxu0 %v3246
        %3773 = vmatpush1.bf16.msra.mxu0 %v3245
        %3774 = vmatprep.subr.bf16.mxu0 %v3306
        %3775 = vmatpush2.bf16.msra.mxu0 %v3305
        %3776 = vmatprep.subr.bf16.mxu0 %v3302
        %3777 = vmatpush2.bf16.msra.mxu0 %v3301
        %3778 = vmatprep.subr.bf16.mxu0 %v3298
        %3779 = vmatpush2.bf16.msra.mxu0 %v3297
        %3780 = vmatprep.subr.bf16.mxu0 %v3294
        %3781 = vmatpush2.bf16.msra.mxu0 %v3293
        %3782 = vmatprep.subr.bf16.mxu0 %v3290
        %3783 = vmatpush2.bf16.msra.mxu0 %v3289
        %3784 = vmatprep.subr.bf16.mxu0 %v3286
        %3785 = vmatpush2.bf16.msra.mxu0 %v3285
        %3786 = vmatprep.subr.bf16.mxu0 %v3282
        %3787 = vmatpush2.bf16.msra.mxu0 %v3281
        %3788 = vmatprep.subr.bf16.mxu0 %v3278
        %3789 = vmatpush2.bf16.msra.mxu0 %v3277
        %3790 = vmatprep.mubr.bf16.mxu0 %v1877
        %3791 = vmatmul.mubr.bf16.gmra.mxu0 %v1876
        %v3792 = vpop.f32.mrf.mxu0
        %v3793 = vadd.f32 %v3750, %v3792
        %v3794 = vpop.f32.mrf.mxu0
        %v3795 = vadd.f32 %v3752, %v3794
        %v3796 = vpop.f32.mrf.mxu0
        %v3797 = vadd.f32 %v3754, %v3796
        %v3798 = vpop.f32.mrf.mxu0
        %v3799 = vadd.f32 %v3756, %v3798
        %3800 = vdwg.mxu0
        %3801 = vmatprep.subr.bf16.mxu0 %v3338
        %3802 = vmatpush1.bf16.msra.mxu0 %v3337
        %3803 = vmatprep.subr.bf16.mxu0 %v3334
        %3804 = vmatpush1.bf16.msra.mxu0 %v3333
        %3805 = vmatprep.subr.bf16.mxu0 %v3330
        %3806 = vmatpush1.bf16.msra.mxu0 %v3329
        %3807 = vmatprep.subr.bf16.mxu0 %v3326
        %3808 = vmatpush1.bf16.msra.mxu0 %v3325
        %3809 = vmatprep.subr.bf16.mxu0 %v3322
        %3810 = vmatpush1.bf16.msra.mxu0 %v3321
        %3811 = vmatprep.subr.bf16.mxu0 %v3318
        %3812 = vmatpush1.bf16.msra.mxu0 %v3317
        %3813 = vmatprep.subr.bf16.mxu0 %v3314
        %3814 = vmatpush1.bf16.msra.mxu0 %v3313
        %3815 = vmatprep.subr.bf16.mxu0 %v3310
        %3816 = vmatpush1.bf16.msra.mxu0 %v3309
        %3817 = vmatprep.subr.bf16.mxu0 0
        %3818 = vmatpush2.bf16.msra.mxu0 0
        %3819 = vmatprep.subr.bf16.mxu0 0
        %3820 = vmatpush2.bf16.msra.mxu0 0
        %3821 = vmatprep.subr.bf16.mxu0 0
        %3822 = vmatpush2.bf16.msra.mxu0 0
        %3823 = vmatprep.subr.bf16.mxu0 0
        %3824 = vmatpush2.bf16.msra.mxu0 0
        %3825 = vmatprep.subr.bf16.mxu0 0
        %3826 = vmatpush2.bf16.msra.mxu0 0
        %3827 = vmatprep.subr.bf16.mxu0 0
        %3828 = vmatpush2.bf16.msra.mxu0 0
        %3829 = vmatprep.subr.bf16.mxu0 0
        %3830 = vmatpush2.bf16.msra.mxu0 0
        %3831 = vmatprep.subr.bf16.mxu0 0
        %3832 = vmatpush2.bf16.msra.mxu0 0
        %3833 = vmatprep.mubr.bf16.mxu0 0
        %3834 = vmatmul.mubr.bf16.gmra.mxu0 %v1878
        %v3835 = vpop.f32.mrf.mxu0
        %v3836 = vadd.f32 %v3793, %v3835
        %v3837 = vpop.f32.mrf.mxu0
        %v3838 = vadd.f32 %v3795, %v3837
        %v3839 = vpop.f32.mrf.mxu0
        %v3840 = vadd.f32 %v3797, %v3839
        %v3841 = vpop.f32.mrf.mxu0
        %v3842 = vadd.f32 %v3799, %v3841
        %3843 = vdwg.mxu0
        %3844 = vmatprep.subr.bf16.mxu0 %v3084
        %3845 = vmatpush1.bf16.msra.mxu0 %v3083
        %3846 = vmatprep.subr.bf16.mxu0 %v3080
        %3847 = vmatpush1.bf16.msra.mxu0 %v3079
        %3848 = vmatprep.subr.bf16.mxu0 %v3076
        %3849 = vmatpush1.bf16.msra.mxu0 %v3075
        %3850 = vmatprep.subr.bf16.mxu0 %v3072
        %3851 = vmatpush1.bf16.msra.mxu0 %v3071
        %3852 = vmatprep.subr.bf16.mxu0 %v3068
        %3853 = vmatpush1.bf16.msra.mxu0 %v3067
        %3854 = vmatprep.subr.bf16.mxu0 %v3064
        %3855 = vmatpush1.bf16.msra.mxu0 %v3063
        %3856 = vmatprep.subr.bf16.mxu0 %v3060
        %3857 = vmatpush1.bf16.msra.mxu0 %v3059
        %3858 = vmatprep.subr.bf16.mxu0 %v3056
        %3859 = vmatpush1.bf16.msra.mxu0 %v3055
        %3860 = vmatprep.subr.bf16.mxu0 %v3116
        %3861 = vmatpush2.bf16.msra.mxu0 %v3115
        %3862 = vmatprep.subr.bf16.mxu0 %v3112
        %3863 = vmatpush2.bf16.msra.mxu0 %v3111
        %3864 = vmatprep.subr.bf16.mxu0 %v3108
        %3865 = vmatpush2.bf16.msra.mxu0 %v3107
        %3866 = vmatprep.subr.bf16.mxu0 %v3104
        %3867 = vmatpush2.bf16.msra.mxu0 %v3103
        %3868 = vmatprep.subr.bf16.mxu0 %v3100
        %3869 = vmatpush2.bf16.msra.mxu0 %v3099
        %3870 = vmatprep.subr.bf16.mxu0 %v3096
        %3871 = vmatpush2.bf16.msra.mxu0 %v3095
        %3872 = vmatprep.subr.bf16.mxu0 %v3092
        %3873 = vmatpush2.bf16.msra.mxu0 %v3091
        %3874 = vmatprep.subr.bf16.mxu0 %v3088
        %3875 = vmatpush2.bf16.msra.mxu0 %v3087
        %3876 = vmatprep.mubr.bf16.mxu0 %v1871
        %3877 = vmatmul.mubr.bf16.gmra.mxu0 %v1870
        %v3878 = vpop.f32.mrf.mxu0
        %v3879 = vadd.f32 %v2180, %v3878
        %v3880 = vpop.f32.mrf.mxu0
        %v3881 = vadd.f32 %v2184, %v3880
        %v3882 = vpop.f32.mrf.mxu0
        %v3883 = vadd.f32 %v2180, %v3882
        %v3884 = vpop.f32.mrf.mxu0
        %v3885 = vadd.f32 %v2184, %v3884
        %3886 = vdwg.mxu0
        %3887 = vmatprep.subr.bf16.mxu0 %v3148
        %3888 = vmatpush1.bf16.msra.mxu0 %v3147
        %3889 = vmatprep.subr.bf16.mxu0 %v3144
        %3890 = vmatpush1.bf16.msra.mxu0 %v3143
        %3891 = vmatprep.subr.bf16.mxu0 %v3140
        %3892 = vmatpush1.bf16.msra.mxu0 %v3139
        %3893 = vmatprep.subr.bf16.mxu0 %v3136
        %3894 = vmatpush1.bf16.msra.mxu0 %v3135
        %3895 = vmatprep.subr.bf16.mxu0 %v3132
        %3896 = vmatpush1.bf16.msra.mxu0 %v3131
        %3897 = vmatprep.subr.bf16.mxu0 %v3128
        %3898 = vmatpush1.bf16.msra.mxu0 %v3127
        %3899 = vmatprep.subr.bf16.mxu0 %v3124
        %3900 = vmatpush1.bf16.msra.mxu0 %v3123
        %3901 = vmatprep.subr.bf16.mxu0 %v3120
        %3902 = vmatpush1.bf16.msra.mxu0 %v3119
        %3903 = vmatprep.subr.bf16.mxu0 %v3180
        %3904 = vmatpush2.bf16.msra.mxu0 %v3179
        %3905 = vmatprep.subr.bf16.mxu0 %v3176
        %3906 = vmatpush2.bf16.msra.mxu0 %v3175
        %3907 = vmatprep.subr.bf16.mxu0 %v3172
        %3908 = vmatpush2.bf16.msra.mxu0 %v3171
        %3909 = vmatprep.subr.bf16.mxu0 %v3168
        %3910 = vmatpush2.bf16.msra.mxu0 %v3167
        %3911 = vmatprep.subr.bf16.mxu0 %v3164
        %3912 = vmatpush2.bf16.msra.mxu0 %v3163
        %3913 = vmatprep.subr.bf16.mxu0 %v3160
        %3914 = vmatpush2.bf16.msra.mxu0 %v3159
        %3915 = vmatprep.subr.bf16.mxu0 %v3156
        %3916 = vmatpush2.bf16.msra.mxu0 %v3155
        %3917 = vmatprep.subr.bf16.mxu0 %v3152
        %3918 = vmatpush2.bf16.msra.mxu0 %v3151
        %3919 = vmatprep.mubr.bf16.mxu0 %v1873
        %3920 = vmatmul.mubr.bf16.gmra.mxu0 %v1872
        %v3921 = vpop.f32.mrf.mxu0
        %v3922 = vadd.f32 %v3879, %v3921
        %v3923 = vpop.f32.mrf.mxu0
        %v3924 = vadd.f32 %v3881, %v3923
        %v3925 = vpop.f32.mrf.mxu0
        %v3926 = vadd.f32 %v3883, %v3925
        %v3927 = vpop.f32.mrf.mxu0
        %v3928 = vadd.f32 %v3885, %v3927
        %3929 = vdwg.mxu0
        %3930 = vmatprep.subr.bf16.mxu0 %v3212
        %3931 = vmatpush1.bf16.msra.mxu0 %v3211
        %3932 = vmatprep.subr.bf16.mxu0 %v3208
        %3933 = vmatpush1.bf16.msra.mxu0 %v3207
        %3934 = vmatprep.subr.bf16.mxu0 %v3204
        %3935 = vmatpush1.bf16.msra.mxu0 %v3203
        %3936 = vmatprep.subr.bf16.mxu0 %v3200
        %3937 = vmatpush1.bf16.msra.mxu0 %v3199
        %3938 = vmatprep.subr.bf16.mxu0 %v3196
        %3939 = vmatpush1.bf16.msra.mxu0 %v3195
        %3940 = vmatprep.subr.bf16.mxu0 %v3192
        %3941 = vmatpush1.bf16.msra.mxu0 %v3191
        %3942 = vmatprep.subr.bf16.mxu0 %v3188
        %3943 = vmatpush1.bf16.msra.mxu0 %v3187
        %3944 = vmatprep.subr.bf16.mxu0 %v3184
        %3945 = vmatpush1.bf16.msra.mxu0 %v3183
        %3946 = vmatprep.subr.bf16.mxu0 %v3244
        %3947 = vmatpush2.bf16.msra.mxu0 %v3243
        %3948 = vmatprep.subr.bf16.mxu0 %v3240
        %3949 = vmatpush2.bf16.msra.mxu0 %v3239
        %3950 = vmatprep.subr.bf16.mxu0 %v3236
        %3951 = vmatpush2.bf16.msra.mxu0 %v3235
        %3952 = vmatprep.subr.bf16.mxu0 %v3232
        %3953 = vmatpush2.bf16.msra.mxu0 %v3231
        %3954 = vmatprep.subr.bf16.mxu0 %v3228
        %3955 = vmatpush2.bf16.msra.mxu0 %v3227
        %3956 = vmatprep.subr.bf16.mxu0 %v3224
        %3957 = vmatpush2.bf16.msra.mxu0 %v3223
        %3958 = vmatprep.subr.bf16.mxu0 %v3220
        %3959 = vmatpush2.bf16.msra.mxu0 %v3219
        %3960 = vmatprep.subr.bf16.mxu0 %v3216
        %3961 = vmatpush2.bf16.msra.mxu0 %v3215
        %3962 = vmatprep.mubr.bf16.mxu0 %v1875
        %3963 = vmatmul.mubr.bf16.gmra.mxu0 %v1874
        %v3964 = vpop.f32.mrf.mxu0
        %v3965 = vadd.f32 %v3922, %v3964
        %v3966 = vpop.f32.mrf.mxu0
        %v3967 = vadd.f32 %v3924, %v3966
        %v3968 = vpop.f32.mrf.mxu0
        %v3969 = vadd.f32 %v3926, %v3968
        %v3970 = vpop.f32.mrf.mxu0
        %v3971 = vadd.f32 %v3928, %v3970
        %3972 = vdwg.mxu0
        %3973 = vmatprep.subr.bf16.mxu0 %v3276
        %3974 = vmatpush1.bf16.msra.mxu0 %v3275
        %3975 = vmatprep.subr.bf16.mxu0 %v3272
        %3976 = vmatpush1.bf16.msra.mxu0 %v3271
        %3977 = vmatprep.subr.bf16.mxu0 %v3268
        %3978 = vmatpush1.bf16.msra.mxu0 %v3267
        %3979 = vmatprep.subr.bf16.mxu0 %v3264
        %3980 = vmatpush1.bf16.msra.mxu0 %v3263
        %3981 = vmatprep.subr.bf16.mxu0 %v3260
        %3982 = vmatpush1.bf16.msra.mxu0 %v3259
        %3983 = vmatprep.subr.bf16.mxu0 %v3256
        %3984 = vmatpush1.bf16.msra.mxu0 %v3255
        %3985 = vmatprep.subr.bf16.mxu0 %v3252
        %3986 = vmatpush1.bf16.msra.mxu0 %v3251
        %3987 = vmatprep.subr.bf16.mxu0 %v3248
        %3988 = vmatpush1.bf16.msra.mxu0 %v3247
        %3989 = vmatprep.subr.bf16.mxu0 %v3308
        %3990 = vmatpush2.bf16.msra.mxu0 %v3307
        %3991 = vmatprep.subr.bf16.mxu0 %v3304
        %3992 = vmatpush2.bf16.msra.mxu0 %v3303
        %3993 = vmatprep.subr.bf16.mxu0 %v3300
        %3994 = vmatpush2.bf16.msra.mxu0 %v3299
        %3995 = vmatprep.subr.bf16.mxu0 %v3296
        %3996 = vmatpush2.bf16.msra.mxu0 %v3295
        %3997 = vmatprep.subr.bf16.mxu0 %v3292
        %3998 = vmatpush2.bf16.msra.mxu0 %v3291
        %3999 = vmatprep.subr.bf16.mxu0 %v3288
        %4000 = vmatpush2.bf16.msra.mxu0 %v3287
        %4001 = vmatprep.subr.bf16.mxu0 %v3284
        %4002 = vmatpush2.bf16.msra.mxu0 %v3283
        %4003 = vmatprep.subr.bf16.mxu0 %v3280
        %4004 = vmatpush2.bf16.msra.mxu0 %v3279
        %4005 = vmatprep.mubr.bf16.mxu0 %v1877
        %4006 = vmatmul.mubr.bf16.gmra.mxu0 %v1876
        %v4007 = vpop.f32.mrf.mxu0
        %v4008 = vadd.f32 %v3965, %v4007
        %v4009 = vpop.f32.mrf.mxu0
        %v4010 = vadd.f32 %v3967, %v4009
        %v4011 = vpop.f32.mrf.mxu0
        %v4012 = vadd.f32 %v3969, %v4011
        %v4013 = vpop.f32.mrf.mxu0
        %v4014 = vadd.f32 %v3971, %v4013
        %4015 = vdwg.mxu0
        %4016 = vmatprep.subr.bf16.mxu0 %v3340
        %4017 = vmatpush1.bf16.msra.mxu0 %v3339
        %4018 = vmatprep.subr.bf16.mxu0 %v3336
        %4019 = vmatpush1.bf16.msra.mxu0 %v3335
        %4020 = vmatprep.subr.bf16.mxu0 %v3332
        %4021 = vmatpush1.bf16.msra.mxu0 %v3331
        %4022 = vmatprep.subr.bf16.mxu0 %v3328
        %4023 = vmatpush1.bf16.msra.mxu0 %v3327
        %4024 = vmatprep.subr.bf16.mxu0 %v3324
        %4025 = vmatpush1.bf16.msra.mxu0 %v3323
        %4026 = vmatprep.subr.bf16.mxu0 %v3320
        %4027 = vmatpush1.bf16.msra.mxu0 %v3319
        %4028 = vmatprep.subr.bf16.mxu0 %v3316
        %4029 = vmatpush1.bf16.msra.mxu0 %v3315
        %4030 = vmatprep.subr.bf16.mxu0 %v3312
        %4031 = vmatpush1.bf16.msra.mxu0 %v3311
        %4032 = vmatprep.subr.bf16.mxu0 0
        %4033 = vmatpush2.bf16.msra.mxu0 0
        %4034 = vmatprep.subr.bf16.mxu0 0
        %4035 = vmatpush2.bf16.msra.mxu0 0
        %4036 = vmatprep.subr.bf16.mxu0 0
        %4037 = vmatpush2.bf16.msra.mxu0 0
        %4038 = vmatprep.subr.bf16.mxu0 0
        %4039 = vmatpush2.bf16.msra.mxu0 0
        %4040 = vmatprep.subr.bf16.mxu0 0
        %4041 = vmatpush2.bf16.msra.mxu0 0
        %4042 = vmatprep.subr.bf16.mxu0 0
        %4043 = vmatpush2.bf16.msra.mxu0 0
        %4044 = vmatprep.subr.bf16.mxu0 0
        %4045 = vmatpush2.bf16.msra.mxu0 0
        %4046 = vmatprep.subr.bf16.mxu0 0
        %4047 = vmatpush2.bf16.msra.mxu0 0
        %4048 = vmatprep.mubr.bf16.mxu0 0
        %4049 = vmatmul.mubr.bf16.gmra.mxu0 %v1878
        %v4050 = vpop.f32.mrf.mxu0
        %v4051 = vadd.f32 %v4008, %v4050
        %v4052 = vpop.f32.mrf.mxu0
        %v4053 = vadd.f32 %v4010, %v4052
        %v4054 = vpop.f32.mrf.mxu0
        %v4055 = vadd.f32 %v4012, %v4054
        %v4056 = vpop.f32.mrf.mxu0
        %v4057 = vadd.f32 %v4014, %v4056
        %4058 = vdwg.mxu0
        %v4059 = vmul.f32 %v3836, %v3836
        %v4060 = vmul.f32 %v3838, %v3838
        %v4061 = vmul.f32 %v4051, %v4051
        %v4062 = vmul.f32 %v4053, %v4053
        %v4063 = vmul.f32 %v3840, %v3840
        %v4064 = vmul.f32 %v3842, %v3842
        %v4065 = vmul.f32 %v4055, %v4055
        %v4066 = vmul.f32 %v4057, %v4057
        %v4067 = vmul.f32 %v3836, %v4059
        %v4068 = vmul.f32 %v3838, %v4060
        %v4069 = vmul.f32 %v4051, %v4061
        %v4070 = vmul.f32 %v4053, %v4062
        %v4071 = vmul.f32 %v3840, %v4063
        %v4072 = vmul.f32 %v3842, %v4064
        %v4073 = vmul.f32 %v4055, %v4065
        %v4074 = vmul.f32 %v4057, %v4066
        %v4075 = vmul.f32 %v4067, 0.044715
        %v4076 = vmul.f32 %v4068, 0.044715
        %v4077 = vmul.f32 %v4069, 0.044715
        %v4078 = vmul.f32 %v4070, 0.044715
        %v4079 = vmul.f32 %v4071, 0.044715
        %v4080 = vmul.f32 %v4072, 0.044715
        %v4081 = vmul.f32 %v4073, 0.044715
        %v4082 = vmul.f32 %v4074, 0.044715
        %v4083 = vadd.f32 %v3836, %v4075
        %v4084 = vadd.f32 %v3838, %v4076
        %v4085 = vadd.f32 %v4051, %v4077
        %v4086 = vadd.f32 %v4053, %v4078
        %v4087 = vadd.f32 %v3840, %v4079
        %v4088 = vadd.f32 %v3842, %v4080
        %v4089 = vadd.f32 %v4055, %v4081
        %v4090 = vadd.f32 %v4057, %v4082
        %v4091 = vmul.f32 %v4083, 0.7978846
        %v4092 = vmul.f32 %v4084, 0.7978846
        %v4093 = vmul.f32 %v4085, 0.7978846
        %v4094 = vmul.f32 %v4086, 0.7978846
        %v4095 = vmul.f32 %v4087, 0.7978846
        %v4096 = vmul.f32 %v4088, 0.7978846
        %v4097 = vmul.f32 %v4089, 0.7978846
        %v4098 = vmul.f32 %v4090, 0.7978846
        %v4099 = vtanh.pop %v4091
        %v4100 = vtanh.pop %v4092
        %v4101 = vtanh.pop %v4093
        %v4102 = vtanh.pop %v4094
        %v4103 = vtanh.pop %v4095
        %v4104 = vtanh.pop %v4096
        %v4105 = vtanh.pop %v4097
        %v4106 = vtanh.pop %v4098
        %v4107 = vadd.f32 %v4099, 1.0
        %v4108 = vadd.f32 %v4100, 1.0
        %v4109 = vadd.f32 %v4101, 1.0
        %v4110 = vadd.f32 %v4102, 1.0
        %v4111 = vadd.f32 %v4103, 1.0
        %v4112 = vadd.f32 %v4104, 1.0
        %v4113 = vadd.f32 %v4105, 1.0
        %v4114 = vadd.f32 %v4106, 1.0
        %v4115 = vmul.f32 %v4107, 0.5
        %v4116 = vmul.f32 %v4108, 0.5
        %v4117 = vmul.f32 %v4109, 0.5
        %v4118 = vmul.f32 %v4110, 0.5
        %v4119 = vmul.f32 %v4111, 0.5
        %v4120 = vmul.f32 %v4112, 0.5
        %v4121 = vmul.f32 %v4113, 0.5
        %v4122 = vmul.f32 %v4114, 0.5
        %v4123 = vmul.f32 %v3836, %v4115
        %v4124 = vmul.f32 %v3838, %v4116
        %v4125 = vmul.f32 %v4051, %v4117
        %v4126 = vmul.f32 %v4053, %v4118
        %v4127 = vmul.f32 %v3840, %v4119
        %v4128 = vmul.f32 %v3842, %v4120
        %v4129 = vmul.f32 %v4055, %v4121
        %v4130 = vmul.f32 %v4057, %v4122
        %v4131 = vpack.c.bf16 %v4127, %v4123
        %v4132 = vpack.c.bf16 %v4128, %v4124
        %v4133 = vpack.c.bf16 %v4129, %v4125
        %v4134 = vpack.c.bf16 %v4130, %v4126
        %v4135 = vld [vmem:[#allocation23] sm:$0xf]
        %v4136 = vld [vmem:[#allocation23 + $0x4] sm:$0xf]
        %v4137 = vld [vmem:[#allocation23 + $0x8] sm:$0xf]
        %v4138 = vld [vmem:[#allocation23 + $0xc] sm:$0xf]
        %v4139 = vld [vmem:[#allocation23 + $0x10] sm:$0xf]
        %v4140 = vld [vmem:[#allocation23 + $0x14] sm:$0xf]
        %v4141 = vld [vmem:[#allocation23 + $0x18] sm:$0xf]
        %v4142 = vld [vmem:[#allocation23 + $0x1c] sm:$0xf]
        %v4143 = vld [vmem:[#allocation23 + $0x20] sm:$0xf]
        %v4144 = vld [vmem:[#allocation23 + $0x24] sm:$0xf]
        %v4145 = vld [vmem:[#allocation23 + $0x28] sm:$0xf]
        %v4146 = vld [vmem:[#allocation23 + $0x2c] sm:$0xf]
        %v4147 = vld [vmem:[#allocation23 + $0x30] sm:$0xf]
        %v4148 = vld [vmem:[#allocation23 + $0x34] sm:$0xf]
        %v4149 = vld [vmem:[#allocation23 + $0x38] sm:$0xf]
        %v4150 = vld [vmem:[#allocation23 + $0x3c] sm:$0xf]
        %v4151 = vld [vmem:[#allocation23 + $0x40] sm:$0xf]
        %v4152 = vld [vmem:[#allocation23 + $0x44] sm:$0xf]
        %v4153 = vld [vmem:[#allocation23 + $0x48] sm:$0xf]
        %v4154 = vld [vmem:[#allocation23 + $0x4c] sm:$0xf]
        %v4155 = vld [vmem:[#allocation23 + $0x50] sm:$0xf]
        %v4156 = vld [vmem:[#allocation23 + $0x54] sm:$0xf]
        %v4157 = vld [vmem:[#allocation23 + $0x58] sm:$0xf]
        %v4158 = vld [vmem:[#allocation23 + $0x5c] sm:$0xf]
        %v4159 = vld [vmem:[#allocation23 + $0x60] sm:$0xf]
        %v4160 = vld [vmem:[#allocation23 + $0x64] sm:$0xf]
        %v4161 = vld [vmem:[#allocation23 + $0x68] sm:$0xf]
        %v4162 = vld [vmem:[#allocation23 + $0x6c] sm:$0xf]
        %v4163 = vld [vmem:[#allocation23 + $0x70] sm:$0xf]
        %v4164 = vld [vmem:[#allocation23 + $0x74] sm:$0xf]
        %v4165 = vld [vmem:[#allocation23 + $0x78] sm:$0xf]
        %v4166 = vld [vmem:[#allocation23 + $0x7c] sm:$0xf]
        %v4167 = vld [vmem:[#allocation23 + $0x80] sm:$0xf]
        %v4168 = vld [vmem:[#allocation23 + $0x84] sm:$0xf]
        %v4169 = vld [vmem:[#allocation23 + $0x88] sm:$0xf]
        %v4170 = vld [vmem:[#allocation23 + $0x8c] sm:$0xf]
        %v4171 = vld [vmem:[#allocation23 + $0x90] sm:$0xf]
        %v4172 = vld [vmem:[#allocation23 + $0x94] sm:$0xf]
        %v4173 = vld [vmem:[#allocation23 + $0x98] sm:$0xf]
        %v4174 = vld [vmem:[#allocation23 + $0x9c] sm:$0xf]
        %v4175 = vld [vmem:[#allocation23 + $0xa0] sm:$0xf]
        %v4176 = vld [vmem:[#allocation23 + $0xa4] sm:$0xf]
        %v4177 = vld [vmem:[#allocation23 + $0xa8] sm:$0xf]
        %v4178 = vld [vmem:[#allocation23 + $0xac] sm:$0xf]
        %v4179 = vld [vmem:[#allocation23 + $0xb0] sm:$0xf]
        %v4180 = vld [vmem:[#allocation23 + $0xb4] sm:$0xf]
        %v4181 = vld [vmem:[#allocation23 + $0xb8] sm:$0xf]
        %v4182 = vld [vmem:[#allocation23 + $0xbc] sm:$0xf]
        %v4183 = vld [vmem:[#allocation23 + $0xc0] sm:$0xf]
        %v4184 = vld [vmem:[#allocation23 + $0xc4] sm:$0xf]
        %v4185 = vld [vmem:[#allocation23 + $0xc8] sm:$0xf]
        %v4186 = vld [vmem:[#allocation23 + $0xcc] sm:$0xf]
        %v4187 = vld [vmem:[#allocation23 + $0xd0] sm:$0xf]
        %v4188 = vld [vmem:[#allocation23 + $0xd4] sm:$0xf]
        %v4189 = vld [vmem:[#allocation23 + $0xd8] sm:$0xf]
        %v4190 = vld [vmem:[#allocation23 + $0xdc] sm:$0xf]
        %v4191 = vld [vmem:[#allocation23 + $0xe0] sm:$0xf]
        %v4192 = vld [vmem:[#allocation23 + $0xe4] sm:$0xf]
        %v4193 = vld [vmem:[#allocation23 + $0xe8] sm:$0xf]
        %v4194 = vld [vmem:[#allocation23 + $0xec] sm:$0xf]
        %v4195 = vld [vmem:[#allocation23 + $0xf0] sm:$0xf]
        %v4196 = vld [vmem:[#allocation23 + $0xf4] sm:$0xf]
        %v4197 = vld [vmem:[#allocation23 + $0xf8] sm:$0xf]
        %v4198 = vld [vmem:[#allocation23 + $0xfc] sm:$0xf]
        %v4199 = vld [vmem:[#allocation24] sm:$0x1]
        %v4201 = vlaneseq
        %v4202 = vshrl.u32 %v4201, 7
        %v4203 = vsub.s32 0, %v4202
        %v4204 = vrot.slane %v4199, %v4203
        %v4270 = vunpack.c.l.b16 %v4135
        %v4271 = vunpack.c.l.b16 %v4136
        %v4272 = vunpack.c.l.b16 %v4137
        %v4273 = vunpack.c.l.b16 %v4138
        %v4274 = vunpack.c.l.b16 %v4139
        %v4275 = vunpack.c.l.b16 %v4140
        %v4276 = vunpack.c.l.b16 %v4141
        %v4277 = vunpack.c.l.b16 %v4142
        %v4278 = vunpack.c.l.b16 %v4143
        %v4279 = vunpack.c.l.b16 %v4144
        %v4280 = vunpack.c.l.b16 %v4145
        %v4281 = vunpack.c.l.b16 %v4146
        %v4282 = vunpack.c.l.b16 %v4147
        %v4283 = vunpack.c.l.b16 %v4148
        %v4284 = vunpack.c.l.b16 %v4149
        %v4285 = vunpack.c.l.b16 %v4150
        %v4286 = vunpack.c.l.b16 %v4151
        %v4287 = vunpack.c.l.b16 %v4152
        %v4288 = vunpack.c.l.b16 %v4153
        %v4289 = vunpack.c.l.b16 %v4154
        %v4290 = vunpack.c.l.b16 %v4155
        %v4291 = vunpack.c.l.b16 %v4156
        %v4292 = vunpack.c.l.b16 %v4157
        %v4293 = vunpack.c.l.b16 %v4158
        %v4294 = vunpack.c.l.b16 %v4159
        %v4295 = vunpack.c.l.b16 %v4160
        %v4296 = vunpack.c.l.b16 %v4161
        %v4297 = vunpack.c.l.b16 %v4162
        %v4298 = vunpack.c.l.b16 %v4163
        %v4299 = vunpack.c.l.b16 %v4164
        %v4300 = vunpack.c.l.b16 %v4165
        %v4301 = vunpack.c.l.b16 %v4166
        %v4302 = vunpack.c.l.b16 %v4167
        %v4303 = vunpack.c.l.b16 %v4168
        %v4304 = vunpack.c.l.b16 %v4169
        %v4305 = vunpack.c.l.b16 %v4170
        %v4306 = vunpack.c.l.b16 %v4171
        %v4307 = vunpack.c.l.b16 %v4172
        %v4308 = vunpack.c.l.b16 %v4173
        %v4309 = vunpack.c.l.b16 %v4174
        %v4310 = vunpack.c.l.b16 %v4175
        %v4311 = vunpack.c.l.b16 %v4176
        %v4312 = vunpack.c.l.b16 %v4177
        %v4313 = vunpack.c.l.b16 %v4178
        %v4314 = vunpack.c.l.b16 %v4179
        %v4315 = vunpack.c.l.b16 %v4180
        %v4316 = vunpack.c.l.b16 %v4181
        %v4317 = vunpack.c.l.b16 %v4182
        %v4318 = vunpack.c.l.b16 %v4183
        %v4319 = vunpack.c.l.b16 %v4184
        %v4320 = vunpack.c.l.b16 %v4185
        %v4321 = vunpack.c.l.b16 %v4186
        %v4322 = vunpack.c.l.b16 %v4187
        %v4323 = vunpack.c.l.b16 %v4188
        %v4324 = vunpack.c.l.b16 %v4189
        %v4325 = vunpack.c.l.b16 %v4190
        %v4326 = vunpack.c.l.b16 %v4191
        %v4327 = vunpack.c.l.b16 %v4192
        %v4328 = vunpack.c.l.b16 %v4193
        %v4329 = vunpack.c.l.b16 %v4194
        %v4330 = vunpack.c.l.b16 %v4195
        %v4331 = vunpack.c.l.b16 %v4196
        %v4332 = vunpack.c.l.b16 %v4197
        %v4333 = vunpack.c.l.b16 %v4198
        %v4334 = vpack.c.b16 %v4271, %v4270
        %v4335 = vpack.c.b16 %v4273, %v4272
        %v4336 = vpack.c.b16 %v4275, %v4274
        %v4337 = vpack.c.b16 %v4277, %v4276
        %v4338 = vpack.c.b16 %v4279, %v4278
        %v4339 = vpack.c.b16 %v4281, %v4280
        %v4340 = vpack.c.b16 %v4283, %v4282
        %v4341 = vpack.c.b16 %v4285, %v4284
        %v4342 = vpack.c.b16 %v4287, %v4286
        %v4343 = vpack.c.b16 %v4289, %v4288
        %v4344 = vpack.c.b16 %v4291, %v4290
        %v4345 = vpack.c.b16 %v4293, %v4292
        %v4346 = vpack.c.b16 %v4295, %v4294
        %v4347 = vpack.c.b16 %v4297, %v4296
        %v4348 = vpack.c.b16 %v4299, %v4298
        %v4349 = vpack.c.b16 %v4301, %v4300
        %v4350 = vpack.c.b16 %v4303, %v4302
        %v4351 = vpack.c.b16 %v4305, %v4304
        %v4352 = vpack.c.b16 %v4307, %v4306
        %v4353 = vpack.c.b16 %v4309, %v4308
        %v4354 = vpack.c.b16 %v4311, %v4310
        %v4355 = vpack.c.b16 %v4313, %v4312
        %v4356 = vpack.c.b16 %v4315, %v4314
        %v4357 = vpack.c.b16 %v4317, %v4316
        %v4358 = vpack.c.b16 %v4319, %v4318
        %v4359 = vpack.c.b16 %v4321, %v4320
        %v4360 = vpack.c.b16 %v4323, %v4322
        %v4361 = vpack.c.b16 %v4325, %v4324
        %v4362 = vpack.c.b16 %v4327, %v4326
        %v4363 = vpack.c.b16 %v4329, %v4328
        %v4364 = vpack.c.b16 %v4331, %v4330
        %v4365 = vpack.c.b16 %v4333, %v4332
        %4398 = vmatprep.subr.bf16.mxu0 0
        %4399 = vmatpush1.bf16.msra.mxu0 %v4341
        %4400 = vmatprep.subr.bf16.mxu0 0
        %4401 = vmatpush1.bf16.msra.mxu0 %v4340
        %4402 = vmatprep.subr.bf16.mxu0 0
        %4403 = vmatpush1.bf16.msra.mxu0 %v4339
        %4404 = vmatprep.subr.bf16.mxu0 0
        %4405 = vmatpush1.bf16.msra.mxu0 %v4338
        %4406 = vmatprep.subr.bf16.mxu0 0
        %4407 = vmatpush1.bf16.msra.mxu0 %v4337
        %4408 = vmatprep.subr.bf16.mxu0 0
        %4409 = vmatpush1.bf16.msra.mxu0 %v4336
        %4410 = vmatprep.subr.bf16.mxu0 0
        %4411 = vmatpush1.bf16.msra.mxu0 %v4335
        %4412 = vmatprep.subr.bf16.mxu0 0
        %4413 = vmatpush1.bf16.msra.mxu0 %v4334
        %4414 = vmatprep.subr.bf16.mxu0 0
        %4415 = vmatpush2.bf16.msra.mxu0 %v4349
        %4416 = vmatprep.subr.bf16.mxu0 0
        %4417 = vmatpush2.bf16.msra.mxu0 %v4348
        %4418 = vmatprep.subr.bf16.mxu0 0
        %4419 = vmatpush2.bf16.msra.mxu0 %v4347
        %4420 = vmatprep.subr.bf16.mxu0 0
        %4421 = vmatpush2.bf16.msra.mxu0 %v4346
        %4422 = vmatprep.subr.bf16.mxu0 0
        %4423 = vmatpush2.bf16.msra.mxu0 %v4345
        %4424 = vmatprep.subr.bf16.mxu0 0
        %4425 = vmatpush2.bf16.msra.mxu0 %v4344
        %4426 = vmatprep.subr.bf16.mxu0 0
        %4427 = vmatpush2.bf16.msra.mxu0 %v4343
        %4428 = vmatprep.subr.bf16.mxu0 0
        %4429 = vmatpush2.bf16.msra.mxu0 %v4342
        %4430 = vmatprep.mubr.bf16.mxu0 %v4132
        %4431 = vmatmul.mubr.bf16.gmra.mxu0 %v4131
        %v4432 = vpop.f32.mrf.mxu0
        %v4433 = vadd.f32 %v4204, %v4432
        %v4434 = vpop.f32.mrf.mxu0
        %v4435 = vpop.f32.mrf.mxu0
        %v4436 = vadd.f32 %v4204, %v4435
        %v4437 = vpop.f32.mrf.mxu0
        %4438 = vdwg.mxu0
        %4439 = vmatprep.subr.bf16.mxu0 0
        %4440 = vmatpush1.bf16.msra.mxu0 %v4357
        %4441 = vmatprep.subr.bf16.mxu0 0
        %4442 = vmatpush1.bf16.msra.mxu0 %v4356
        %4443 = vmatprep.subr.bf16.mxu0 0
        %4444 = vmatpush1.bf16.msra.mxu0 %v4355
        %4445 = vmatprep.subr.bf16.mxu0 0
        %4446 = vmatpush1.bf16.msra.mxu0 %v4354
        %4447 = vmatprep.subr.bf16.mxu0 0
        %4448 = vmatpush1.bf16.msra.mxu0 %v4353
        %4449 = vmatprep.subr.bf16.mxu0 0
        %4450 = vmatpush1.bf16.msra.mxu0 %v4352
        %4451 = vmatprep.subr.bf16.mxu0 0
        %4452 = vmatpush1.bf16.msra.mxu0 %v4351
        %4453 = vmatprep.subr.bf16.mxu0 0
        %4454 = vmatpush1.bf16.msra.mxu0 %v4350
        %4455 = vmatprep.subr.bf16.mxu0 0
        %4456 = vmatpush2.bf16.msra.mxu0 %v4365
        %4457 = vmatprep.subr.bf16.mxu0 0
        %4458 = vmatpush2.bf16.msra.mxu0 %v4364
        %4459 = vmatprep.subr.bf16.mxu0 0
        %4460 = vmatpush2.bf16.msra.mxu0 %v4363
        %4461 = vmatprep.subr.bf16.mxu0 0
        %4462 = vmatpush2.bf16.msra.mxu0 %v4362
        %4463 = vmatprep.subr.bf16.mxu0 0
        %4464 = vmatpush2.bf16.msra.mxu0 %v4361
        %4465 = vmatprep.subr.bf16.mxu0 0
        %4466 = vmatpush2.bf16.msra.mxu0 %v4360
        %4467 = vmatprep.subr.bf16.mxu0 0
        %4468 = vmatpush2.bf16.msra.mxu0 %v4359
        %4469 = vmatprep.subr.bf16.mxu0 0
        %4470 = vmatpush2.bf16.msra.mxu0 %v4358
        %4471 = vmatprep.mubr.bf16.mxu0 %v4134
        %4472 = vmatmul.mubr.bf16.gmra.mxu0 %v4133
        %v4473 = vpop.f32.mrf.mxu0
        %v4474 = vadd.f32 %v4433, %v4473
        %v4475 = vpop.f32.mrf.mxu0
        %v4476 = vpop.f32.mrf.mxu0
        %v4477 = vadd.f32 %v4436, %v4476
        %v4478 = vpop.f32.mrf.mxu0
        %4479 = vdwg.mxu0
        %v4480 = vadd.f32 %v4474, %v1805
        %v4481 = vadd.f32 %v4477, %v1806
        %4482 = vst [vmem:[%s660] sm:$0xff] %v4480
        %4483 = vst [vmem:[%s660 + $0x8] sm:$0xff] %v4481
        %s4484 = sand.u32 %s345, 1
        %s4485 = scalar_lea.sflag [#allocation5], %s4484
        %s4486 = sand.u32 %s345, 1
        %s4487 = smul.addr %s4486, 16
        %s4488 = scalar_lea.vmem [#allocation26], %s4487
        // Predicated region
        $region133: #{tpu_custom_call.1} parent=75 // pred_check
          %p4489 = pneg %p355
        $region134: #{tpu_custom_call.1} parent=75 // pred_check_branch
          %4491 = sbr.rel (%p4489) target = $region136
        $region135: #{tpu_custom_call.1} parent=75 // pred_region
          %s4493 = ssub.s32 256, 256
          %4494 = vsyncadd %s4485, %s4493
          %s4495 = smul.addr %s38, 2
          %s4496 = smul.addr %s4495, 128
          %s4497 = scalar_lea.hbm %s14, %s4496
          %s4498 = sshll.u32 %s4488, 4
          %s4499 = int_to_ptr.vmem [resolvable:$true] %s4498
          %4504 = dma.vmem_to_hbm [thread:$0]  %s4499, 256, %s4497, %s4485, 128, 128, 8
        $region136: #{tpu_custom_call.1} parent=75 // pred_fallthru
          _
      $region76: #{tpu_custom_call.1} parent=5 // pred_fallthru
        _
      %p4505 = scmp.le.s32.totalorder 2, %s33
      // Predicated region
      $region137: #{tpu_custom_call.1} parent=5 // pred_check
        %p4506 = pneg %p4505
      $region138: #{tpu_custom_call.1} parent=5 // pred_check_branch
        %4508 = sbr.rel (%p4506) target = $region140
      $region139: #{tpu_custom_call.1} parent=5 // pred_region
        %s4509 = ssub.s32 %s33, 2
        // Predicated region
        $region141: #{tpu_custom_call.1} parent=139 // pred_check
          %p4510 = pneg %p361
        $region142: #{tpu_custom_call.1} parent=139 // pred_check_branch
          %4512 = sbr.rel (%p4510) target = $region144
        $region143: #{tpu_custom_call.1} parent=139 // pred_region
          %s4513 = sand.u32 %s346, 1
          %s4514 = scalar_lea.sflag [#allocation5], %s4513
          %s4515 = sand.u32 %s346, 1
          %s4516 = smul.addr %s4515, 16
          %s4517 = scalar_lea.vmem [#allocation26], %s4516
          %4518 = dma.done %s4514, 256
        $region144: #{tpu_custom_call.1} parent=139 // pred_fallthru
          _
      $region140: #{tpu_custom_call.1} parent=5 // pred_fallthru
        _
    $region6: #{tpu_custom_call.1} parent=1 // loop_footer
      %s37 = sadd.s32 1, %s33
    $region7: #{tpu_custom_call.1} parent=1 // loop_footer_branch
      %32 = sbr.rel target = $region3
    $region8: #{tpu_custom_call.1} parent=1 // loop_exit
      _
    %4519 = vsyncpa [#allocation4], 1
    %s4520 = scalar_lea.sflag [#allocation4], 1
    %4521 = vsyncpa %s4520, 1
    %4522 = vsyncpa [#allocation7], 1
    %4523 = vsyncpa [#allocation10], 1
    %4524 = vsyncpa [#allocation13], 1
    %4525 = vsyncpa [#allocation16], 1
    %4526 = vsyncpa [#allocation19], 1
    %4527 = vsyncpa [#allocation22], 1
    %4528 = vsyncpa [#allocation25], 1
    %4529 = vsyncpa [#allocation5], 1
    %s4530 = scalar_lea.sflag [#allocation5], 1
    %4531 = vsyncpa %s4530, 1

</llo_original>
